<compile_context>
chip_gen: v6e
topology: v6e:2x2x1
jax: 0.10.0
libtpu: 0.0.40
codegen_flags: <defaults>
</compile_context>

<pallas_src>
import jax
import jax.numpy as jnp
from jax.experimental import pallas as pl
from jax.experimental.pallas import tpu as pltpu

_LN_EPS = 1e-6

# tap index k = ky*3 + kx  ->  (dy, dx) offsets (before dilation)
_TAP_OFFSETS = tuple((ky - 1, kx - 1) for ky in range(3) for kx in range(3))


# --------------------------------------------------------------------------
# Main frequency-domain kernel (everything between rfft2 and irfft2).
# --------------------------------------------------------------------------
def _make_freq_kernel(c, h, wf, f_len, f_pad):

    def kernel(xr_ref, xi_ref, idx_ref, colr_ref, coli_ref, colc_ref,
               dwr_ref, dwi_ref, dwc_ref, pws_ref, spatt_ref,
               or_ref, oi_ref):
        # per-lane (row, col) indices of the flattened (H, Wf) grid
        hh = idx_ref[0:1, :]                            # (1, f_pad) float32
        ww = idx_ref[1:2, :]

        def tap_mask(dy, dx):
            ok = ((hh + float(dy) >= 0.0) & (hh + float(dy) <= float(h - 1))
                  & (ww + float(dx) >= 0.0) & (ww + float(dx) <= float(wf - 1)))
            return jnp.where(ok, 1.0, 0.0)

        # NOTE: every geometrically valid source index lies in [0, f_len), so
        # the lane rotation below never wraps for unmasked contributions; any
        # wrapped / pad-tail source is zeroed by these masks.
        m1 = {k: tap_mask(dy, dx)
              for k, (dy, dx) in enumerate(_TAP_OFFSETS) if k != 4}
        m5 = {k: tap_mask(5 * dy, 5 * dx)
              for k, (dy, dx) in enumerate(_TAP_OFFSETS) if k != 4}
        valid = jnp.where(hh <= float(h - 1), 1.0, 0.0)  # real (non-pad) lanes

        def tap(v, k, dil, masks):
            # out[..., i] = v[..., i + dil*(dy*wf + dx)]   (zero outside image)
            dy, dx = _TAP_OFFSETS[k]
            s = (dy * wf + dx) * dil
            rolled = pltpu.roll(v, (-s) % f_pad, axis=v.ndim - 1)  # XLU rotate
            return rolled * masks[k]

        def dwconv3x3(v, taps, bias):
            # depthwise 3x3, stride 1, zero pad 1; taps: (C, 9), bias: (C, 1)
            acc = v * taps[:, 4:5] + bias               # center tap, no roll
            for k in range(9):
                if k == 4:
                    continue
                acc = acc + tap(v, k, 1, m1) * taps[:, k:k + 1]
            return acc

        def pwconv(w, v, bias=None):
            # 1x1 conv == (Cout, Cin) @ (Cin, f_pad) MXU matmul (+ bias)
            if v.ndim == 2:
                out = jnp.dot(w, v, preferred_element_type=jnp.float32)
            else:
                wb = jnp.broadcast_to(w, v.shape[:-2] + w.shape)
                out = jnp.einsum("boi,bif->bof", wb, v,
                                 preferred_element_type=jnp.float32)
            return out if bias is None else out + bias

        def ln(v, wt, bs):
            # LayerNorm2d: normalize over the channel (sublane) axis per lane.
            mu = jnp.mean(v, axis=-2, keepdims=True)
            var = jnp.mean(jnp.square(v - mu), axis=-2, keepdims=True)
            return (v - mu) * jax.lax.rsqrt(var + _LN_EPS) * wt + bs

        colr = colr_ref[...]                            # (C, 10)
        coli = coli_ref[...]                            # (C, 10)
        colc = colc_ref[...]                            # (C, 9)
        dwr = dwr_ref[...]                              # (C, 18)
        dwi = dwi_ref[...]
        dwc = dwc_ref[...]

        def cols(m, j):
            return m[:, j:j + 1]

        ln1_w, ln1_b, alpha = cols(colr, 0), cols(colr, 1), cols(colr, 2)
        rr_dw_b, rr_pw_b = cols(colr, 3), cols(colr, 4)
        caln_w_r, caln_b_r = cols(colr, 5), cols(colr, 6)
        ca1_dw_b_r, ca2_pw_b_r, zeta = cols(colr, 7), cols(colr, 8), cols(colr, 9)

        ln2_w, ln2_b, beta = cols(coli, 0), cols(coli, 1), cols(coli, 2)
        ir_dw_b, ir_pw_b = cols(coli, 3), cols(coli, 4)
        caln_w_i, caln_b_i = cols(coli, 5), cols(coli, 6)
        ca1_dw_b_i, ca2_pw_b_i, eta = cols(coli, 7), cols(coli, 8), cols(coli, 9)

        ca1_pw_b, chatt_b, ca2_dw_b = cols(colc, 0), cols(colc, 1), cols(colc, 2)
        crln_w, crln_b = cols(colc, 3), cols(colc, 4)
        cr_dw_b, cr_pw_b = cols(colc, 5), cols(colc, 6)
        theta, iota = cols(colc, 7), cols(colc, 8)

        # --- LayerNorm2d(real) * alpha / LayerNorm2d(imag) * beta -----------
        real = ln(xr_ref[...], ln1_w, ln1_b) * alpha
        imag = ln(xi_ref[...], ln2_w, ln2_b) * beta

        # --- real / imaginary refinement DSConvs (separate (C,C) pointwise) -
        real = pwconv(pws_ref[0], dwconv3x3(real, dwr[:, 0:9], rr_dw_b), rr_pw_b)
        imag = pwconv(pws_ref[1], dwconv3x3(imag, dwi[:, 0:9], ir_dw_b), ir_pw_b)

        # --- collective attention --------------------------------------------
        # LayerNorm2d over the (virtual) 2C concat, computed without concat.
        mu = (jnp.sum(real, axis=-2, keepdims=True)
              + jnp.sum(imag, axis=-2, keepdims=True)) * (1.0 / (2 * c))
        var = (jnp.sum(jnp.square(real - mu), axis=-2, keepdims=True)
               + jnp.sum(jnp.square(imag - mu), axis=-2, keepdims=True)) * (1.0 / (2 * c))
        inv = jax.lax.rsqrt(var + _LN_EPS)
        nr = (real - mu) * inv * caln_w_r + caln_b_r
        ni = (imag - mu) * inv * caln_w_i + caln_b_i
        # DSConv(2C -> C): depthwise per half + sum of two (C,C) pointwise mm.
        nr = dwconv3x3(nr, dwr[:, 9:18], ca1_dw_b_r)
        ni = dwconv3x3(ni, dwi[:, 9:18], ca1_dw_b_i)
        xc = pwconv(pws_ref[2], nr, ca1_pw_b) + pwconv(pws_ref[3], ni)

        # SimpleSpatialChannelAttention — its internal LayerNorm output is
        # discarded by the PyTorch module, so it is intentionally skipped.
        # Channel attention: 1x1 conv of the global average pool; the conv is
        # linear, so fold it through the pool: mean_valid(W @ xc) + b.
        chx = pwconv(pws_ref[7], xc)
        ch = (jnp.sum(chx * valid, axis=-1, keepdims=True) * (1.0 / f_len)
              + chatt_b)                                 # (..., C, 1)
        # Spatial attention: 3x3 dilation-5 conv over [channel-avg, channel-max]
        # stacked into one slab so each tap needs a single roll.
        am = jnp.concatenate([jnp.mean(xc, axis=-2, keepdims=True),
                              jnp.max(xc, axis=-2, keepdims=True)], axis=-2)
        sp = (am[..., 0:1, :] * spatt_ref[8]
              + am[..., 1:2, :] * spatt_ref[9])          # center tap (k = 4)
        for k in range(9):
            if k == 4:
                continue
            t = tap(am, k, 5, m5)
            sp = sp + (t[..., 0:1, :] * spatt_ref[2 * k]
                       + t[..., 1:2, :] * spatt_ref[2 * k + 1])
        attn = jax.nn.sigmoid(ch * sp)                   # (..., C, f_pad)

        # DSConv(C -> 2C): shared depthwise, split (C,C) pointwise per half.
        a_dw = dwconv3x3(attn, dwc[:, 0:9], ca2_dw_b)
        real = real * pwconv(pws_ref[4], a_dw, ca2_pw_b_r) * zeta
        imag = imag * pwconv(pws_ref[5], a_dw, ca2_pw_b_i) * eta

        # --- collective refinement --------------------------------------------
        mult = ln(real * imag, crln_w, crln_b)
        mult = pwconv(pws_ref[6], dwconv3x3(mult, dwc[:, 9:18], cr_dw_b), cr_pw_b)
        or_ref[...] = real + mult * theta
        oi_ref[...] = imag + mult * iota

    return kernel


# --------------------------------------------------------------------------
# Wrapper helpers
# --------------------------------------------------------------------------
def _hamming(n, dtype=jnp.float32):
    # torch.hamming_window(n, periodic=False)
    if n == 1:
        return jnp.ones((1,), dtype)
    k = jnp.arange(n, dtype=dtype)
    return (0.54 - 0.46 * jnp.cos(2.0 * jnp.pi * k / (n - 1))).astype(dtype)


def _pick_batch_block(n):
    # Largest divisor of n that still leaves >= 2 grid steps (so both v7x
    # TensorCores get work); amortizes per-grid-step overhead for larger n.
    if n <= 1:
        return 1
    for b in range((n + 1) // 2, 0, -1):
        if n % b == 0:
            return b
    return 1


# --------------------------------------------------------------------------
# Public wrapper (NCHW, like the PyTorch module)
# --------------------------------------------------------------------------
def frequency_domain_processing(x_nchw, kp):
    n, c, h, w = x_nchw.shape
    wf = w // 2 + 1
    f_len = h * wf
    f_pad = ((f_len + 127) // 128) * 128              # lane-aligned
    x = x_nchw.astype(jnp.float32)

    # ---- Hamming-window blend (XLA; fuses with the FFT input prep) ----
    eps = kp["eps"].reshape(1, c, 1, 1)
    window = jnp.outer(_hamming(h), _hamming(w)).reshape(1, 1, h, w)
    x_blend = x * (window * eps + (1.0 - eps))

    # ---- rfft2 (XLA; no Pallas FFT primitive) ----
    x_freq = jnp.fft.rfft2(x_blend, axes=(-2, -1))
    pad = f_pad - f_len
    xr = jnp.pad(jnp.real(x_freq).reshape(n, c, f_len), ((0, 0), (0, 0), (0, pad)))
    xi = jnp.pad(jnp.imag(x_freq).reshape(n, c, f_len), ((0, 0), (0, 0), (0, pad)))

    # per-lane (row, col) indices used to build conv tap masks in-kernel
    lane = jnp.arange(f_pad, dtype=jnp.int32)
    idx = jnp.stack([lane // wf, lane % wf], axis=0).astype(jnp.float32)

    b_blk = _pick_batch_block(n)
    grid = (n // b_blk,)
    blk_bytes = b_blk * c * f_pad * 4
    vmem_limit = int(min(32 * 2 ** 20, max(8 * 2 ** 20, 64 * blk_bytes + (2 << 20))))
    cparams = pltpu.CompilerParams(dimension_semantics=("parallel",),
                                   vmem_limit_bytes=vmem_limit)

    block = (None, c, f_pad) if b_blk == 1 else (b_blk, c, f_pad)
    data_spec = pl.BlockSpec(block, lambda i: (i, 0, 0))
    vmem_spec = pl.BlockSpec(memory_space=pltpu.MemorySpace.VMEM)
    smem_spec = pl.BlockSpec(memory_space=pltpu.MemorySpace.SMEM)

    out_r, out_i = pl.pallas_call(
        _make_freq_kernel(c, h, wf, f_len, f_pad),
        grid=grid,
        in_specs=[data_spec, data_spec, vmem_spec,        # xr, xi, idx
                  vmem_spec, vmem_spec, vmem_spec,        # colr, coli, colc
                  vmem_spec, vmem_spec, vmem_spec,        # dwr, dwi, dwc
                  vmem_spec, smem_spec],                  # pws, spatt
        out_specs=[data_spec, data_spec],
        out_shape=[jax.ShapeDtypeStruct((n, c, f_pad), jnp.float32),
                   jax.ShapeDtypeStruct((n, c, f_pad), jnp.float32)],
        compiler_params=cparams,
    )(xr, xi, idx, kp["colr"], kp["coli"], kp["colc"],
      kp["dwr"], kp["dwi"], kp["dwc"], kp["pws"], kp["spatt"])

    out_r = out_r[:, :, :f_len].reshape(n, c, h, wf)
    out_i = out_i[:, :, :f_len].reshape(n, c, h, wf)

    # ---- irfft2 + residual mix (XLA; fuses with the FFT output) ----
    x_spatial = jnp.fft.irfft2(jax.lax.complex(out_r, out_i), s=(h, w),
                               axes=(-2, -1))
    delta = kp["delta"].reshape(1, c, 1, 1)
    gamma = kp["gamma"].reshape(1, c, 1, 1)
    return delta * x + gamma * x_spatial


# --------------------------------------------------------------------------
# Deterministic synthetic parameters (PyTorch layouts) + kernel-layout convert
# --------------------------------------------------------------------------
def make_torch_params(key, c):
    c2 = 2 * c
    ks = iter(jax.random.split(key, 64))

    def rnd(shape, scale=0.1):
        return (scale * jax.random.normal(next(ks), shape)).astype(jnp.float32)

    p = {}
    p["ln1_w"], p["ln1_b"] = 1.0 + rnd((c,)), rnd((c,))
    p["ln2_w"], p["ln2_b"] = 1.0 + rnd((c,)), rnd((c,))
    p["caln_w"], p["caln_b"] = 1.0 + rnd((c2,)), rnd((c2,))
    p["crln_w"], p["crln_b"] = 1.0 + rnd((c,)), rnd((c,))

    def dsconv(ci, co):
        return (rnd((ci, 1, 3, 3), 0.2), rnd((ci,), 0.1),
                rnd((co, ci, 1, 1), 0.2), rnd((co,), 0.1))

    p["rr_dw_w"], p["rr_dw_b"], p["rr_pw_w"], p["rr_pw_b"] = dsconv(c, c)
    p["ir_dw_w"], p["ir_dw_b"], p["ir_pw_w"], p["ir_pw_b"] = dsconv(c, c)
    p["ca1_dw_w"], p["ca1_dw_b"], p["ca1_pw_w"], p["ca1_pw_b"] = dsconv(c2, c)
    p["ca2_dw_w"], p["ca2_dw_b"], p["ca2_pw_w"], p["ca2_pw_b"] = dsconv(c, c2)
    p["cr_dw_w"], p["cr_dw_b"], p["cr_pw_w"], p["cr_pw_b"] = dsconv(c, c)

    p["chatt_w"], p["chatt_b"] = rnd((c, c, 1, 1), 0.2), rnd((c,), 0.1)
    p["spatt_w"] = rnd((1, 2, 3, 3), 0.3)

    # Per-channel gates (PyTorch inits several to exact 0/1; use nearby values
    # so every branch contributes non-trivially to the output).
    p["alpha"] = 1.0 + rnd((1, c, 1, 1))
    p["beta"] = 1.0 + rnd((1, c, 1, 1))
    p["delta"] = 1.0 + rnd((1, c, 1, 1))
    p["epsilon"] = 1.0 + rnd((1, c, 1, 1))
    p["gamma"] = 0.2 + rnd((1, c, 1, 1))
    p["zeta"] = 0.2 + rnd((1, c, 1, 1))
    p["eta"] = 0.2 + rnd((1, c, 1, 1))
    p["Theta"] = 0.2 + rnd((1, c, 1, 1))
    p["Iota"] = 0.2 + rnd((1, c, 1, 1))
    return p


def to_kernel_params(p, c):

    def col(v):                                   # (C,)/(1,C,1,1) -> (C, 1)
        return jnp.asarray(v, jnp.float32).reshape(-1, 1)

    def dwtaps(wt):                               # (R,1,3,3) -> (R, 9)
        return jnp.asarray(wt, jnp.float32).reshape(wt.shape[0], 9)

    def pw(wt):                                   # (Co,Ci,1,1) -> (Co, Ci)
        return jnp.asarray(wt, jnp.float32)[:, :, 0, 0]

    caln_w, caln_b = col(p["caln_w"]), col(p["caln_b"])          # (2C, 1)
    ca1_dw_b = col(p["ca1_dw_b"])                                # (2C, 1)
    ca2_pw_b = col(p["ca2_pw_b"])                                # (2C, 1)

    colr = jnp.concatenate([
        col(p["ln1_w"]), col(p["ln1_b"]), col(p["alpha"]),
        col(p["rr_dw_b"]), col(p["rr_pw_b"]),
        caln_w[:c], caln_b[:c], ca1_dw_b[:c], ca2_pw_b[:c],
        col(p["zeta"]),
    ], axis=1)                                    # (C, 10)
    coli = jnp.concatenate([
        col(p["ln2_w"]), col(p["ln2_b"]), col(p["beta"]),
        col(p["ir_dw_b"]), col(p["ir_pw_b"]),
        caln_w[c:], caln_b[c:], ca1_dw_b[c:], ca2_pw_b[c:],
        col(p["eta"]),
    ], axis=1)                                    # (C, 10)
    colc = jnp.concatenate([
        col(p["ca1_pw_b"]), col(p["chatt_b"]), col(p["ca2_dw_b"]),
        col(p["crln_w"]), col(p["crln_b"]), col(p["cr_dw_b"]), col(p["cr_pw_b"]),
        col(p["Theta"]), col(p["Iota"]),
    ], axis=1)                                    # (C, 9)

    ca1_dw = dwtaps(p["ca1_dw_w"])                # (2C, 9)
    dwr = jnp.concatenate([dwtaps(p["rr_dw_w"]), ca1_dw[:c]], axis=1)   # (C, 18)
    dwi = jnp.concatenate([dwtaps(p["ir_dw_w"]), ca1_dw[c:]], axis=1)   # (C, 18)
    dwc = jnp.concatenate([dwtaps(p["ca2_dw_w"]), dwtaps(p["cr_dw_w"])], axis=1)

    ca1_pw = pw(p["ca1_pw_w"])                    # (C, 2C)
    ca2_pw = pw(p["ca2_pw_w"])                    # (2C, C)
    pws = jnp.stack([
        pw(p["rr_pw_w"]), pw(p["ir_pw_w"]),
        ca1_pw[:, :c], ca1_pw[:, c:],
        ca2_pw[:c, :], ca2_pw[c:, :],
        pw(p["cr_pw_w"]), pw(p["chatt_w"]),
    ], axis=0)                                    # (8, C, C)

    spatt = jnp.transpose(jnp.asarray(p["spatt_w"], jnp.float32)[0],
                          (1, 2, 0)).reshape(-1)  # (18,) [tap0:(avg,max), ...]

    return {
        "eps": jnp.asarray(p["epsilon"], jnp.float32).reshape(-1),
        "delta": jnp.asarray(p["delta"], jnp.float32).reshape(-1),
        "gamma": jnp.asarray(p["gamma"], jnp.float32).reshape(-1),
        "colr": colr, "coli": coli, "colc": colc,
        "dwr": dwr, "dwi": dwi, "dwc": dwc,
        "pws": pws, "spatt": spatt,
    }


# --------------------------------------------------------------------------
# Pure-JAX (XLA) reference mirroring the PyTorch module (NCHW), for checking
# --------------------------------------------------------------------------
def _conv2d_ref(x, w, b=None, padding=0, dilation=1, groups=1):
    out = jax.lax.conv_general_dilated(
        x, w, window_strides=(1, 1),
        padding=((padding, padding), (padding, padding)),
        rhs_dilation=(dilation, dilation),
        dimension_numbers=("NCHW", "OIHW", "NCHW"),
        feature_group_count=groups,
        precision=jax.lax.Precision.HIGHEST)
    if b is not None:
        out = out + b.reshape(1, -1, 1, 1)
    return out


def _ln2d_ref(x, w, b):
    mu = jnp.mean(x, axis=1, keepdims=True)
    var = jnp.mean((x - mu) ** 2, axis=1, keepdims=True)
    return (x - mu) / jnp.sqrt(var + _LN_EPS) * w.reshape(1, -1, 1, 1) + b.reshape(1, -1, 1, 1)


def _dsconv_ref(x, dw_w, dw_b, pw_w, pw_b):
    y = _conv2d_ref(x, dw_w, dw_b, padding=1, groups=x.shape[1])
    return _conv2d_ref(y, pw_w, pw_b, padding=0)


def reference_forward(x, p):
    n, c, h, w = x.shape
    residual = x
    window = jnp.outer(_hamming(h), _hamming(w)).reshape(1, 1, h, w)
    eps = p["epsilon"]
    x_freq = jnp.fft.rfft2(x * window * eps + (1.0 - eps) * x, axes=(-2, -1))
    real = _ln2d_ref(jnp.real(x_freq), p["ln1_w"], p["ln1_b"]) * p["alpha"]
    imag = _ln2d_ref(jnp.imag(x_freq), p["ln2_w"], p["ln2_b"]) * p["beta"]
    real = _dsconv_ref(real, p["rr_dw_w"], p["rr_dw_b"], p["rr_pw_w"], p["rr_pw_b"])
    imag = _dsconv_ref(imag, p["ir_dw_w"], p["ir_dw_b"], p["ir_pw_w"], p["ir_pw_b"])
    xc = jnp.concatenate([real, imag], axis=1)
    xc = _ln2d_ref(xc, p["caln_w"], p["caln_b"])
    xc = _dsconv_ref(xc, p["ca1_dw_w"], p["ca1_dw_b"], p["ca1_pw_w"], p["ca1_pw_b"])
    gap = jnp.mean(xc, axis=(2, 3), keepdims=True)
    ch = _conv2d_ref(gap, p["chatt_w"], p["chatt_b"], padding=0)
    sp_in = jnp.concatenate([jnp.mean(xc, axis=1, keepdims=True),
                             jnp.max(xc, axis=1, keepdims=True)], axis=1)
    sp = _conv2d_ref(sp_in, p["spatt_w"], None, padding=5, dilation=5)
    attn = jax.nn.sigmoid(ch * sp)
    xc = _dsconv_ref(attn, p["ca2_dw_w"], p["ca2_dw_b"], p["ca2_pw_w"], p["ca2_pw_b"])
    real = real * xc[:, :c] * p["zeta"]
    imag = imag * xc[:, c:] * p["eta"]
    mult = real * imag
    mult = _ln2d_ref(mult, p["crln_w"], p["crln_b"])
    mult = _dsconv_ref(mult, p["cr_dw_w"], p["cr_dw_b"], p["cr_pw_w"], p["cr_pw_b"])
    real = real + mult * p["Theta"]
    imag = imag + mult * p["Iota"]
    x_spatial = jnp.fft.irfft2(jax.lax.complex(real, imag), s=(h, w), axes=(-2, -1))
    return p["delta"] * residual + x_spatial * p["gamma"]


# --------------------------------------------------------------------------
if __name__ == "__main__":
    key = jax.random.PRNGKey(0)
    kx, kparam = jax.random.split(key)

    N, C, H, W = 2, 4, 16, 16
    x = jax.random.normal(kx, (N, C, H, W), dtype=jnp.float32)

    torch_params = make_torch_params(kparam, C)
    kernel_params = to_kernel_params(torch_params, C)

    out = jax.block_until_ready(jax.jit(frequency_domain_processing)(x, kernel_params))
    ref = jax.block_until_ready(jax.jit(reference_forward)(x, torch_params))

    assert out.shape == (N, C, H, W)
    max_diff = float(jnp.max(jnp.abs(out - ref)))
    if not bool(jnp.allclose(out, ref, atol=1e-2, rtol=5e-2)):
        raise AssertionError(f"Pallas kernel mismatch vs reference, max|diff|={max_diff}")

    print("KERNEL_OK")
</pallas_src>

<mosaic_0001>
module attributes {stable_mosaic.version = 11 : i64} {
  func.func @kernel(%arg0: i32, %arg1: memref<1x4x256xf32, #tpu.memory_space<vmem>>, %arg2: memref<1x4x256xf32, #tpu.memory_space<vmem>>, %arg3: memref<2x256xf32, #tpu.memory_space<vmem>>, %arg4: memref<4x10xf32, #tpu.memory_space<vmem>>, %arg5: memref<4x10xf32, #tpu.memory_space<vmem>>, %arg6: memref<4x9xf32, #tpu.memory_space<vmem>>, %arg7: memref<4x18xf32, #tpu.memory_space<vmem>>, %arg8: memref<4x18xf32, #tpu.memory_space<vmem>>, %arg9: memref<4x18xf32, #tpu.memory_space<vmem>>, %arg10: memref<8x4x4xf32, #tpu.memory_space<vmem>>, %arg11: memref<18xf32, #tpu.memory_space<smem>>, %arg12: memref<1x4x256xf32, #tpu.memory_space<vmem>>, %arg13: memref<1x4x256xf32, #tpu.memory_space<vmem>>) attributes {dimension_semantics = [#tpu.dimension_semantics<parallel>], iteration_bounds = array<i64: 2>, scalar_prefetch = 0 : i64, scratch_operands = 0 : i64, tpu.core_type = #tpu.core_type<tc>, window_params = [{transform_indices = @transform_0, window_bounds = array<i64: 1, 4, 256>}, {transform_indices = @transform_1, window_bounds = array<i64: 1, 4, 256>}, {pipeline_mode = #tpu.pipeline_mode<synchronous>, transform_indices = @transform_2, window_bounds = array<i64: 2, 256>}, {pipeline_mode = #tpu.pipeline_mode<synchronous>, transform_indices = @transform_3, window_bounds = array<i64: 4, 10>}, {pipeline_mode = #tpu.pipeline_mode<synchronous>, transform_indices = @transform_4, window_bounds = array<i64: 4, 10>}, {pipeline_mode = #tpu.pipeline_mode<synchronous>, transform_indices = @transform_5, window_bounds = array<i64: 4, 9>}, {pipeline_mode = #tpu.pipeline_mode<synchronous>, transform_indices = @transform_6, window_bounds = array<i64: 4, 18>}, {pipeline_mode = #tpu.pipeline_mode<synchronous>, transform_indices = @transform_7, window_bounds = array<i64: 4, 18>}, {pipeline_mode = #tpu.pipeline_mode<synchronous>, transform_indices = @transform_8, window_bounds = array<i64: 4, 18>}, {pipeline_mode = #tpu.pipeline_mode<synchronous>, transform_indices = @transform_9, window_bounds = array<i64: 8, 4, 4>}, {transform_indices = @transform_10, window_bounds = array<i64: 18>}, {transform_indices = @transform_11, window_bounds = array<i64: 1, 4, 256>}, {transform_indices = @transform_12, window_bounds = array<i64: 1, 4, 256>}]} {
    %c0 = arith.constant 0 : index
    %c0_0 = arith.constant 0 : index
    %0 = vector.load %arg3[%c0, %c0_0] : memref<2x256xf32, #tpu.memory_space<vmem>>, vector<1x256xf32>
    %c1 = arith.constant 1 : index
    %c0_1 = arith.constant 0 : index
    %1 = vector.load %arg3[%c1, %c0_1] : memref<2x256xf32, #tpu.memory_space<vmem>>, vector<1x256xf32>
    %cst = arith.constant -1.000000e+00 : f32
    %2 = vector.broadcast %cst : f32 to vector<1x256xf32>
    %3 = arith.addf %0, %2 : vector<1x256xf32>
    %cst_2 = arith.constant 0.000000e+00 : f32
    %4 = vector.broadcast %cst_2 : f32 to vector<1x256xf32>
    %5 = arith.cmpf oge, %3, %4 : vector<1x256xf32>
    %cst_3 = arith.constant -1.000000e+00 : f32
    %6 = vector.broadcast %cst_3 : f32 to vector<1x256xf32>
    %7 = arith.addf %0, %6 : vector<1x256xf32>
    %cst_4 = arith.constant 1.500000e+01 : f32
    %8 = vector.broadcast %cst_4 : f32 to vector<1x256xf32>
    %9 = arith.cmpf ole, %7, %8 : vector<1x256xf32>
    %10 = arith.andi %5, %9 : vector<1x256xi1>
    %cst_5 = arith.constant -1.000000e+00 : f32
    %11 = vector.broadcast %cst_5 : f32 to vector<1x256xf32>
    %12 = arith.addf %1, %11 : vector<1x256xf32>
    %cst_6 = arith.constant 0.000000e+00 : f32
    %13 = vector.broadcast %cst_6 : f32 to vector<1x256xf32>
    %14 = arith.cmpf oge, %12, %13 : vector<1x256xf32>
    %15 = arith.andi %10, %14 : vector<1x256xi1>
    %cst_7 = arith.constant -1.000000e+00 : f32
    %16 = vector.broadcast %cst_7 : f32 to vector<1x256xf32>
    %17 = arith.addf %1, %16 : vector<1x256xf32>
    %cst_8 = arith.constant 8.000000e+00 : f32
    %18 = vector.broadcast %cst_8 : f32 to vector<1x256xf32>
    %19 = arith.cmpf ole, %17, %18 : vector<1x256xf32>
    %20 = arith.andi %15, %19 : vector<1x256xi1>
    %cst_9 = arith.constant 1.000000e+00 : f32
    %cst_10 = arith.constant 0.000000e+00 : f32
    %21 = vector.broadcast %cst_9 : f32 to vector<1x256xf32>
    %22 = vector.broadcast %cst_10 : f32 to vector<1x256xf32>
    %23 = arith.select %20, %21, %22 : vector<1x256xi1>, vector<1x256xf32>
    %cst_11 = arith.constant -1.000000e+00 : f32
    %24 = vector.broadcast %cst_11 : f32 to vector<1x256xf32>
    %25 = arith.addf %0, %24 : vector<1x256xf32>
    %cst_12 = arith.constant 0.000000e+00 : f32
    %26 = vector.broadcast %cst_12 : f32 to vector<1x256xf32>
    %27 = arith.cmpf oge, %25, %26 : vector<1x256xf32>
    %cst_13 = arith.constant -1.000000e+00 : f32
    %28 = vector.broadcast %cst_13 : f32 to vector<1x256xf32>
    %29 = arith.addf %0, %28 : vector<1x256xf32>
    %cst_14 = arith.constant 1.500000e+01 : f32
    %30 = vector.broadcast %cst_14 : f32 to vector<1x256xf32>
    %31 = arith.cmpf ole, %29, %30 : vector<1x256xf32>
    %32 = arith.andi %27, %31 : vector<1x256xi1>
    %cst_15 = arith.constant 0.000000e+00 : f32
    %33 = vector.broadcast %cst_15 : f32 to vector<1x256xf32>
    %34 = arith.addf %1, %33 : vector<1x256xf32>
    %cst_16 = arith.constant 0.000000e+00 : f32
    %35 = vector.broadcast %cst_16 : f32 to vector<1x256xf32>
    %36 = arith.cmpf oge, %34, %35 : vector<1x256xf32>
    %37 = arith.andi %32, %36 : vector<1x256xi1>
    %cst_17 = arith.constant 0.000000e+00 : f32
    %38 = vector.broadcast %cst_17 : f32 to vector<1x256xf32>
    %39 = arith.addf %1, %38 : vector<1x256xf32>
    %cst_18 = arith.constant 8.000000e+00 : f32
    %40 = vector.broadcast %cst_18 : f32 to vector<1x256xf32>
    %41 = arith.cmpf ole, %39, %40 : vector<1x256xf32>
    %42 = arith.andi %37, %41 : vector<1x256xi1>
    %cst_19 = arith.constant 1.000000e+00 : f32
    %cst_20 = arith.constant 0.000000e+00 : f32
    %43 = vector.broadcast %cst_19 : f32 to vector<1x256xf32>
    %44 = vector.broadcast %cst_20 : f32 to vector<1x256xf32>
    %45 = arith.select %42, %43, %44 : vector<1x256xi1>, vector<1x256xf32>
    %cst_21 = arith.constant -1.000000e+00 : f32
    %46 = vector.broadcast %cst_21 : f32 to vector<1x256xf32>
    %47 = arith.addf %0, %46 : vector<1x256xf32>
    %cst_22 = arith.constant 0.000000e+00 : f32
    %48 = vector.broadcast %cst_22 : f32 to vector<1x256xf32>
    %49 = arith.cmpf oge, %47, %48 : vector<1x256xf32>
    %cst_23 = arith.constant -1.000000e+00 : f32
    %50 = vector.broadcast %cst_23 : f32 to vector<1x256xf32>
    %51 = arith.addf %0, %50 : vector<1x256xf32>
    %cst_24 = arith.constant 1.500000e+01 : f32
    %52 = vector.broadcast %cst_24 : f32 to vector<1x256xf32>
    %53 = arith.cmpf ole, %51, %52 : vector<1x256xf32>
    %54 = arith.andi %49, %53 : vector<1x256xi1>
    %cst_25 = arith.constant 1.000000e+00 : f32
    %55 = vector.broadcast %cst_25 : f32 to vector<1x256xf32>
    %56 = arith.addf %1, %55 : vector<1x256xf32>
    %cst_26 = arith.constant 0.000000e+00 : f32
    %57 = vector.broadcast %cst_26 : f32 to vector<1x256xf32>
    %58 = arith.cmpf oge, %56, %57 : vector<1x256xf32>
    %59 = arith.andi %54, %58 : vector<1x256xi1>
    %cst_27 = arith.constant 1.000000e+00 : f32
    %60 = vector.broadcast %cst_27 : f32 to vector<1x256xf32>
    %61 = arith.addf %1, %60 : vector<1x256xf32>
    %cst_28 = arith.constant 8.000000e+00 : f32
    %62 = vector.broadcast %cst_28 : f32 to vector<1x256xf32>
    %63 = arith.cmpf ole, %61, %62 : vector<1x256xf32>
    %64 = arith.andi %59, %63 : vector<1x256xi1>
    %cst_29 = arith.constant 1.000000e+00 : f32
    %cst_30 = arith.constant 0.000000e+00 : f32
    %65 = vector.broadcast %cst_29 : f32 to vector<1x256xf32>
    %66 = vector.broadcast %cst_30 : f32 to vector<1x256xf32>
    %67 = arith.select %64, %65, %66 : vector<1x256xi1>, vector<1x256xf32>
    %cst_31 = arith.constant 0.000000e+00 : f32
    %68 = vector.broadcast %cst_31 : f32 to vector<1x256xf32>
    %69 = arith.addf %0, %68 : vector<1x256xf32>
    %cst_32 = arith.constant 0.000000e+00 : f32
    %70 = vector.broadcast %cst_32 : f32 to vector<1x256xf32>
    %71 = arith.cmpf oge, %69, %70 : vector<1x256xf32>
    %cst_33 = arith.constant 0.000000e+00 : f32
    %72 = vector.broadcast %cst_33 : f32 to vector<1x256xf32>
    %73 = arith.addf %0, %72 : vector<1x256xf32>
    %cst_34 = arith.constant 1.500000e+01 : f32
    %74 = vector.broadcast %cst_34 : f32 to vector<1x256xf32>
    %75 = arith.cmpf ole, %73, %74 : vector<1x256xf32>
    %76 = arith.andi %71, %75 : vector<1x256xi1>
    %cst_35 = arith.constant -1.000000e+00 : f32
    %77 = vector.broadcast %cst_35 : f32 to vector<1x256xf32>
    %78 = arith.addf %1, %77 : vector<1x256xf32>
    %cst_36 = arith.constant 0.000000e+00 : f32
    %79 = vector.broadcast %cst_36 : f32 to vector<1x256xf32>
    %80 = arith.cmpf oge, %78, %79 : vector<1x256xf32>
    %81 = arith.andi %76, %80 : vector<1x256xi1>
    %cst_37 = arith.constant -1.000000e+00 : f32
    %82 = vector.broadcast %cst_37 : f32 to vector<1x256xf32>
    %83 = arith.addf %1, %82 : vector<1x256xf32>
    %cst_38 = arith.constant 8.000000e+00 : f32
    %84 = vector.broadcast %cst_38 : f32 to vector<1x256xf32>
    %85 = arith.cmpf ole, %83, %84 : vector<1x256xf32>
    %86 = arith.andi %81, %85 : vector<1x256xi1>
    %cst_39 = arith.constant 1.000000e+00 : f32
    %cst_40 = arith.constant 0.000000e+00 : f32
    %87 = vector.broadcast %cst_39 : f32 to vector<1x256xf32>
    %88 = vector.broadcast %cst_40 : f32 to vector<1x256xf32>
    %89 = arith.select %86, %87, %88 : vector<1x256xi1>, vector<1x256xf32>
    %cst_41 = arith.constant 0.000000e+00 : f32
    %90 = vector.broadcast %cst_41 : f32 to vector<1x256xf32>
    %91 = arith.addf %0, %90 : vector<1x256xf32>
    %cst_42 = arith.constant 0.000000e+00 : f32
    %92 = vector.broadcast %cst_42 : f32 to vector<1x256xf32>
    %93 = arith.cmpf oge, %91, %92 : vector<1x256xf32>
    %cst_43 = arith.constant 0.000000e+00 : f32
    %94 = vector.broadcast %cst_43 : f32 to vector<1x256xf32>
    %95 = arith.addf %0, %94 : vector<1x256xf32>
    %cst_44 = arith.constant 1.500000e+01 : f32
    %96 = vector.broadcast %cst_44 : f32 to vector<1x256xf32>
    %97 = arith.cmpf ole, %95, %96 : vector<1x256xf32>
    %98 = arith.andi %93, %97 : vector<1x256xi1>
    %cst_45 = arith.constant 1.000000e+00 : f32
    %99 = vector.broadcast %cst_45 : f32 to vector<1x256xf32>
    %100 = arith.addf %1, %99 : vector<1x256xf32>
    %cst_46 = arith.constant 0.000000e+00 : f32
    %101 = vector.broadcast %cst_46 : f32 to vector<1x256xf32>
    %102 = arith.cmpf oge, %100, %101 : vector<1x256xf32>
    %103 = arith.andi %98, %102 : vector<1x256xi1>
    %cst_47 = arith.constant 1.000000e+00 : f32
    %104 = vector.broadcast %cst_47 : f32 to vector<1x256xf32>
    %105 = arith.addf %1, %104 : vector<1x256xf32>
    %cst_48 = arith.constant 8.000000e+00 : f32
    %106 = vector.broadcast %cst_48 : f32 to vector<1x256xf32>
    %107 = arith.cmpf ole, %105, %106 : vector<1x256xf32>
    %108 = arith.andi %103, %107 : vector<1x256xi1>
    %cst_49 = arith.constant 1.000000e+00 : f32
    %cst_50 = arith.constant 0.000000e+00 : f32
    %109 = vector.broadcast %cst_49 : f32 to vector<1x256xf32>
    %110 = vector.broadcast %cst_50 : f32 to vector<1x256xf32>
    %111 = arith.select %108, %109, %110 : vector<1x256xi1>, vector<1x256xf32>
    %cst_51 = arith.constant 1.000000e+00 : f32
    %112 = vector.broadcast %cst_51 : f32 to vector<1x256xf32>
    %113 = arith.addf %0, %112 : vector<1x256xf32>
    %cst_52 = arith.constant 0.000000e+00 : f32
    %114 = vector.broadcast %cst_52 : f32 to vector<1x256xf32>
    %115 = arith.cmpf oge, %113, %114 : vector<1x256xf32>
    %cst_53 = arith.constant 1.000000e+00 : f32
    %116 = vector.broadcast %cst_53 : f32 to vector<1x256xf32>
    %117 = arith.addf %0, %116 : vector<1x256xf32>
    %cst_54 = arith.constant 1.500000e+01 : f32
    %118 = vector.broadcast %cst_54 : f32 to vector<1x256xf32>
    %119 = arith.cmpf ole, %117, %118 : vector<1x256xf32>
    %120 = arith.andi %115, %119 : vector<1x256xi1>
    %cst_55 = arith.constant -1.000000e+00 : f32
    %121 = vector.broadcast %cst_55 : f32 to vector<1x256xf32>
    %122 = arith.addf %1, %121 : vector<1x256xf32>
    %cst_56 = arith.constant 0.000000e+00 : f32
    %123 = vector.broadcast %cst_56 : f32 to vector<1x256xf32>
    %124 = arith.cmpf oge, %122, %123 : vector<1x256xf32>
    %125 = arith.andi %120, %124 : vector<1x256xi1>
    %cst_57 = arith.constant -1.000000e+00 : f32
    %126 = vector.broadcast %cst_57 : f32 to vector<1x256xf32>
    %127 = arith.addf %1, %126 : vector<1x256xf32>
    %cst_58 = arith.constant 8.000000e+00 : f32
    %128 = vector.broadcast %cst_58 : f32 to vector<1x256xf32>
    %129 = arith.cmpf ole, %127, %128 : vector<1x256xf32>
    %130 = arith.andi %125, %129 : vector<1x256xi1>
    %cst_59 = arith.constant 1.000000e+00 : f32
    %cst_60 = arith.constant 0.000000e+00 : f32
    %131 = vector.broadcast %cst_59 : f32 to vector<1x256xf32>
    %132 = vector.broadcast %cst_60 : f32 to vector<1x256xf32>
    %133 = arith.select %130, %131, %132 : vector<1x256xi1>, vector<1x256xf32>
    %cst_61 = arith.constant 1.000000e+00 : f32
    %134 = vector.broadcast %cst_61 : f32 to vector<1x256xf32>
    %135 = arith.addf %0, %134 : vector<1x256xf32>
    %cst_62 = arith.constant 0.000000e+00 : f32
    %136 = vector.broadcast %cst_62 : f32 to vector<1x256xf32>
    %137 = arith.cmpf oge, %135, %136 : vector<1x256xf32>
    %cst_63 = arith.constant 1.000000e+00 : f32
    %138 = vector.broadcast %cst_63 : f32 to vector<1x256xf32>
    %139 = arith.addf %0, %138 : vector<1x256xf32>
    %cst_64 = arith.constant 1.500000e+01 : f32
    %140 = vector.broadcast %cst_64 : f32 to vector<1x256xf32>
    %141 = arith.cmpf ole, %139, %140 : vector<1x256xf32>
    %142 = arith.andi %137, %141 : vector<1x256xi1>
    %cst_65 = arith.constant 0.000000e+00 : f32
    %143 = vector.broadcast %cst_65 : f32 to vector<1x256xf32>
    %144 = arith.addf %1, %143 : vector<1x256xf32>
    %cst_66 = arith.constant 0.000000e+00 : f32
    %145 = vector.broadcast %cst_66 : f32 to vector<1x256xf32>
    %146 = arith.cmpf oge, %144, %145 : vector<1x256xf32>
    %147 = arith.andi %142, %146 : vector<1x256xi1>
    %cst_67 = arith.constant 0.000000e+00 : f32
    %148 = vector.broadcast %cst_67 : f32 to vector<1x256xf32>
    %149 = arith.addf %1, %148 : vector<1x256xf32>
    %cst_68 = arith.constant 8.000000e+00 : f32
    %150 = vector.broadcast %cst_68 : f32 to vector<1x256xf32>
    %151 = arith.cmpf ole, %149, %150 : vector<1x256xf32>
    %152 = arith.andi %147, %151 : vector<1x256xi1>
    %cst_69 = arith.constant 1.000000e+00 : f32
    %cst_70 = arith.constant 0.000000e+00 : f32
    %153 = vector.broadcast %cst_69 : f32 to vector<1x256xf32>
    %154 = vector.broadcast %cst_70 : f32 to vector<1x256xf32>
    %155 = arith.select %152, %153, %154 : vector<1x256xi1>, vector<1x256xf32>
    %cst_71 = arith.constant 1.000000e+00 : f32
    %156 = vector.broadcast %cst_71 : f32 to vector<1x256xf32>
    %157 = arith.addf %0, %156 : vector<1x256xf32>
    %cst_72 = arith.constant 0.000000e+00 : f32
    %158 = vector.broadcast %cst_72 : f32 to vector<1x256xf32>
    %159 = arith.cmpf oge, %157, %158 : vector<1x256xf32>
    %cst_73 = arith.constant 1.000000e+00 : f32
    %160 = vector.broadcast %cst_73 : f32 to vector<1x256xf32>
    %161 = arith.addf %0, %160 : vector<1x256xf32>
    %cst_74 = arith.constant 1.500000e+01 : f32
    %162 = vector.broadcast %cst_74 : f32 to vector<1x256xf32>
    %163 = arith.cmpf ole, %161, %162 : vector<1x256xf32>
    %164 = arith.andi %159, %163 : vector<1x256xi1>
    %cst_75 = arith.constant 1.000000e+00 : f32
    %165 = vector.broadcast %cst_75 : f32 to vector<1x256xf32>
    %166 = arith.addf %1, %165 : vector<1x256xf32>
    %cst_76 = arith.constant 0.000000e+00 : f32
    %167 = vector.broadcast %cst_76 : f32 to vector<1x256xf32>
    %168 = arith.cmpf oge, %166, %167 : vector<1x256xf32>
    %169 = arith.andi %164, %168 : vector<1x256xi1>
    %cst_77 = arith.constant 1.000000e+00 : f32
    %170 = vector.broadcast %cst_77 : f32 to vector<1x256xf32>
    %171 = arith.addf %1, %170 : vector<1x256xf32>
    %cst_78 = arith.constant 8.000000e+00 : f32
    %172 = vector.broadcast %cst_78 : f32 to vector<1x256xf32>
    %173 = arith.cmpf ole, %171, %172 : vector<1x256xf32>
    %174 = arith.andi %169, %173 : vector<1x256xi1>
    %cst_79 = arith.constant 1.000000e+00 : f32
    %cst_80 = arith.constant 0.000000e+00 : f32
    %175 = vector.broadcast %cst_79 : f32 to vector<1x256xf32>
    %176 = vector.broadcast %cst_80 : f32 to vector<1x256xf32>
    %177 = arith.select %174, %175, %176 : vector<1x256xi1>, vector<1x256xf32>
    %cst_81 = arith.constant -5.000000e+00 : f32
    %178 = vector.broadcast %cst_81 : f32 to vector<1x256xf32>
    %179 = arith.addf %0, %178 : vector<1x256xf32>
    %cst_82 = arith.constant 0.000000e+00 : f32
    %180 = vector.broadcast %cst_82 : f32 to vector<1x256xf32>
    %181 = arith.cmpf oge, %179, %180 : vector<1x256xf32>
    %cst_83 = arith.constant -5.000000e+00 : f32
    %182 = vector.broadcast %cst_83 : f32 to vector<1x256xf32>
    %183 = arith.addf %0, %182 : vector<1x256xf32>
    %cst_84 = arith.constant 1.500000e+01 : f32
    %184 = vector.broadcast %cst_84 : f32 to vector<1x256xf32>
    %185 = arith.cmpf ole, %183, %184 : vector<1x256xf32>
    %186 = arith.andi %181, %185 : vector<1x256xi1>
    %cst_85 = arith.constant -5.000000e+00 : f32
    %187 = vector.broadcast %cst_85 : f32 to vector<1x256xf32>
    %188 = arith.addf %1, %187 : vector<1x256xf32>
    %cst_86 = arith.constant 0.000000e+00 : f32
    %189 = vector.broadcast %cst_86 : f32 to vector<1x256xf32>
    %190 = arith.cmpf oge, %188, %189 : vector<1x256xf32>
    %191 = arith.andi %186, %190 : vector<1x256xi1>
    %cst_87 = arith.constant -5.000000e+00 : f32
    %192 = vector.broadcast %cst_87 : f32 to vector<1x256xf32>
    %193 = arith.addf %1, %192 : vector<1x256xf32>
    %cst_88 = arith.constant 8.000000e+00 : f32
    %194 = vector.broadcast %cst_88 : f32 to vector<1x256xf32>
    %195 = arith.cmpf ole, %193, %194 : vector<1x256xf32>
    %196 = arith.andi %191, %195 : vector<1x256xi1>
    %cst_89 = arith.constant 1.000000e+00 : f32
    %cst_90 = arith.constant 0.000000e+00 : f32
    %197 = vector.broadcast %cst_89 : f32 to vector<1x256xf32>
    %198 = vector.broadcast %cst_90 : f32 to vector<1x256xf32>
    %199 = arith.select %196, %197, %198 : vector<1x256xi1>, vector<1x256xf32>
    %cst_91 = arith.constant -5.000000e+00 : f32
    %200 = vector.broadcast %cst_91 : f32 to vector<1x256xf32>
    %201 = arith.addf %0, %200 : vector<1x256xf32>
    %cst_92 = arith.constant 0.000000e+00 : f32
    %202 = vector.broadcast %cst_92 : f32 to vector<1x256xf32>
    %203 = arith.cmpf oge, %201, %202 : vector<1x256xf32>
    %cst_93 = arith.constant -5.000000e+00 : f32
    %204 = vector.broadcast %cst_93 : f32 to vector<1x256xf32>
    %205 = arith.addf %0, %204 : vector<1x256xf32>
    %cst_94 = arith.constant 1.500000e+01 : f32
    %206 = vector.broadcast %cst_94 : f32 to vector<1x256xf32>
    %207 = arith.cmpf ole, %205, %206 : vector<1x256xf32>
    %208 = arith.andi %203, %207 : vector<1x256xi1>
    %cst_95 = arith.constant 0.000000e+00 : f32
    %209 = vector.broadcast %cst_95 : f32 to vector<1x256xf32>
    %210 = arith.addf %1, %209 : vector<1x256xf32>
    %cst_96 = arith.constant 0.000000e+00 : f32
    %211 = vector.broadcast %cst_96 : f32 to vector<1x256xf32>
    %212 = arith.cmpf oge, %210, %211 : vector<1x256xf32>
    %213 = arith.andi %208, %212 : vector<1x256xi1>
    %cst_97 = arith.constant 0.000000e+00 : f32
    %214 = vector.broadcast %cst_97 : f32 to vector<1x256xf32>
    %215 = arith.addf %1, %214 : vector<1x256xf32>
    %cst_98 = arith.constant 8.000000e+00 : f32
    %216 = vector.broadcast %cst_98 : f32 to vector<1x256xf32>
    %217 = arith.cmpf ole, %215, %216 : vector<1x256xf32>
    %218 = arith.andi %213, %217 : vector<1x256xi1>
    %cst_99 = arith.constant 1.000000e+00 : f32
    %cst_100 = arith.constant 0.000000e+00 : f32
    %219 = vector.broadcast %cst_99 : f32 to vector<1x256xf32>
    %220 = vector.broadcast %cst_100 : f32 to vector<1x256xf32>
    %221 = arith.select %218, %219, %220 : vector<1x256xi1>, vector<1x256xf32>
    %cst_101 = arith.constant -5.000000e+00 : f32
    %222 = vector.broadcast %cst_101 : f32 to vector<1x256xf32>
    %223 = arith.addf %0, %222 : vector<1x256xf32>
    %cst_102 = arith.constant 0.000000e+00 : f32
    %224 = vector.broadcast %cst_102 : f32 to vector<1x256xf32>
    %225 = arith.cmpf oge, %223, %224 : vector<1x256xf32>
    %cst_103 = arith.constant -5.000000e+00 : f32
    %226 = vector.broadcast %cst_103 : f32 to vector<1x256xf32>
    %227 = arith.addf %0, %226 : vector<1x256xf32>
    %cst_104 = arith.constant 1.500000e+01 : f32
    %228 = vector.broadcast %cst_104 : f32 to vector<1x256xf32>
    %229 = arith.cmpf ole, %227, %228 : vector<1x256xf32>
    %230 = arith.andi %225, %229 : vector<1x256xi1>
    %cst_105 = arith.constant 5.000000e+00 : f32
    %231 = vector.broadcast %cst_105 : f32 to vector<1x256xf32>
    %232 = arith.addf %1, %231 : vector<1x256xf32>
    %cst_106 = arith.constant 0.000000e+00 : f32
    %233 = vector.broadcast %cst_106 : f32 to vector<1x256xf32>
    %234 = arith.cmpf oge, %232, %233 : vector<1x256xf32>
    %235 = arith.andi %230, %234 : vector<1x256xi1>
    %cst_107 = arith.constant 5.000000e+00 : f32
    %236 = vector.broadcast %cst_107 : f32 to vector<1x256xf32>
    %237 = arith.addf %1, %236 : vector<1x256xf32>
    %cst_108 = arith.constant 8.000000e+00 : f32
    %238 = vector.broadcast %cst_108 : f32 to vector<1x256xf32>
    %239 = arith.cmpf ole, %237, %238 : vector<1x256xf32>
    %240 = arith.andi %235, %239 : vector<1x256xi1>
    %cst_109 = arith.constant 1.000000e+00 : f32
    %cst_110 = arith.constant 0.000000e+00 : f32
    %241 = vector.broadcast %cst_109 : f32 to vector<1x256xf32>
    %242 = vector.broadcast %cst_110 : f32 to vector<1x256xf32>
    %243 = arith.select %240, %241, %242 : vector<1x256xi1>, vector<1x256xf32>
    %cst_111 = arith.constant 0.000000e+00 : f32
    %244 = vector.broadcast %cst_111 : f32 to vector<1x256xf32>
    %245 = arith.addf %0, %244 : vector<1x256xf32>
    %cst_112 = arith.constant 0.000000e+00 : f32
    %246 = vector.broadcast %cst_112 : f32 to vector<1x256xf32>
    %247 = arith.cmpf oge, %245, %246 : vector<1x256xf32>
    %cst_113 = arith.constant 0.000000e+00 : f32
    %248 = vector.broadcast %cst_113 : f32 to vector<1x256xf32>
    %249 = arith.addf %0, %248 : vector<1x256xf32>
    %cst_114 = arith.constant 1.500000e+01 : f32
    %250 = vector.broadcast %cst_114 : f32 to vector<1x256xf32>
    %251 = arith.cmpf ole, %249, %250 : vector<1x256xf32>
    %252 = arith.andi %247, %251 : vector<1x256xi1>
    %cst_115 = arith.constant -5.000000e+00 : f32
    %253 = vector.broadcast %cst_115 : f32 to vector<1x256xf32>
    %254 = arith.addf %1, %253 : vector<1x256xf32>
    %cst_116 = arith.constant 0.000000e+00 : f32
    %255 = vector.broadcast %cst_116 : f32 to vector<1x256xf32>
    %256 = arith.cmpf oge, %254, %255 : vector<1x256xf32>
    %257 = arith.andi %252, %256 : vector<1x256xi1>
    %cst_117 = arith.constant -5.000000e+00 : f32
    %258 = vector.broadcast %cst_117 : f32 to vector<1x256xf32>
    %259 = arith.addf %1, %258 : vector<1x256xf32>
    %cst_118 = arith.constant 8.000000e+00 : f32
    %260 = vector.broadcast %cst_118 : f32 to vector<1x256xf32>
    %261 = arith.cmpf ole, %259, %260 : vector<1x256xf32>
    %262 = arith.andi %257, %261 : vector<1x256xi1>
    %cst_119 = arith.constant 1.000000e+00 : f32
    %cst_120 = arith.constant 0.000000e+00 : f32
    %263 = vector.broadcast %cst_119 : f32 to vector<1x256xf32>
    %264 = vector.broadcast %cst_120 : f32 to vector<1x256xf32>
    %265 = arith.select %262, %263, %264 : vector<1x256xi1>, vector<1x256xf32>
    %cst_121 = arith.constant 0.000000e+00 : f32
    %266 = vector.broadcast %cst_121 : f32 to vector<1x256xf32>
    %267 = arith.addf %0, %266 : vector<1x256xf32>
    %cst_122 = arith.constant 0.000000e+00 : f32
    %268 = vector.broadcast %cst_122 : f32 to vector<1x256xf32>
    %269 = arith.cmpf oge, %267, %268 : vector<1x256xf32>
    %cst_123 = arith.constant 0.000000e+00 : f32
    %270 = vector.broadcast %cst_123 : f32 to vector<1x256xf32>
    %271 = arith.addf %0, %270 : vector<1x256xf32>
    %cst_124 = arith.constant 1.500000e+01 : f32
    %272 = vector.broadcast %cst_124 : f32 to vector<1x256xf32>
    %273 = arith.cmpf ole, %271, %272 : vector<1x256xf32>
    %274 = arith.andi %269, %273 : vector<1x256xi1>
    %cst_125 = arith.constant 5.000000e+00 : f32
    %275 = vector.broadcast %cst_125 : f32 to vector<1x256xf32>
    %276 = arith.addf %1, %275 : vector<1x256xf32>
    %cst_126 = arith.constant 0.000000e+00 : f32
    %277 = vector.broadcast %cst_126 : f32 to vector<1x256xf32>
    %278 = arith.cmpf oge, %276, %277 : vector<1x256xf32>
    %279 = arith.andi %274, %278 : vector<1x256xi1>
    %cst_127 = arith.constant 5.000000e+00 : f32
    %280 = vector.broadcast %cst_127 : f32 to vector<1x256xf32>
    %281 = arith.addf %1, %280 : vector<1x256xf32>
    %cst_128 = arith.constant 8.000000e+00 : f32
    %282 = vector.broadcast %cst_128 : f32 to vector<1x256xf32>
    %283 = arith.cmpf ole, %281, %282 : vector<1x256xf32>
    %284 = arith.andi %279, %283 : vector<1x256xi1>
    %cst_129 = arith.constant 1.000000e+00 : f32
    %cst_130 = arith.constant 0.000000e+00 : f32
    %285 = vector.broadcast %cst_129 : f32 to vector<1x256xf32>
    %286 = vector.broadcast %cst_130 : f32 to vector<1x256xf32>
    %287 = arith.select %284, %285, %286 : vector<1x256xi1>, vector<1x256xf32>
    %cst_131 = arith.constant 5.000000e+00 : f32
    %288 = vector.broadcast %cst_131 : f32 to vector<1x256xf32>
    %289 = arith.addf %0, %288 : vector<1x256xf32>
    %cst_132 = arith.constant 0.000000e+00 : f32
    %290 = vector.broadcast %cst_132 : f32 to vector<1x256xf32>
    %291 = arith.cmpf oge, %289, %290 : vector<1x256xf32>
    %cst_133 = arith.constant 5.000000e+00 : f32
    %292 = vector.broadcast %cst_133 : f32 to vector<1x256xf32>
    %293 = arith.addf %0, %292 : vector<1x256xf32>
    %cst_134 = arith.constant 1.500000e+01 : f32
    %294 = vector.broadcast %cst_134 : f32 to vector<1x256xf32>
    %295 = arith.cmpf ole, %293, %294 : vector<1x256xf32>
    %296 = arith.andi %291, %295 : vector<1x256xi1>
    %cst_135 = arith.constant -5.000000e+00 : f32
    %297 = vector.broadcast %cst_135 : f32 to vector<1x256xf32>
    %298 = arith.addf %1, %297 : vector<1x256xf32>
    %cst_136 = arith.constant 0.000000e+00 : f32
    %299 = vector.broadcast %cst_136 : f32 to vector<1x256xf32>
    %300 = arith.cmpf oge, %298, %299 : vector<1x256xf32>
    %301 = arith.andi %296, %300 : vector<1x256xi1>
    %cst_137 = arith.constant -5.000000e+00 : f32
    %302 = vector.broadcast %cst_137 : f32 to vector<1x256xf32>
    %303 = arith.addf %1, %302 : vector<1x256xf32>
    %cst_138 = arith.constant 8.000000e+00 : f32
    %304 = vector.broadcast %cst_138 : f32 to vector<1x256xf32>
    %305 = arith.cmpf ole, %303, %304 : vector<1x256xf32>
    %306 = arith.andi %301, %305 : vector<1x256xi1>
    %cst_139 = arith.constant 1.000000e+00 : f32
    %cst_140 = arith.constant 0.000000e+00 : f32
    %307 = vector.broadcast %cst_139 : f32 to vector<1x256xf32>
    %308 = vector.broadcast %cst_140 : f32 to vector<1x256xf32>
    %309 = arith.select %306, %307, %308 : vector<1x256xi1>, vector<1x256xf32>
    %cst_141 = arith.constant 5.000000e+00 : f32
    %310 = vector.broadcast %cst_141 : f32 to vector<1x256xf32>
    %311 = arith.addf %0, %310 : vector<1x256xf32>
    %cst_142 = arith.constant 0.000000e+00 : f32
    %312 = vector.broadcast %cst_142 : f32 to vector<1x256xf32>
    %313 = arith.cmpf oge, %311, %312 : vector<1x256xf32>
    %cst_143 = arith.constant 5.000000e+00 : f32
    %314 = vector.broadcast %cst_143 : f32 to vector<1x256xf32>
    %315 = arith.addf %0, %314 : vector<1x256xf32>
    %cst_144 = arith.constant 1.500000e+01 : f32
    %316 = vector.broadcast %cst_144 : f32 to vector<1x256xf32>
    %317 = arith.cmpf ole, %315, %316 : vector<1x256xf32>
    %318 = arith.andi %313, %317 : vector<1x256xi1>
    %cst_145 = arith.constant 0.000000e+00 : f32
    %319 = vector.broadcast %cst_145 : f32 to vector<1x256xf32>
    %320 = arith.addf %1, %319 : vector<1x256xf32>
    %cst_146 = arith.constant 0.000000e+00 : f32
    %321 = vector.broadcast %cst_146 : f32 to vector<1x256xf32>
    %322 = arith.cmpf oge, %320, %321 : vector<1x256xf32>
    %323 = arith.andi %318, %322 : vector<1x256xi1>
    %cst_147 = arith.constant 0.000000e+00 : f32
    %324 = vector.broadcast %cst_147 : f32 to vector<1x256xf32>
    %325 = arith.addf %1, %324 : vector<1x256xf32>
    %cst_148 = arith.constant 8.000000e+00 : f32
    %326 = vector.broadcast %cst_148 : f32 to vector<1x256xf32>
    %327 = arith.cmpf ole, %325, %326 : vector<1x256xf32>
    %328 = arith.andi %323, %327 : vector<1x256xi1>
    %cst_149 = arith.constant 1.000000e+00 : f32
    %cst_150 = arith.constant 0.000000e+00 : f32
    %329 = vector.broadcast %cst_149 : f32 to vector<1x256xf32>
    %330 = vector.broadcast %cst_150 : f32 to vector<1x256xf32>
    %331 = arith.select %328, %329, %330 : vector<1x256xi1>, vector<1x256xf32>
    %cst_151 = arith.constant 5.000000e+00 : f32
    %332 = vector.broadcast %cst_151 : f32 to vector<1x256xf32>
    %333 = arith.addf %0, %332 : vector<1x256xf32>
    %cst_152 = arith.constant 0.000000e+00 : f32
    %334 = vector.broadcast %cst_152 : f32 to vector<1x256xf32>
    %335 = arith.cmpf oge, %333, %334 : vector<1x256xf32>
    %cst_153 = arith.constant 5.000000e+00 : f32
    %336 = vector.broadcast %cst_153 : f32 to vector<1x256xf32>
    %337 = arith.addf %0, %336 : vector<1x256xf32>
    %cst_154 = arith.constant 1.500000e+01 : f32
    %338 = vector.broadcast %cst_154 : f32 to vector<1x256xf32>
    %339 = arith.cmpf ole, %337, %338 : vector<1x256xf32>
    %340 = arith.andi %335, %339 : vector<1x256xi1>
    %cst_155 = arith.constant 5.000000e+00 : f32
    %341 = vector.broadcast %cst_155 : f32 to vector<1x256xf32>
    %342 = arith.addf %1, %341 : vector<1x256xf32>
    %cst_156 = arith.constant 0.000000e+00 : f32
    %343 = vector.broadcast %cst_156 : f32 to vector<1x256xf32>
    %344 = arith.cmpf oge, %342, %343 : vector<1x256xf32>
    %345 = arith.andi %340, %344 : vector<1x256xi1>
    %cst_157 = arith.constant 5.000000e+00 : f32
    %346 = vector.broadcast %cst_157 : f32 to vector<1x256xf32>
    %347 = arith.addf %1, %346 : vector<1x256xf32>
    %cst_158 = arith.constant 8.000000e+00 : f32
    %348 = vector.broadcast %cst_158 : f32 to vector<1x256xf32>
    %349 = arith.cmpf ole, %347, %348 : vector<1x256xf32>
    %350 = arith.andi %345, %349 : vector<1x256xi1>
    %cst_159 = arith.constant 1.000000e+00 : f32
    %cst_160 = arith.constant 0.000000e+00 : f32
    %351 = vector.broadcast %cst_159 : f32 to vector<1x256xf32>
    %352 = vector.broadcast %cst_160 : f32 to vector<1x256xf32>
    %353 = arith.select %350, %351, %352 : vector<1x256xi1>, vector<1x256xf32>
    %cst_161 = arith.constant 1.500000e+01 : f32
    %354 = vector.broadcast %cst_161 : f32 to vector<1x256xf32>
    %355 = arith.cmpf ole, %0, %354 : vector<1x256xf32>
    %cst_162 = arith.constant 1.000000e+00 : f32
    %cst_163 = arith.constant 0.000000e+00 : f32
    %356 = vector.broadcast %cst_162 : f32 to vector<1x256xf32>
    %357 = vector.broadcast %cst_163 : f32 to vector<1x256xf32>
    %358 = arith.select %355, %356, %357 : vector<1x256xi1>, vector<1x256xf32>
    %c0_164 = arith.constant 0 : index
    %c0_165 = arith.constant 0 : index
    %359 = vector.load %arg4[%c0_164, %c0_165] : memref<4x10xf32, #tpu.memory_space<vmem>>, vector<4x10xf32>
    %c0_166 = arith.constant 0 : index
    %c0_167 = arith.constant 0 : index
    %360 = vector.load %arg5[%c0_166, %c0_167] : memref<4x10xf32, #tpu.memory_space<vmem>>, vector<4x10xf32>
    %c0_168 = arith.constant 0 : index
    %c0_169 = arith.constant 0 : index
    %361 = vector.load %arg6[%c0_168, %c0_169] : memref<4x9xf32, #tpu.memory_space<vmem>>, vector<4x9xf32>
    %c0_170 = arith.constant 0 : index
    %c0_171 = arith.constant 0 : index
    %362 = vector.load %arg7[%c0_170, %c0_171] : memref<4x18xf32, #tpu.memory_space<vmem>>, vector<4x18xf32>
    %c0_172 = arith.constant 0 : index
    %c0_173 = arith.constant 0 : index
    %363 = vector.load %arg8[%c0_172, %c0_173] : memref<4x18xf32, #tpu.memory_space<vmem>>, vector<4x18xf32>
    %c0_174 = arith.constant 0 : index
    %c0_175 = arith.constant 0 : index
    %364 = vector.load %arg9[%c0_174, %c0_175] : memref<4x18xf32, #tpu.memory_space<vmem>>, vector<4x18xf32>
    %365 = vector.extract_strided_slice %359 {offsets = [0, 0], sizes = [4, 1], strides = [1, 1]} : vector<4x10xf32> to vector<4x1xf32>
    %366 = vector.extract_strided_slice %359 {offsets = [0, 1], sizes = [4, 1], strides = [1, 1]} : vector<4x10xf32> to vector<4x1xf32>
    %367 = vector.extract_strided_slice %359 {offsets = [0, 2], sizes = [4, 1], strides = [1, 1]} : vector<4x10xf32> to vector<4x1xf32>
    %368 = vector.extract_strided_slice %359 {offsets = [0, 3], sizes = [4, 1], strides = [1, 1]} : vector<4x10xf32> to vector<4x1xf32>
    %369 = vector.extract_strided_slice %359 {offsets = [0, 4], sizes = [4, 1], strides = [1, 1]} : vector<4x10xf32> to vector<4x1xf32>
    %370 = vector.extract_strided_slice %359 {offsets = [0, 5], sizes = [4, 1], strides = [1, 1]} : vector<4x10xf32> to vector<4x1xf32>
    %371 = vector.extract_strided_slice %359 {offsets = [0, 6], sizes = [4, 1], strides = [1, 1]} : vector<4x10xf32> to vector<4x1xf32>
    %372 = vector.extract_strided_slice %359 {offsets = [0, 7], sizes = [4, 1], strides = [1, 1]} : vector<4x10xf32> to vector<4x1xf32>
    %373 = vector.extract_strided_slice %359 {offsets = [0, 8], sizes = [4, 1], strides = [1, 1]} : vector<4x10xf32> to vector<4x1xf32>
    %374 = vector.extract_strided_slice %359 {offsets = [0, 9], sizes = [4, 1], strides = [1, 1]} : vector<4x10xf32> to vector<4x1xf32>
    %375 = vector.extract_strided_slice %360 {offsets = [0, 0], sizes = [4, 1], strides = [1, 1]} : vector<4x10xf32> to vector<4x1xf32>
    %376 = vector.extract_strided_slice %360 {offsets = [0, 1], sizes = [4, 1], strides = [1, 1]} : vector<4x10xf32> to vector<4x1xf32>
    %377 = vector.extract_strided_slice %360 {offsets = [0, 2], sizes = [4, 1], strides = [1, 1]} : vector<4x10xf32> to vector<4x1xf32>
    %378 = vector.extract_strided_slice %360 {offsets = [0, 3], sizes = [4, 1], strides = [1, 1]} : vector<4x10xf32> to vector<4x1xf32>
    %379 = vector.extract_strided_slice %360 {offsets = [0, 4], sizes = [4, 1], strides = [1, 1]} : vector<4x10xf32> to vector<4x1xf32>
    %380 = vector.extract_strided_slice %360 {offsets = [0, 5], sizes = [4, 1], strides = [1, 1]} : vector<4x10xf32> to vector<4x1xf32>
    %381 = vector.extract_strided_slice %360 {offsets = [0, 6], sizes = [4, 1], strides = [1, 1]} : vector<4x10xf32> to vector<4x1xf32>
    %382 = vector.extract_strided_slice %360 {offsets = [0, 7], sizes = [4, 1], strides = [1, 1]} : vector<4x10xf32> to vector<4x1xf32>
    %383 = vector.extract_strided_slice %360 {offsets = [0, 8], sizes = [4, 1], strides = [1, 1]} : vector<4x10xf32> to vector<4x1xf32>
    %384 = vector.extract_strided_slice %360 {offsets = [0, 9], sizes = [4, 1], strides = [1, 1]} : vector<4x10xf32> to vector<4x1xf32>
    %385 = vector.extract_strided_slice %361 {offsets = [0, 0], sizes = [4, 1], strides = [1, 1]} : vector<4x9xf32> to vector<4x1xf32>
    %386 = vector.extract_strided_slice %361 {offsets = [0, 1], sizes = [4, 1], strides = [1, 1]} : vector<4x9xf32> to vector<4x1xf32>
    %387 = vector.extract_strided_slice %361 {offsets = [0, 2], sizes = [4, 1], strides = [1, 1]} : vector<4x9xf32> to vector<4x1xf32>
    %388 = vector.extract_strided_slice %361 {offsets = [0, 3], sizes = [4, 1], strides = [1, 1]} : vector<4x9xf32> to vector<4x1xf32>
    %389 = vector.extract_strided_slice %361 {offsets = [0, 4], sizes = [4, 1], strides = [1, 1]} : vector<4x9xf32> to vector<4x1xf32>
    %390 = vector.extract_strided_slice %361 {offsets = [0, 5], sizes = [4, 1], strides = [1, 1]} : vector<4x9xf32> to vector<4x1xf32>
    %391 = vector.extract_strided_slice %361 {offsets = [0, 6], sizes = [4, 1], strides = [1, 1]} : vector<4x9xf32> to vector<4x1xf32>
    %392 = vector.extract_strided_slice %361 {offsets = [0, 7], sizes = [4, 1], strides = [1, 1]} : vector<4x9xf32> to vector<4x1xf32>
    %393 = vector.extract_strided_slice %361 {offsets = [0, 8], sizes = [4, 1], strides = [1, 1]} : vector<4x9xf32> to vector<4x1xf32>
    %c0_176 = arith.constant 0 : index
    %c0_177 = arith.constant 0 : index
    %c0_178 = arith.constant 0 : index
    %394 = vector.load %arg1[%c0_176, %c0_177, %c0_178] : memref<1x4x256xf32, #tpu.memory_space<vmem>>, vector<1x4x256xf32>
    %395 = vector.shape_cast %394 : vector<1x4x256xf32> to vector<4x256xf32>
    %cst_179 = arith.constant dense<0.000000e+00> : vector<256xf32>
    %396 = vector.multi_reduction <add>, %395, %cst_179 [0] : vector<4x256xf32> to vector<256xf32>
    %397 = vector.shape_cast %396 : vector<256xf32> to vector<1x256xf32>
    %cst_180 = arith.constant 4.000000e+00 : f32
    %398 = vector.broadcast %cst_180 : f32 to vector<1x256xf32>
    %399 = arith.divf %397, %398 : vector<1x256xf32>
    %400 = vector.broadcast %399 : vector<1x256xf32> to vector<4x256xf32>
    %401 = arith.subf %395, %400 : vector<4x256xf32>
    %402 = arith.mulf %401, %401 : vector<4x256xf32>
    %cst_181 = arith.constant dense<0.000000e+00> : vector<256xf32>
    %403 = vector.multi_reduction <add>, %402, %cst_181 [0] : vector<4x256xf32> to vector<256xf32>
    %404 = vector.shape_cast %403 : vector<256xf32> to vector<1x256xf32>
    %cst_182 = arith.constant 4.000000e+00 : f32
    %405 = vector.broadcast %cst_182 : f32 to vector<1x256xf32>
    %406 = arith.divf %404, %405 : vector<1x256xf32>
    %407 = vector.broadcast %399 : vector<1x256xf32> to vector<4x256xf32>
    %408 = arith.subf %395, %407 : vector<4x256xf32>
    %cst_183 = arith.constant 9.99999997E-7 : f32
    %409 = vector.broadcast %cst_183 : f32 to vector<1x256xf32>
    %410 = arith.addf %406, %409 : vector<1x256xf32>
    %411 = math.rsqrt %410 : vector<1x256xf32>
    %412 = vector.broadcast %411 : vector<1x256xf32> to vector<4x256xf32>
    %413 = arith.mulf %408, %412 : vector<4x256xf32>
    %414 = vector.broadcast %365 : vector<4x1xf32> to vector<4x256xf32>
    %415 = arith.mulf %413, %414 : vector<4x256xf32>
    %416 = vector.broadcast %366 : vector<4x1xf32> to vector<4x256xf32>
    %417 = arith.addf %415, %416 : vector<4x256xf32>
    %418 = vector.broadcast %367 : vector<4x1xf32> to vector<4x256xf32>
    %419 = arith.mulf %417, %418 : vector<4x256xf32>
    %c0_184 = arith.constant 0 : index
    %c0_185 = arith.constant 0 : index
    %c0_186 = arith.constant 0 : index
    %420 = vector.load %arg2[%c0_184, %c0_185, %c0_186] : memref<1x4x256xf32, #tpu.memory_space<vmem>>, vector<1x4x256xf32>
    %421 = vector.shape_cast %420 : vector<1x4x256xf32> to vector<4x256xf32>
    %cst_187 = arith.constant dense<0.000000e+00> : vector<256xf32>
    %422 = vector.multi_reduction <add>, %421, %cst_187 [0] : vector<4x256xf32> to vector<256xf32>
    %423 = vector.shape_cast %422 : vector<256xf32> to vector<1x256xf32>
    %cst_188 = arith.constant 4.000000e+00 : f32
    %424 = vector.broadcast %cst_188 : f32 to vector<1x256xf32>
    %425 = arith.divf %423, %424 : vector<1x256xf32>
    %426 = vector.broadcast %425 : vector<1x256xf32> to vector<4x256xf32>
    %427 = arith.subf %421, %426 : vector<4x256xf32>
    %428 = arith.mulf %427, %427 : vector<4x256xf32>
    %cst_189 = arith.constant dense<0.000000e+00> : vector<256xf32>
    %429 = vector.multi_reduction <add>, %428, %cst_189 [0] : vector<4x256xf32> to vector<256xf32>
    %430 = vector.shape_cast %429 : vector<256xf32> to vector<1x256xf32>
    %cst_190 = arith.constant 4.000000e+00 : f32
    %431 = vector.broadcast %cst_190 : f32 to vector<1x256xf32>
    %432 = arith.divf %430, %431 : vector<1x256xf32>
    %433 = vector.broadcast %425 : vector<1x256xf32> to vector<4x256xf32>
    %434 = arith.subf %421, %433 : vector<4x256xf32>
    %cst_191 = arith.constant 9.99999997E-7 : f32
    %435 = vector.broadcast %cst_191 : f32 to vector<1x256xf32>
    %436 = arith.addf %432, %435 : vector<1x256xf32>
    %437 = math.rsqrt %436 : vector<1x256xf32>
    %438 = vector.broadcast %437 : vector<1x256xf32> to vector<4x256xf32>
    %439 = arith.mulf %434, %438 : vector<4x256xf32>
    %440 = vector.broadcast %375 : vector<4x1xf32> to vector<4x256xf32>
    %441 = arith.mulf %439, %440 : vector<4x256xf32>
    %442 = vector.broadcast %376 : vector<4x1xf32> to vector<4x256xf32>
    %443 = arith.addf %441, %442 : vector<4x256xf32>
    %444 = vector.broadcast %377 : vector<4x1xf32> to vector<4x256xf32>
    %445 = arith.mulf %443, %444 : vector<4x256xf32>
    %c0_192 = arith.constant 0 : index
    %c0_193 = arith.constant 0 : index
    %c0_194 = arith.constant 0 : index
    %446 = vector.load %arg10[%c0_192, %c0_193, %c0_194] : memref<8x4x4xf32, #tpu.memory_space<vmem>>, vector<1x4x4xf32>
    %447 = vector.shape_cast %446 : vector<1x4x4xf32> to vector<4x4xf32>
    %448 = vector.extract_strided_slice %362 {offsets = [0, 0], sizes = [4, 9], strides = [1, 1]} : vector<4x18xf32> to vector<4x9xf32>
    %449 = vector.extract_strided_slice %448 {offsets = [0, 4], sizes = [4, 1], strides = [1, 1]} : vector<4x9xf32> to vector<4x1xf32>
    %450 = vector.broadcast %449 : vector<4x1xf32> to vector<4x256xf32>
    %451 = arith.mulf %419, %450 : vector<4x256xf32>
    %452 = vector.broadcast %368 : vector<4x1xf32> to vector<4x256xf32>
    %453 = arith.addf %451, %452 : vector<4x256xf32>
    %c10_i32 = arith.constant 10 : i32
    %454 = tpu.dynamic_rotate %419 by %c10_i32 dim 1 : vector<4x256xf32>, i32 -> vector<4x256xf32>
    %455 = vector.broadcast %23 : vector<1x256xf32> to vector<4x256xf32>
    %456 = arith.mulf %454, %455 : vector<4x256xf32>
    %457 = vector.extract_strided_slice %448 {offsets = [0, 0], sizes = [4, 1], strides = [1, 1]} : vector<4x9xf32> to vector<4x1xf32>
    %458 = vector.broadcast %457 : vector<4x1xf32> to vector<4x256xf32>
    %459 = arith.mulf %456, %458 : vector<4x256xf32>
    %460 = arith.addf %453, %459 : vector<4x256xf32>
    %c9_i32 = arith.constant 9 : i32
    %461 = tpu.dynamic_rotate %419 by %c9_i32 dim 1 : vector<4x256xf32>, i32 -> vector<4x256xf32>
    %462 = vector.broadcast %45 : vector<1x256xf32> to vector<4x256xf32>
    %463 = arith.mulf %461, %462 : vector<4x256xf32>
    %464 = vector.extract_strided_slice %448 {offsets = [0, 1], sizes = [4, 1], strides = [1, 1]} : vector<4x9xf32> to vector<4x1xf32>
    %465 = vector.broadcast %464 : vector<4x1xf32> to vector<4x256xf32>
    %466 = arith.mulf %463, %465 : vector<4x256xf32>
    %467 = arith.addf %460, %466 : vector<4x256xf32>
    %c8_i32 = arith.constant 8 : i32
    %468 = tpu.dynamic_rotate %419 by %c8_i32 dim 1 : vector<4x256xf32>, i32 -> vector<4x256xf32>
    %469 = vector.broadcast %67 : vector<1x256xf32> to vector<4x256xf32>
    %470 = arith.mulf %468, %469 : vector<4x256xf32>
    %471 = vector.extract_strided_slice %448 {offsets = [0, 2], sizes = [4, 1], strides = [1, 1]} : vector<4x9xf32> to vector<4x1xf32>
    %472 = vector.broadcast %471 : vector<4x1xf32> to vector<4x256xf32>
    %473 = arith.mulf %470, %472 : vector<4x256xf32>
    %474 = arith.addf %467, %473 : vector<4x256xf32>
    %c1_i32 = arith.constant 1 : i32
    %475 = tpu.dynamic_rotate %419 by %c1_i32 dim 1 : vector<4x256xf32>, i32 -> vector<4x256xf32>
    %476 = vector.broadcast %89 : vector<1x256xf32> to vector<4x256xf32>
    %477 = arith.mulf %475, %476 : vector<4x256xf32>
    %478 = vector.extract_strided_slice %448 {offsets = [0, 3], sizes = [4, 1], strides = [1, 1]} : vector<4x9xf32> to vector<4x1xf32>
    %479 = vector.broadcast %478 : vector<4x1xf32> to vector<4x256xf32>
    %480 = arith.mulf %477, %479 : vector<4x256xf32>
    %481 = arith.addf %474, %480 : vector<4x256xf32>
    %c255_i32 = arith.constant 255 : i32
    %482 = tpu.dynamic_rotate %419 by %c255_i32 dim 1 : vector<4x256xf32>, i32 -> vector<4x256xf32>
    %483 = vector.broadcast %111 : vector<1x256xf32> to vector<4x256xf32>
    %484 = arith.mulf %482, %483 : vector<4x256xf32>
    %485 = vector.extract_strided_slice %448 {offsets = [0, 5], sizes = [4, 1], strides = [1, 1]} : vector<4x9xf32> to vector<4x1xf32>
    %486 = vector.broadcast %485 : vector<4x1xf32> to vector<4x256xf32>
    %487 = arith.mulf %484, %486 : vector<4x256xf32>
    %488 = arith.addf %481, %487 : vector<4x256xf32>
    %c248_i32 = arith.constant 248 : i32
    %489 = tpu.dynamic_rotate %419 by %c248_i32 dim 1 : vector<4x256xf32>, i32 -> vector<4x256xf32>
    %490 = vector.broadcast %133 : vector<1x256xf32> to vector<4x256xf32>
    %491 = arith.mulf %489, %490 : vector<4x256xf32>
    %492 = vector.extract_strided_slice %448 {offsets = [0, 6], sizes = [4, 1], strides = [1, 1]} : vector<4x9xf32> to vector<4x1xf32>
    %493 = vector.broadcast %492 : vector<4x1xf32> to vector<4x256xf32>
    %494 = arith.mulf %491, %493 : vector<4x256xf32>
    %495 = arith.addf %488, %494 : vector<4x256xf32>
    %c247_i32 = arith.constant 247 : i32
    %496 = tpu.dynamic_rotate %419 by %c247_i32 dim 1 : vector<4x256xf32>, i32 -> vector<4x256xf32>
    %497 = vector.broadcast %155 : vector<1x256xf32> to vector<4x256xf32>
    %498 = arith.mulf %496, %497 : vector<4x256xf32>
    %499 = vector.extract_strided_slice %448 {offsets = [0, 7], sizes = [4, 1], strides = [1, 1]} : vector<4x9xf32> to vector<4x1xf32>
    %500 = vector.broadcast %499 : vector<4x1xf32> to vector<4x256xf32>
    %501 = arith.mulf %498, %500 : vector<4x256xf32>
    %502 = arith.addf %495, %501 : vector<4x256xf32>
    %c246_i32 = arith.constant 246 : i32
    %503 = tpu.dynamic_rotate %419 by %c246_i32 dim 1 : vector<4x256xf32>, i32 -> vector<4x256xf32>
    %504 = vector.broadcast %177 : vector<1x256xf32> to vector<4x256xf32>
    %505 = arith.mulf %503, %504 : vector<4x256xf32>
    %506 = vector.extract_strided_slice %448 {offsets = [0, 8], sizes = [4, 1], strides = [1, 1]} : vector<4x9xf32> to vector<4x1xf32>
    %507 = vector.broadcast %506 : vector<4x1xf32> to vector<4x256xf32>
    %508 = arith.mulf %505, %507 : vector<4x256xf32>
    %509 = arith.addf %502, %508 : vector<4x256xf32>
    %cst_195 = arith.constant dense<0.000000e+00> : vector<4x256xf32>
    %510 = tpu.matmul %447, %509, %cst_195 {dimension_numbers = #tpu.dot_dimension_numbers<[1], [0], [0], [1], [0, 0, 1, 1], [], []>} : vector<4x4xf32>, vector<4x256xf32>, vector<4x256xf32> -> vector<4x256xf32>
    %511 = vector.broadcast %369 : vector<4x1xf32> to vector<4x256xf32>
    %512 = arith.addf %510, %511 : vector<4x256xf32>
    %c1_196 = arith.constant 1 : index
    %c0_197 = arith.constant 0 : index
    %c0_198 = arith.constant 0 : index
    %513 = vector.load %arg10[%c1_196, %c0_197, %c0_198] : memref<8x4x4xf32, #tpu.memory_space<vmem>>, vector<1x4x4xf32>
    %514 = vector.shape_cast %513 : vector<1x4x4xf32> to vector<4x4xf32>
    %515 = vector.extract_strided_slice %363 {offsets = [0, 0], sizes = [4, 9], strides = [1, 1]} : vector<4x18xf32> to vector<4x9xf32>
    %516 = vector.extract_strided_slice %515 {offsets = [0, 4], sizes = [4, 1], strides = [1, 1]} : vector<4x9xf32> to vector<4x1xf32>
    %517 = vector.broadcast %516 : vector<4x1xf32> to vector<4x256xf32>
    %518 = arith.mulf %445, %517 : vector<4x256xf32>
    %519 = vector.broadcast %378 : vector<4x1xf32> to vector<4x256xf32>
    %520 = arith.addf %518, %519 : vector<4x256xf32>
    %c10_i32_199 = arith.constant 10 : i32
    %521 = tpu.dynamic_rotate %445 by %c10_i32_199 dim 1 : vector<4x256xf32>, i32 -> vector<4x256xf32>
    %522 = vector.broadcast %23 : vector<1x256xf32> to vector<4x256xf32>
    %523 = arith.mulf %521, %522 : vector<4x256xf32>
    %524 = vector.extract_strided_slice %515 {offsets = [0, 0], sizes = [4, 1], strides = [1, 1]} : vector<4x9xf32> to vector<4x1xf32>
    %525 = vector.broadcast %524 : vector<4x1xf32> to vector<4x256xf32>
    %526 = arith.mulf %523, %525 : vector<4x256xf32>
    %527 = arith.addf %520, %526 : vector<4x256xf32>
    %c9_i32_200 = arith.constant 9 : i32
    %528 = tpu.dynamic_rotate %445 by %c9_i32_200 dim 1 : vector<4x256xf32>, i32 -> vector<4x256xf32>
    %529 = vector.broadcast %45 : vector<1x256xf32> to vector<4x256xf32>
    %530 = arith.mulf %528, %529 : vector<4x256xf32>
    %531 = vector.extract_strided_slice %515 {offsets = [0, 1], sizes = [4, 1], strides = [1, 1]} : vector<4x9xf32> to vector<4x1xf32>
    %532 = vector.broadcast %531 : vector<4x1xf32> to vector<4x256xf32>
    %533 = arith.mulf %530, %532 : vector<4x256xf32>
    %534 = arith.addf %527, %533 : vector<4x256xf32>
    %c8_i32_201 = arith.constant 8 : i32
    %535 = tpu.dynamic_rotate %445 by %c8_i32_201 dim 1 : vector<4x256xf32>, i32 -> vector<4x256xf32>
    %536 = vector.broadcast %67 : vector<1x256xf32> to vector<4x256xf32>
    %537 = arith.mulf %535, %536 : vector<4x256xf32>
    %538 = vector.extract_strided_slice %515 {offsets = [0, 2], sizes = [4, 1], strides = [1, 1]} : vector<4x9xf32> to vector<4x1xf32>
    %539 = vector.broadcast %538 : vector<4x1xf32> to vector<4x256xf32>
    %540 = arith.mulf %537, %539 : vector<4x256xf32>
    %541 = arith.addf %534, %540 : vector<4x256xf32>
    %c1_i32_202 = arith.constant 1 : i32
    %542 = tpu.dynamic_rotate %445 by %c1_i32_202 dim 1 : vector<4x256xf32>, i32 -> vector<4x256xf32>
    %543 = vector.broadcast %89 : vector<1x256xf32> to vector<4x256xf32>
    %544 = arith.mulf %542, %543 : vector<4x256xf32>
    %545 = vector.extract_strided_slice %515 {offsets = [0, 3], sizes = [4, 1], strides = [1, 1]} : vector<4x9xf32> to vector<4x1xf32>
    %546 = vector.broadcast %545 : vector<4x1xf32> to vector<4x256xf32>
    %547 = arith.mulf %544, %546 : vector<4x256xf32>
    %548 = arith.addf %541, %547 : vector<4x256xf32>
    %c255_i32_203 = arith.constant 255 : i32
    %549 = tpu.dynamic_rotate %445 by %c255_i32_203 dim 1 : vector<4x256xf32>, i32 -> vector<4x256xf32>
    %550 = vector.broadcast %111 : vector<1x256xf32> to vector<4x256xf32>
    %551 = arith.mulf %549, %550 : vector<4x256xf32>
    %552 = vector.extract_strided_slice %515 {offsets = [0, 5], sizes = [4, 1], strides = [1, 1]} : vector<4x9xf32> to vector<4x1xf32>
    %553 = vector.broadcast %552 : vector<4x1xf32> to vector<4x256xf32>
    %554 = arith.mulf %551, %553 : vector<4x256xf32>
    %555 = arith.addf %548, %554 : vector<4x256xf32>
    %c248_i32_204 = arith.constant 248 : i32
    %556 = tpu.dynamic_rotate %445 by %c248_i32_204 dim 1 : vector<4x256xf32>, i32 -> vector<4x256xf32>
    %557 = vector.broadcast %133 : vector<1x256xf32> to vector<4x256xf32>
    %558 = arith.mulf %556, %557 : vector<4x256xf32>
    %559 = vector.extract_strided_slice %515 {offsets = [0, 6], sizes = [4, 1], strides = [1, 1]} : vector<4x9xf32> to vector<4x1xf32>
    %560 = vector.broadcast %559 : vector<4x1xf32> to vector<4x256xf32>
    %561 = arith.mulf %558, %560 : vector<4x256xf32>
    %562 = arith.addf %555, %561 : vector<4x256xf32>
    %c247_i32_205 = arith.constant 247 : i32
    %563 = tpu.dynamic_rotate %445 by %c247_i32_205 dim 1 : vector<4x256xf32>, i32 -> vector<4x256xf32>
    %564 = vector.broadcast %155 : vector<1x256xf32> to vector<4x256xf32>
    %565 = arith.mulf %563, %564 : vector<4x256xf32>
    %566 = vector.extract_strided_slice %515 {offsets = [0, 7], sizes = [4, 1], strides = [1, 1]} : vector<4x9xf32> to vector<4x1xf32>
    %567 = vector.broadcast %566 : vector<4x1xf32> to vector<4x256xf32>
    %568 = arith.mulf %565, %567 : vector<4x256xf32>
    %569 = arith.addf %562, %568 : vector<4x256xf32>
    %c246_i32_206 = arith.constant 246 : i32
    %570 = tpu.dynamic_rotate %445 by %c246_i32_206 dim 1 : vector<4x256xf32>, i32 -> vector<4x256xf32>
    %571 = vector.broadcast %177 : vector<1x256xf32> to vector<4x256xf32>
    %572 = arith.mulf %570, %571 : vector<4x256xf32>
    %573 = vector.extract_strided_slice %515 {offsets = [0, 8], sizes = [4, 1], strides = [1, 1]} : vector<4x9xf32> to vector<4x1xf32>
    %574 = vector.broadcast %573 : vector<4x1xf32> to vector<4x256xf32>
    %575 = arith.mulf %572, %574 : vector<4x256xf32>
    %576 = arith.addf %569, %575 : vector<4x256xf32>
    %cst_207 = arith.constant dense<0.000000e+00> : vector<4x256xf32>
    %577 = tpu.matmul %514, %576, %cst_207 {dimension_numbers = #tpu.dot_dimension_numbers<[1], [0], [0], [1], [0, 0, 1, 1], [], []>} : vector<4x4xf32>, vector<4x256xf32>, vector<4x256xf32> -> vector<4x256xf32>
    %578 = vector.broadcast %379 : vector<4x1xf32> to vector<4x256xf32>
    %579 = arith.addf %577, %578 : vector<4x256xf32>
    %cst_208 = arith.constant dense<0.000000e+00> : vector<256xf32>
    %580 = vector.multi_reduction <add>, %512, %cst_208 [0] : vector<4x256xf32> to vector<256xf32>
    %581 = vector.shape_cast %580 : vector<256xf32> to vector<1x256xf32>
    %cst_209 = arith.constant dense<0.000000e+00> : vector<256xf32>
    %582 = vector.multi_reduction <add>, %579, %cst_209 [0] : vector<4x256xf32> to vector<256xf32>
    %583 = vector.shape_cast %582 : vector<256xf32> to vector<1x256xf32>
    %584 = arith.addf %581, %583 : vector<1x256xf32>
    %cst_210 = arith.constant 1.250000e-01 : f32
    %585 = vector.broadcast %cst_210 : f32 to vector<1x256xf32>
    %586 = arith.mulf %584, %585 : vector<1x256xf32>
    %587 = vector.broadcast %586 : vector<1x256xf32> to vector<4x256xf32>
    %588 = arith.subf %512, %587 : vector<4x256xf32>
    %589 = arith.mulf %588, %588 : vector<4x256xf32>
    %cst_211 = arith.constant dense<0.000000e+00> : vector<256xf32>
    %590 = vector.multi_reduction <add>, %589, %cst_211 [0] : vector<4x256xf32> to vector<256xf32>
    %591 = vector.shape_cast %590 : vector<256xf32> to vector<1x256xf32>
    %592 = vector.broadcast %586 : vector<1x256xf32> to vector<4x256xf32>
    %593 = arith.subf %579, %592 : vector<4x256xf32>
    %594 = arith.mulf %593, %593 : vector<4x256xf32>
    %cst_212 = arith.constant dense<0.000000e+00> : vector<256xf32>
    %595 = vector.multi_reduction <add>, %594, %cst_212 [0] : vector<4x256xf32> to vector<256xf32>
    %596 = vector.shape_cast %595 : vector<256xf32> to vector<1x256xf32>
    %597 = arith.addf %591, %596 : vector<1x256xf32>
    %cst_213 = arith.constant 1.250000e-01 : f32
    %598 = vector.broadcast %cst_213 : f32 to vector<1x256xf32>
    %599 = arith.mulf %597, %598 : vector<1x256xf32>
    %cst_214 = arith.constant 9.99999997E-7 : f32
    %600 = vector.broadcast %cst_214 : f32 to vector<1x256xf32>
    %601 = arith.addf %599, %600 : vector<1x256xf32>
    %602 = math.rsqrt %601 : vector<1x256xf32>
    %603 = vector.broadcast %586 : vector<1x256xf32> to vector<4x256xf32>
    %604 = arith.subf %512, %603 : vector<4x256xf32>
    %605 = vector.broadcast %602 : vector<1x256xf32> to vector<4x256xf32>
    %606 = arith.mulf %604, %605 : vector<4x256xf32>
    %607 = vector.broadcast %370 : vector<4x1xf32> to vector<4x256xf32>
    %608 = arith.mulf %606, %607 : vector<4x256xf32>
    %609 = vector.broadcast %371 : vector<4x1xf32> to vector<4x256xf32>
    %610 = arith.addf %608, %609 : vector<4x256xf32>
    %611 = vector.broadcast %586 : vector<1x256xf32> to vector<4x256xf32>
    %612 = arith.subf %579, %611 : vector<4x256xf32>
    %613 = vector.broadcast %602 : vector<1x256xf32> to vector<4x256xf32>
    %614 = arith.mulf %612, %613 : vector<4x256xf32>
    %615 = vector.broadcast %380 : vector<4x1xf32> to vector<4x256xf32>
    %616 = arith.mulf %614, %615 : vector<4x256xf32>
    %617 = vector.broadcast %381 : vector<4x1xf32> to vector<4x256xf32>
    %618 = arith.addf %616, %617 : vector<4x256xf32>
    %619 = vector.extract_strided_slice %362 {offsets = [0, 9], sizes = [4, 9], strides = [1, 1]} : vector<4x18xf32> to vector<4x9xf32>
    %620 = vector.extract_strided_slice %619 {offsets = [0, 4], sizes = [4, 1], strides = [1, 1]} : vector<4x9xf32> to vector<4x1xf32>
    %621 = vector.broadcast %620 : vector<4x1xf32> to vector<4x256xf32>
    %622 = arith.mulf %610, %621 : vector<4x256xf32>
    %623 = vector.broadcast %372 : vector<4x1xf32> to vector<4x256xf32>
    %624 = arith.addf %622, %623 : vector<4x256xf32>
    %c10_i32_215 = arith.constant 10 : i32
    %625 = tpu.dynamic_rotate %610 by %c10_i32_215 dim 1 : vector<4x256xf32>, i32 -> vector<4x256xf32>
    %626 = vector.broadcast %23 : vector<1x256xf32> to vector<4x256xf32>
    %627 = arith.mulf %625, %626 : vector<4x256xf32>
    %628 = vector.extract_strided_slice %619 {offsets = [0, 0], sizes = [4, 1], strides = [1, 1]} : vector<4x9xf32> to vector<4x1xf32>
    %629 = vector.broadcast %628 : vector<4x1xf32> to vector<4x256xf32>
    %630 = arith.mulf %627, %629 : vector<4x256xf32>
    %631 = arith.addf %624, %630 : vector<4x256xf32>
    %c9_i32_216 = arith.constant 9 : i32
    %632 = tpu.dynamic_rotate %610 by %c9_i32_216 dim 1 : vector<4x256xf32>, i32 -> vector<4x256xf32>
    %633 = vector.broadcast %45 : vector<1x256xf32> to vector<4x256xf32>
    %634 = arith.mulf %632, %633 : vector<4x256xf32>
    %635 = vector.extract_strided_slice %619 {offsets = [0, 1], sizes = [4, 1], strides = [1, 1]} : vector<4x9xf32> to vector<4x1xf32>
    %636 = vector.broadcast %635 : vector<4x1xf32> to vector<4x256xf32>
    %637 = arith.mulf %634, %636 : vector<4x256xf32>
    %638 = arith.addf %631, %637 : vector<4x256xf32>
    %c8_i32_217 = arith.constant 8 : i32
    %639 = tpu.dynamic_rotate %610 by %c8_i32_217 dim 1 : vector<4x256xf32>, i32 -> vector<4x256xf32>
    %640 = vector.broadcast %67 : vector<1x256xf32> to vector<4x256xf32>
    %641 = arith.mulf %639, %640 : vector<4x256xf32>
    %642 = vector.extract_strided_slice %619 {offsets = [0, 2], sizes = [4, 1], strides = [1, 1]} : vector<4x9xf32> to vector<4x1xf32>
    %643 = vector.broadcast %642 : vector<4x1xf32> to vector<4x256xf32>
    %644 = arith.mulf %641, %643 : vector<4x256xf32>
    %645 = arith.addf %638, %644 : vector<4x256xf32>
    %c1_i32_218 = arith.constant 1 : i32
    %646 = tpu.dynamic_rotate %610 by %c1_i32_218 dim 1 : vector<4x256xf32>, i32 -> vector<4x256xf32>
    %647 = vector.broadcast %89 : vector<1x256xf32> to vector<4x256xf32>
    %648 = arith.mulf %646, %647 : vector<4x256xf32>
    %649 = vector.extract_strided_slice %619 {offsets = [0, 3], sizes = [4, 1], strides = [1, 1]} : vector<4x9xf32> to vector<4x1xf32>
    %650 = vector.broadcast %649 : vector<4x1xf32> to vector<4x256xf32>
    %651 = arith.mulf %648, %650 : vector<4x256xf32>
    %652 = arith.addf %645, %651 : vector<4x256xf32>
    %c255_i32_219 = arith.constant 255 : i32
    %653 = tpu.dynamic_rotate %610 by %c255_i32_219 dim 1 : vector<4x256xf32>, i32 -> vector<4x256xf32>
    %654 = vector.broadcast %111 : vector<1x256xf32> to vector<4x256xf32>
    %655 = arith.mulf %653, %654 : vector<4x256xf32>
    %656 = vector.extract_strided_slice %619 {offsets = [0, 5], sizes = [4, 1], strides = [1, 1]} : vector<4x9xf32> to vector<4x1xf32>
    %657 = vector.broadcast %656 : vector<4x1xf32> to vector<4x256xf32>
    %658 = arith.mulf %655, %657 : vector<4x256xf32>
    %659 = arith.addf %652, %658 : vector<4x256xf32>
    %c248_i32_220 = arith.constant 248 : i32
    %660 = tpu.dynamic_rotate %610 by %c248_i32_220 dim 1 : vector<4x256xf32>, i32 -> vector<4x256xf32>
    %661 = vector.broadcast %133 : vector<1x256xf32> to vector<4x256xf32>
    %662 = arith.mulf %660, %661 : vector<4x256xf32>
    %663 = vector.extract_strided_slice %619 {offsets = [0, 6], sizes = [4, 1], strides = [1, 1]} : vector<4x9xf32> to vector<4x1xf32>
    %664 = vector.broadcast %663 : vector<4x1xf32> to vector<4x256xf32>
    %665 = arith.mulf %662, %664 : vector<4x256xf32>
    %666 = arith.addf %659, %665 : vector<4x256xf32>
    %c247_i32_221 = arith.constant 247 : i32
    %667 = tpu.dynamic_rotate %610 by %c247_i32_221 dim 1 : vector<4x256xf32>, i32 -> vector<4x256xf32>
    %668 = vector.broadcast %155 : vector<1x256xf32> to vector<4x256xf32>
    %669 = arith.mulf %667, %668 : vector<4x256xf32>
    %670 = vector.extract_strided_slice %619 {offsets = [0, 7], sizes = [4, 1], strides = [1, 1]} : vector<4x9xf32> to vector<4x1xf32>
    %671 = vector.broadcast %670 : vector<4x1xf32> to vector<4x256xf32>
    %672 = arith.mulf %669, %671 : vector<4x256xf32>
    %673 = arith.addf %666, %672 : vector<4x256xf32>
    %c246_i32_222 = arith.constant 246 : i32
    %674 = tpu.dynamic_rotate %610 by %c246_i32_222 dim 1 : vector<4x256xf32>, i32 -> vector<4x256xf32>
    %675 = vector.broadcast %177 : vector<1x256xf32> to vector<4x256xf32>
    %676 = arith.mulf %674, %675 : vector<4x256xf32>
    %677 = vector.extract_strided_slice %619 {offsets = [0, 8], sizes = [4, 1], strides = [1, 1]} : vector<4x9xf32> to vector<4x1xf32>
    %678 = vector.broadcast %677 : vector<4x1xf32> to vector<4x256xf32>
    %679 = arith.mulf %676, %678 : vector<4x256xf32>
    %680 = arith.addf %673, %679 : vector<4x256xf32>
    %681 = vector.extract_strided_slice %363 {offsets = [0, 9], sizes = [4, 9], strides = [1, 1]} : vector<4x18xf32> to vector<4x9xf32>
    %682 = vector.extract_strided_slice %681 {offsets = [0, 4], sizes = [4, 1], strides = [1, 1]} : vector<4x9xf32> to vector<4x1xf32>
    %683 = vector.broadcast %682 : vector<4x1xf32> to vector<4x256xf32>
    %684 = arith.mulf %618, %683 : vector<4x256xf32>
    %685 = vector.broadcast %382 : vector<4x1xf32> to vector<4x256xf32>
    %686 = arith.addf %684, %685 : vector<4x256xf32>
    %c10_i32_223 = arith.constant 10 : i32
    %687 = tpu.dynamic_rotate %618 by %c10_i32_223 dim 1 : vector<4x256xf32>, i32 -> vector<4x256xf32>
    %688 = vector.broadcast %23 : vector<1x256xf32> to vector<4x256xf32>
    %689 = arith.mulf %687, %688 : vector<4x256xf32>
    %690 = vector.extract_strided_slice %681 {offsets = [0, 0], sizes = [4, 1], strides = [1, 1]} : vector<4x9xf32> to vector<4x1xf32>
    %691 = vector.broadcast %690 : vector<4x1xf32> to vector<4x256xf32>
    %692 = arith.mulf %689, %691 : vector<4x256xf32>
    %693 = arith.addf %686, %692 : vector<4x256xf32>
    %c9_i32_224 = arith.constant 9 : i32
    %694 = tpu.dynamic_rotate %618 by %c9_i32_224 dim 1 : vector<4x256xf32>, i32 -> vector<4x256xf32>
    %695 = vector.broadcast %45 : vector<1x256xf32> to vector<4x256xf32>
    %696 = arith.mulf %694, %695 : vector<4x256xf32>
    %697 = vector.extract_strided_slice %681 {offsets = [0, 1], sizes = [4, 1], strides = [1, 1]} : vector<4x9xf32> to vector<4x1xf32>
    %698 = vector.broadcast %697 : vector<4x1xf32> to vector<4x256xf32>
    %699 = arith.mulf %696, %698 : vector<4x256xf32>
    %700 = arith.addf %693, %699 : vector<4x256xf32>
    %c8_i32_225 = arith.constant 8 : i32
    %701 = tpu.dynamic_rotate %618 by %c8_i32_225 dim 1 : vector<4x256xf32>, i32 -> vector<4x256xf32>
    %702 = vector.broadcast %67 : vector<1x256xf32> to vector<4x256xf32>
    %703 = arith.mulf %701, %702 : vector<4x256xf32>
    %704 = vector.extract_strided_slice %681 {offsets = [0, 2], sizes = [4, 1], strides = [1, 1]} : vector<4x9xf32> to vector<4x1xf32>
    %705 = vector.broadcast %704 : vector<4x1xf32> to vector<4x256xf32>
    %706 = arith.mulf %703, %705 : vector<4x256xf32>
    %707 = arith.addf %700, %706 : vector<4x256xf32>
    %c1_i32_226 = arith.constant 1 : i32
    %708 = tpu.dynamic_rotate %618 by %c1_i32_226 dim 1 : vector<4x256xf32>, i32 -> vector<4x256xf32>
    %709 = vector.broadcast %89 : vector<1x256xf32> to vector<4x256xf32>
    %710 = arith.mulf %708, %709 : vector<4x256xf32>
    %711 = vector.extract_strided_slice %681 {offsets = [0, 3], sizes = [4, 1], strides = [1, 1]} : vector<4x9xf32> to vector<4x1xf32>
    %712 = vector.broadcast %711 : vector<4x1xf32> to vector<4x256xf32>
    %713 = arith.mulf %710, %712 : vector<4x256xf32>
    %714 = arith.addf %707, %713 : vector<4x256xf32>
    %c255_i32_227 = arith.constant 255 : i32
    %715 = tpu.dynamic_rotate %618 by %c255_i32_227 dim 1 : vector<4x256xf32>, i32 -> vector<4x256xf32>
    %716 = vector.broadcast %111 : vector<1x256xf32> to vector<4x256xf32>
    %717 = arith.mulf %715, %716 : vector<4x256xf32>
    %718 = vector.extract_strided_slice %681 {offsets = [0, 5], sizes = [4, 1], strides = [1, 1]} : vector<4x9xf32> to vector<4x1xf32>
    %719 = vector.broadcast %718 : vector<4x1xf32> to vector<4x256xf32>
    %720 = arith.mulf %717, %719 : vector<4x256xf32>
    %721 = arith.addf %714, %720 : vector<4x256xf32>
    %c248_i32_228 = arith.constant 248 : i32
    %722 = tpu.dynamic_rotate %618 by %c248_i32_228 dim 1 : vector<4x256xf32>, i32 -> vector<4x256xf32>
    %723 = vector.broadcast %133 : vector<1x256xf32> to vector<4x256xf32>
    %724 = arith.mulf %722, %723 : vector<4x256xf32>
    %725 = vector.extract_strided_slice %681 {offsets = [0, 6], sizes = [4, 1], strides = [1, 1]} : vector<4x9xf32> to vector<4x1xf32>
    %726 = vector.broadcast %725 : vector<4x1xf32> to vector<4x256xf32>
    %727 = arith.mulf %724, %726 : vector<4x256xf32>
    %728 = arith.addf %721, %727 : vector<4x256xf32>
    %c247_i32_229 = arith.constant 247 : i32
    %729 = tpu.dynamic_rotate %618 by %c247_i32_229 dim 1 : vector<4x256xf32>, i32 -> vector<4x256xf32>
    %730 = vector.broadcast %155 : vector<1x256xf32> to vector<4x256xf32>
    %731 = arith.mulf %729, %730 : vector<4x256xf32>
    %732 = vector.extract_strided_slice %681 {offsets = [0, 7], sizes = [4, 1], strides = [1, 1]} : vector<4x9xf32> to vector<4x1xf32>
    %733 = vector.broadcast %732 : vector<4x1xf32> to vector<4x256xf32>
    %734 = arith.mulf %731, %733 : vector<4x256xf32>
    %735 = arith.addf %728, %734 : vector<4x256xf32>
    %c246_i32_230 = arith.constant 246 : i32
    %736 = tpu.dynamic_rotate %618 by %c246_i32_230 dim 1 : vector<4x256xf32>, i32 -> vector<4x256xf32>
    %737 = vector.broadcast %177 : vector<1x256xf32> to vector<4x256xf32>
    %738 = arith.mulf %736, %737 : vector<4x256xf32>
    %739 = vector.extract_strided_slice %681 {offsets = [0, 8], sizes = [4, 1], strides = [1, 1]} : vector<4x9xf32> to vector<4x1xf32>
    %740 = vector.broadcast %739 : vector<4x1xf32> to vector<4x256xf32>
    %741 = arith.mulf %738, %740 : vector<4x256xf32>
    %742 = arith.addf %735, %741 : vector<4x256xf32>
    %c2 = arith.constant 2 : index
    %c0_231 = arith.constant 0 : index
    %c0_232 = arith.constant 0 : index
    %743 = vector.load %arg10[%c2, %c0_231, %c0_232] : memref<8x4x4xf32, #tpu.memory_space<vmem>>, vector<1x4x4xf32>
    %744 = vector.shape_cast %743 : vector<1x4x4xf32> to vector<4x4xf32>
    %cst_233 = arith.constant dense<0.000000e+00> : vector<4x256xf32>
    %745 = tpu.matmul %744, %680, %cst_233 {dimension_numbers = #tpu.dot_dimension_numbers<[1], [0], [0], [1], [0, 0, 1, 1], [], []>} : vector<4x4xf32>, vector<4x256xf32>, vector<4x256xf32> -> vector<4x256xf32>
    %746 = vector.broadcast %385 : vector<4x1xf32> to vector<4x256xf32>
    %747 = arith.addf %745, %746 : vector<4x256xf32>
    %c3 = arith.constant 3 : index
    %c0_234 = arith.constant 0 : index
    %c0_235 = arith.constant 0 : index
    %748 = vector.load %arg10[%c3, %c0_234, %c0_235] : memref<8x4x4xf32, #tpu.memory_space<vmem>>, vector<1x4x4xf32>
    %749 = vector.shape_cast %748 : vector<1x4x4xf32> to vector<4x4xf32>
    %cst_236 = arith.constant dense<0.000000e+00> : vector<4x256xf32>
    %750 = tpu.matmul %749, %742, %cst_236 {dimension_numbers = #tpu.dot_dimension_numbers<[1], [0], [0], [1], [0, 0, 1, 1], [], []>} : vector<4x4xf32>, vector<4x256xf32>, vector<4x256xf32> -> vector<4x256xf32>
    %751 = arith.addf %747, %750 : vector<4x256xf32>
    %c7 = arith.constant 7 : index
    %c0_237 = arith.constant 0 : index
    %c0_238 = arith.constant 0 : index
    %752 = vector.load %arg10[%c7, %c0_237, %c0_238] : memref<8x4x4xf32, #tpu.memory_space<vmem>>, vector<1x4x4xf32>
    %753 = vector.shape_cast %752 : vector<1x4x4xf32> to vector<4x4xf32>
    %cst_239 = arith.constant dense<0.000000e+00> : vector<4x256xf32>
    %754 = tpu.matmul %753, %751, %cst_239 {dimension_numbers = #tpu.dot_dimension_numbers<[1], [0], [0], [1], [0, 0, 1, 1], [], []>} : vector<4x4xf32>, vector<4x256xf32>, vector<4x256xf32> -> vector<4x256xf32>
    %755 = vector.broadcast %358 : vector<1x256xf32> to vector<4x256xf32>
    %756 = arith.mulf %754, %755 : vector<4x256xf32>
    %cst_240 = arith.constant dense<0.000000e+00> : vector<4xf32>
    %757 = vector.multi_reduction <add>, %756, %cst_240 [1] : vector<4x256xf32> to vector<4xf32>
    %758 = vector.shape_cast %757 : vector<4xf32> to vector<4x1xf32>
    %cst_241 = arith.constant 0.0069444445 : f32
    %759 = vector.broadcast %cst_241 : f32 to vector<4x1xf32>
    %760 = arith.mulf %758, %759 : vector<4x1xf32>
    %761 = arith.addf %760, %386 : vector<4x1xf32>
    %cst_242 = arith.constant dense<0.000000e+00> : vector<256xf32>
    %762 = vector.multi_reduction <add>, %751, %cst_242 [0] : vector<4x256xf32> to vector<256xf32>
    %763 = vector.shape_cast %762 : vector<256xf32> to vector<1x256xf32>
    %cst_243 = arith.constant 4.000000e+00 : f32
    %764 = vector.broadcast %cst_243 : f32 to vector<1x256xf32>
    %765 = arith.divf %763, %764 : vector<1x256xf32>
    %cst_244 = arith.constant dense<0xFF800000> : vector<256xf32>
    %766 = vector.multi_reduction <maximumf>, %751, %cst_244 [0] : vector<4x256xf32> to vector<256xf32>
    %767 = vector.shape_cast %766 : vector<256xf32> to vector<1x256xf32>
    %768 = tpu.concatenate %765, %767 in 0 : vector<1x256xf32>, vector<1x256xf32> -> vector<2x256xf32>
    %769 = vector.extract_strided_slice %768 {offsets = [0, 0], sizes = [1, 256], strides = [1, 1]} : vector<2x256xf32> to vector<1x256xf32>
    %c8 = arith.constant 8 : index
    %770 = memref.load %arg11[%c8] : memref<18xf32, #tpu.memory_space<smem>>
    %771 = vector.broadcast %770 : f32 to vector<1x256xf32>
    %772 = arith.mulf %769, %771 : vector<1x256xf32>
    %773 = vector.extract_strided_slice %768 {offsets = [1, 0], sizes = [1, 256], strides = [1, 1]} : vector<2x256xf32> to vector<1x256xf32>
    %c9 = arith.constant 9 : index
    %774 = memref.load %arg11[%c9] : memref<18xf32, #tpu.memory_space<smem>>
    %775 = vector.broadcast %774 : f32 to vector<1x256xf32>
    %776 = arith.mulf %773, %775 : vector<1x256xf32>
    %777 = arith.addf %772, %776 : vector<1x256xf32>
    %c50_i32 = arith.constant 50 : i32
    %778 = tpu.dynamic_rotate %768 by %c50_i32 dim 1 : vector<2x256xf32>, i32 -> vector<2x256xf32>
    %779 = vector.broadcast %199 : vector<1x256xf32> to vector<2x256xf32>
    %780 = arith.mulf %778, %779 : vector<2x256xf32>
    %781 = vector.extract_strided_slice %780 {offsets = [0, 0], sizes = [1, 256], strides = [1, 1]} : vector<2x256xf32> to vector<1x256xf32>
    %c0_245 = arith.constant 0 : index
    %782 = memref.load %arg11[%c0_245] : memref<18xf32, #tpu.memory_space<smem>>
    %783 = vector.broadcast %782 : f32 to vector<1x256xf32>
    %784 = arith.mulf %781, %783 : vector<1x256xf32>
    %785 = vector.extract_strided_slice %780 {offsets = [1, 0], sizes = [1, 256], strides = [1, 1]} : vector<2x256xf32> to vector<1x256xf32>
    %c1_246 = arith.constant 1 : index
    %786 = memref.load %arg11[%c1_246] : memref<18xf32, #tpu.memory_space<smem>>
    %787 = vector.broadcast %786 : f32 to vector<1x256xf32>
    %788 = arith.mulf %785, %787 : vector<1x256xf32>
    %789 = arith.addf %784, %788 : vector<1x256xf32>
    %790 = arith.addf %777, %789 : vector<1x256xf32>
    %c45_i32 = arith.constant 45 : i32
    %791 = tpu.dynamic_rotate %768 by %c45_i32 dim 1 : vector<2x256xf32>, i32 -> vector<2x256xf32>
    %792 = vector.broadcast %221 : vector<1x256xf32> to vector<2x256xf32>
    %793 = arith.mulf %791, %792 : vector<2x256xf32>
    %794 = vector.extract_strided_slice %793 {offsets = [0, 0], sizes = [1, 256], strides = [1, 1]} : vector<2x256xf32> to vector<1x256xf32>
    %c2_247 = arith.constant 2 : index
    %795 = memref.load %arg11[%c2_247] : memref<18xf32, #tpu.memory_space<smem>>
    %796 = vector.broadcast %795 : f32 to vector<1x256xf32>
    %797 = arith.mulf %794, %796 : vector<1x256xf32>
    %798 = vector.extract_strided_slice %793 {offsets = [1, 0], sizes = [1, 256], strides = [1, 1]} : vector<2x256xf32> to vector<1x256xf32>
    %c3_248 = arith.constant 3 : index
    %799 = memref.load %arg11[%c3_248] : memref<18xf32, #tpu.memory_space<smem>>
    %800 = vector.broadcast %799 : f32 to vector<1x256xf32>
    %801 = arith.mulf %798, %800 : vector<1x256xf32>
    %802 = arith.addf %797, %801 : vector<1x256xf32>
    %803 = arith.addf %790, %802 : vector<1x256xf32>
    %c40_i32 = arith.constant 40 : i32
    %804 = tpu.dynamic_rotate %768 by %c40_i32 dim 1 : vector<2x256xf32>, i32 -> vector<2x256xf32>
    %805 = vector.broadcast %243 : vector<1x256xf32> to vector<2x256xf32>
    %806 = arith.mulf %804, %805 : vector<2x256xf32>
    %807 = vector.extract_strided_slice %806 {offsets = [0, 0], sizes = [1, 256], strides = [1, 1]} : vector<2x256xf32> to vector<1x256xf32>
    %c4 = arith.constant 4 : index
    %808 = memref.load %arg11[%c4] : memref<18xf32, #tpu.memory_space<smem>>
    %809 = vector.broadcast %808 : f32 to vector<1x256xf32>
    %810 = arith.mulf %807, %809 : vector<1x256xf32>
    %811 = vector.extract_strided_slice %806 {offsets = [1, 0], sizes = [1, 256], strides = [1, 1]} : vector<2x256xf32> to vector<1x256xf32>
    %c5 = arith.constant 5 : index
    %812 = memref.load %arg11[%c5] : memref<18xf32, #tpu.memory_space<smem>>
    %813 = vector.broadcast %812 : f32 to vector<1x256xf32>
    %814 = arith.mulf %811, %813 : vector<1x256xf32>
    %815 = arith.addf %810, %814 : vector<1x256xf32>
    %816 = arith.addf %803, %815 : vector<1x256xf32>
    %c5_i32 = arith.constant 5 : i32
    %817 = tpu.dynamic_rotate %768 by %c5_i32 dim 1 : vector<2x256xf32>, i32 -> vector<2x256xf32>
    %818 = vector.broadcast %265 : vector<1x256xf32> to vector<2x256xf32>
    %819 = arith.mulf %817, %818 : vector<2x256xf32>
    %820 = vector.extract_strided_slice %819 {offsets = [0, 0], sizes = [1, 256], strides = [1, 1]} : vector<2x256xf32> to vector<1x256xf32>
    %c6 = arith.constant 6 : index
    %821 = memref.load %arg11[%c6] : memref<18xf32, #tpu.memory_space<smem>>
    %822 = vector.broadcast %821 : f32 to vector<1x256xf32>
    %823 = arith.mulf %820, %822 : vector<1x256xf32>
    %824 = vector.extract_strided_slice %819 {offsets = [1, 0], sizes = [1, 256], strides = [1, 1]} : vector<2x256xf32> to vector<1x256xf32>
    %c7_249 = arith.constant 7 : index
    %825 = memref.load %arg11[%c7_249] : memref<18xf32, #tpu.memory_space<smem>>
    %826 = vector.broadcast %825 : f32 to vector<1x256xf32>
    %827 = arith.mulf %824, %826 : vector<1x256xf32>
    %828 = arith.addf %823, %827 : vector<1x256xf32>
    %829 = arith.addf %816, %828 : vector<1x256xf32>
    %c251_i32 = arith.constant 251 : i32
    %830 = tpu.dynamic_rotate %768 by %c251_i32 dim 1 : vector<2x256xf32>, i32 -> vector<2x256xf32>
    %831 = vector.broadcast %287 : vector<1x256xf32> to vector<2x256xf32>
    %832 = arith.mulf %830, %831 : vector<2x256xf32>
    %833 = vector.extract_strided_slice %832 {offsets = [0, 0], sizes = [1, 256], strides = [1, 1]} : vector<2x256xf32> to vector<1x256xf32>
    %c10 = arith.constant 10 : index
    %834 = memref.load %arg11[%c10] : memref<18xf32, #tpu.memory_space<smem>>
    %835 = vector.broadcast %834 : f32 to vector<1x256xf32>
    %836 = arith.mulf %833, %835 : vector<1x256xf32>
    %837 = vector.extract_strided_slice %832 {offsets = [1, 0], sizes = [1, 256], strides = [1, 1]} : vector<2x256xf32> to vector<1x256xf32>
    %c11 = arith.constant 11 : index
    %838 = memref.load %arg11[%c11] : memref<18xf32, #tpu.memory_space<smem>>
    %839 = vector.broadcast %838 : f32 to vector<1x256xf32>
    %840 = arith.mulf %837, %839 : vector<1x256xf32>
    %841 = arith.addf %836, %840 : vector<1x256xf32>
    %842 = arith.addf %829, %841 : vector<1x256xf32>
    %c216_i32 = arith.constant 216 : i32
    %843 = tpu.dynamic_rotate %768 by %c216_i32 dim 1 : vector<2x256xf32>, i32 -> vector<2x256xf32>
    %844 = vector.broadcast %309 : vector<1x256xf32> to vector<2x256xf32>
    %845 = arith.mulf %843, %844 : vector<2x256xf32>
    %846 = vector.extract_strided_slice %845 {offsets = [0, 0], sizes = [1, 256], strides = [1, 1]} : vector<2x256xf32> to vector<1x256xf32>
    %c12 = arith.constant 12 : index
    %847 = memref.load %arg11[%c12] : memref<18xf32, #tpu.memory_space<smem>>
    %848 = vector.broadcast %847 : f32 to vector<1x256xf32>
    %849 = arith.mulf %846, %848 : vector<1x256xf32>
    %850 = vector.extract_strided_slice %845 {offsets = [1, 0], sizes = [1, 256], strides = [1, 1]} : vector<2x256xf32> to vector<1x256xf32>
    %c13 = arith.constant 13 : index
    %851 = memref.load %arg11[%c13] : memref<18xf32, #tpu.memory_space<smem>>
    %852 = vector.broadcast %851 : f32 to vector<1x256xf32>
    %853 = arith.mulf %850, %852 : vector<1x256xf32>
    %854 = arith.addf %849, %853 : vector<1x256xf32>
    %855 = arith.addf %842, %854 : vector<1x256xf32>
    %c211_i32 = arith.constant 211 : i32
    %856 = tpu.dynamic_rotate %768 by %c211_i32 dim 1 : vector<2x256xf32>, i32 -> vector<2x256xf32>
    %857 = vector.broadcast %331 : vector<1x256xf32> to vector<2x256xf32>
    %858 = arith.mulf %856, %857 : vector<2x256xf32>
    %859 = vector.extract_strided_slice %858 {offsets = [0, 0], sizes = [1, 256], strides = [1, 1]} : vector<2x256xf32> to vector<1x256xf32>
    %c14 = arith.constant 14 : index
    %860 = memref.load %arg11[%c14] : memref<18xf32, #tpu.memory_space<smem>>
    %861 = vector.broadcast %860 : f32 to vector<1x256xf32>
    %862 = arith.mulf %859, %861 : vector<1x256xf32>
    %863 = vector.extract_strided_slice %858 {offsets = [1, 0], sizes = [1, 256], strides = [1, 1]} : vector<2x256xf32> to vector<1x256xf32>
    %c15 = arith.constant 15 : index
    %864 = memref.load %arg11[%c15] : memref<18xf32, #tpu.memory_space<smem>>
    %865 = vector.broadcast %864 : f32 to vector<1x256xf32>
    %866 = arith.mulf %863, %865 : vector<1x256xf32>
    %867 = arith.addf %862, %866 : vector<1x256xf32>
    %868 = arith.addf %855, %867 : vector<1x256xf32>
    %c206_i32 = arith.constant 206 : i32
    %869 = tpu.dynamic_rotate %768 by %c206_i32 dim 1 : vector<2x256xf32>, i32 -> vector<2x256xf32>
    %870 = vector.broadcast %353 : vector<1x256xf32> to vector<2x256xf32>
    %871 = arith.mulf %869, %870 : vector<2x256xf32>
    %872 = vector.extract_strided_slice %871 {offsets = [0, 0], sizes = [1, 256], strides = [1, 1]} : vector<2x256xf32> to vector<1x256xf32>
    %c16 = arith.constant 16 : index
    %873 = memref.load %arg11[%c16] : memref<18xf32, #tpu.memory_space<smem>>
    %874 = vector.broadcast %873 : f32 to vector<1x256xf32>
    %875 = arith.mulf %872, %874 : vector<1x256xf32>
    %876 = vector.extract_strided_slice %871 {offsets = [1, 0], sizes = [1, 256], strides = [1, 1]} : vector<2x256xf32> to vector<1x256xf32>
    %c17 = arith.constant 17 : index
    %877 = memref.load %arg11[%c17] : memref<18xf32, #tpu.memory_space<smem>>
    %878 = vector.broadcast %877 : f32 to vector<1x256xf32>
    %879 = arith.mulf %876, %878 : vector<1x256xf32>
    %880 = arith.addf %875, %879 : vector<1x256xf32>
    %881 = arith.addf %868, %880 : vector<1x256xf32>
    %882 = vector.broadcast %761 : vector<4x1xf32> to vector<4x256xf32>
    %883 = vector.broadcast %881 : vector<1x256xf32> to vector<4x256xf32>
    %884 = arith.mulf %882, %883 : vector<4x256xf32>
    %885 = arith.negf %884 : vector<4x256xf32>
    %886 = math.exp %885 : vector<4x256xf32>
    %cst_250 = arith.constant 1.000000e+00 : f32
    %887 = vector.broadcast %cst_250 : f32 to vector<4x256xf32>
    %888 = arith.addf %887, %886 : vector<4x256xf32>
    %889 = arith.divf %887, %888 : vector<4x256xf32>
    %890 = vector.extract_strided_slice %364 {offsets = [0, 0], sizes = [4, 9], strides = [1, 1]} : vector<4x18xf32> to vector<4x9xf32>
    %891 = vector.extract_strided_slice %890 {offsets = [0, 4], sizes = [4, 1], strides = [1, 1]} : vector<4x9xf32> to vector<4x1xf32>
    %892 = vector.broadcast %891 : vector<4x1xf32> to vector<4x256xf32>
    %893 = arith.mulf %889, %892 : vector<4x256xf32>
    %894 = vector.broadcast %387 : vector<4x1xf32> to vector<4x256xf32>
    %895 = arith.addf %893, %894 : vector<4x256xf32>
    %c10_i32_251 = arith.constant 10 : i32
    %896 = tpu.dynamic_rotate %889 by %c10_i32_251 dim 1 : vector<4x256xf32>, i32 -> vector<4x256xf32>
    %897 = vector.broadcast %23 : vector<1x256xf32> to vector<4x256xf32>
    %898 = arith.mulf %896, %897 : vector<4x256xf32>
    %899 = vector.extract_strided_slice %890 {offsets = [0, 0], sizes = [4, 1], strides = [1, 1]} : vector<4x9xf32> to vector<4x1xf32>
    %900 = vector.broadcast %899 : vector<4x1xf32> to vector<4x256xf32>
    %901 = arith.mulf %898, %900 : vector<4x256xf32>
    %902 = arith.addf %895, %901 : vector<4x256xf32>
    %c9_i32_252 = arith.constant 9 : i32
    %903 = tpu.dynamic_rotate %889 by %c9_i32_252 dim 1 : vector<4x256xf32>, i32 -> vector<4x256xf32>
    %904 = vector.broadcast %45 : vector<1x256xf32> to vector<4x256xf32>
    %905 = arith.mulf %903, %904 : vector<4x256xf32>
    %906 = vector.extract_strided_slice %890 {offsets = [0, 1], sizes = [4, 1], strides = [1, 1]} : vector<4x9xf32> to vector<4x1xf32>
    %907 = vector.broadcast %906 : vector<4x1xf32> to vector<4x256xf32>
    %908 = arith.mulf %905, %907 : vector<4x256xf32>
    %909 = arith.addf %902, %908 : vector<4x256xf32>
    %c8_i32_253 = arith.constant 8 : i32
    %910 = tpu.dynamic_rotate %889 by %c8_i32_253 dim 1 : vector<4x256xf32>, i32 -> vector<4x256xf32>
    %911 = vector.broadcast %67 : vector<1x256xf32> to vector<4x256xf32>
    %912 = arith.mulf %910, %911 : vector<4x256xf32>
    %913 = vector.extract_strided_slice %890 {offsets = [0, 2], sizes = [4, 1], strides = [1, 1]} : vector<4x9xf32> to vector<4x1xf32>
    %914 = vector.broadcast %913 : vector<4x1xf32> to vector<4x256xf32>
    %915 = arith.mulf %912, %914 : vector<4x256xf32>
    %916 = arith.addf %909, %915 : vector<4x256xf32>
    %c1_i32_254 = arith.constant 1 : i32
    %917 = tpu.dynamic_rotate %889 by %c1_i32_254 dim 1 : vector<4x256xf32>, i32 -> vector<4x256xf32>
    %918 = vector.broadcast %89 : vector<1x256xf32> to vector<4x256xf32>
    %919 = arith.mulf %917, %918 : vector<4x256xf32>
    %920 = vector.extract_strided_slice %890 {offsets = [0, 3], sizes = [4, 1], strides = [1, 1]} : vector<4x9xf32> to vector<4x1xf32>
    %921 = vector.broadcast %920 : vector<4x1xf32> to vector<4x256xf32>
    %922 = arith.mulf %919, %921 : vector<4x256xf32>
    %923 = arith.addf %916, %922 : vector<4x256xf32>
    %c255_i32_255 = arith.constant 255 : i32
    %924 = tpu.dynamic_rotate %889 by %c255_i32_255 dim 1 : vector<4x256xf32>, i32 -> vector<4x256xf32>
    %925 = vector.broadcast %111 : vector<1x256xf32> to vector<4x256xf32>
    %926 = arith.mulf %924, %925 : vector<4x256xf32>
    %927 = vector.extract_strided_slice %890 {offsets = [0, 5], sizes = [4, 1], strides = [1, 1]} : vector<4x9xf32> to vector<4x1xf32>
    %928 = vector.broadcast %927 : vector<4x1xf32> to vector<4x256xf32>
    %929 = arith.mulf %926, %928 : vector<4x256xf32>
    %930 = arith.addf %923, %929 : vector<4x256xf32>
    %c248_i32_256 = arith.constant 248 : i32
    %931 = tpu.dynamic_rotate %889 by %c248_i32_256 dim 1 : vector<4x256xf32>, i32 -> vector<4x256xf32>
    %932 = vector.broadcast %133 : vector<1x256xf32> to vector<4x256xf32>
    %933 = arith.mulf %931, %932 : vector<4x256xf32>
    %934 = vector.extract_strided_slice %890 {offsets = [0, 6], sizes = [4, 1], strides = [1, 1]} : vector<4x9xf32> to vector<4x1xf32>
    %935 = vector.broadcast %934 : vector<4x1xf32> to vector<4x256xf32>
    %936 = arith.mulf %933, %935 : vector<4x256xf32>
    %937 = arith.addf %930, %936 : vector<4x256xf32>
    %c247_i32_257 = arith.constant 247 : i32
    %938 = tpu.dynamic_rotate %889 by %c247_i32_257 dim 1 : vector<4x256xf32>, i32 -> vector<4x256xf32>
    %939 = vector.broadcast %155 : vector<1x256xf32> to vector<4x256xf32>
    %940 = arith.mulf %938, %939 : vector<4x256xf32>
    %941 = vector.extract_strided_slice %890 {offsets = [0, 7], sizes = [4, 1], strides = [1, 1]} : vector<4x9xf32> to vector<4x1xf32>
    %942 = vector.broadcast %941 : vector<4x1xf32> to vector<4x256xf32>
    %943 = arith.mulf %940, %942 : vector<4x256xf32>
    %944 = arith.addf %937, %943 : vector<4x256xf32>
    %c246_i32_258 = arith.constant 246 : i32
    %945 = tpu.dynamic_rotate %889 by %c246_i32_258 dim 1 : vector<4x256xf32>, i32 -> vector<4x256xf32>
    %946 = vector.broadcast %177 : vector<1x256xf32> to vector<4x256xf32>
    %947 = arith.mulf %945, %946 : vector<4x256xf32>
    %948 = vector.extract_strided_slice %890 {offsets = [0, 8], sizes = [4, 1], strides = [1, 1]} : vector<4x9xf32> to vector<4x1xf32>
    %949 = vector.broadcast %948 : vector<4x1xf32> to vector<4x256xf32>
    %950 = arith.mulf %947, %949 : vector<4x256xf32>
    %951 = arith.addf %944, %950 : vector<4x256xf32>
    %c4_259 = arith.constant 4 : index
    %c0_260 = arith.constant 0 : index
    %c0_261 = arith.constant 0 : index
    %952 = vector.load %arg10[%c4_259, %c0_260, %c0_261] : memref<8x4x4xf32, #tpu.memory_space<vmem>>, vector<1x4x4xf32>
    %953 = vector.shape_cast %952 : vector<1x4x4xf32> to vector<4x4xf32>
    %cst_262 = arith.constant dense<0.000000e+00> : vector<4x256xf32>
    %954 = tpu.matmul %953, %951, %cst_262 {dimension_numbers = #tpu.dot_dimension_numbers<[1], [0], [0], [1], [0, 0, 1, 1], [], []>} : vector<4x4xf32>, vector<4x256xf32>, vector<4x256xf32> -> vector<4x256xf32>
    %955 = vector.broadcast %373 : vector<4x1xf32> to vector<4x256xf32>
    %956 = arith.addf %954, %955 : vector<4x256xf32>
    %957 = arith.mulf %512, %956 : vector<4x256xf32>
    %958 = vector.broadcast %374 : vector<4x1xf32> to vector<4x256xf32>
    %959 = arith.mulf %957, %958 : vector<4x256xf32>
    %c5_263 = arith.constant 5 : index
    %c0_264 = arith.constant 0 : index
    %c0_265 = arith.constant 0 : index
    %960 = vector.load %arg10[%c5_263, %c0_264, %c0_265] : memref<8x4x4xf32, #tpu.memory_space<vmem>>, vector<1x4x4xf32>
    %961 = vector.shape_cast %960 : vector<1x4x4xf32> to vector<4x4xf32>
    %cst_266 = arith.constant dense<0.000000e+00> : vector<4x256xf32>
    %962 = tpu.matmul %961, %951, %cst_266 {dimension_numbers = #tpu.dot_dimension_numbers<[1], [0], [0], [1], [0, 0, 1, 1], [], []>} : vector<4x4xf32>, vector<4x256xf32>, vector<4x256xf32> -> vector<4x256xf32>
    %963 = vector.broadcast %383 : vector<4x1xf32> to vector<4x256xf32>
    %964 = arith.addf %962, %963 : vector<4x256xf32>
    %965 = arith.mulf %579, %964 : vector<4x256xf32>
    %966 = vector.broadcast %384 : vector<4x1xf32> to vector<4x256xf32>
    %967 = arith.mulf %965, %966 : vector<4x256xf32>
    %968 = arith.mulf %959, %967 : vector<4x256xf32>
    %cst_267 = arith.constant dense<0.000000e+00> : vector<256xf32>
    %969 = vector.multi_reduction <add>, %968, %cst_267 [0] : vector<4x256xf32> to vector<256xf32>
    %970 = vector.shape_cast %969 : vector<256xf32> to vector<1x256xf32>
    %cst_268 = arith.constant 4.000000e+00 : f32
    %971 = vector.broadcast %cst_268 : f32 to vector<1x256xf32>
    %972 = arith.divf %970, %971 : vector<1x256xf32>
    %973 = vector.broadcast %972 : vector<1x256xf32> to vector<4x256xf32>
    %974 = arith.subf %968, %973 : vector<4x256xf32>
    %975 = arith.mulf %974, %974 : vector<4x256xf32>
    %cst_269 = arith.constant dense<0.000000e+00> : vector<256xf32>
    %976 = vector.multi_reduction <add>, %975, %cst_269 [0] : vector<4x256xf32> to vector<256xf32>
    %977 = vector.shape_cast %976 : vector<256xf32> to vector<1x256xf32>
    %cst_270 = arith.constant 4.000000e+00 : f32
    %978 = vector.broadcast %cst_270 : f32 to vector<1x256xf32>
    %979 = arith.divf %977, %978 : vector<1x256xf32>
    %980 = vector.broadcast %972 : vector<1x256xf32> to vector<4x256xf32>
    %981 = arith.subf %968, %980 : vector<4x256xf32>
    %cst_271 = arith.constant 9.99999997E-7 : f32
    %982 = vector.broadcast %cst_271 : f32 to vector<1x256xf32>
    %983 = arith.addf %979, %982 : vector<1x256xf32>
    %984 = math.rsqrt %983 : vector<1x256xf32>
    %985 = vector.broadcast %984 : vector<1x256xf32> to vector<4x256xf32>
    %986 = arith.mulf %981, %985 : vector<4x256xf32>
    %987 = vector.broadcast %388 : vector<4x1xf32> to vector<4x256xf32>
    %988 = arith.mulf %986, %987 : vector<4x256xf32>
    %989 = vector.broadcast %389 : vector<4x1xf32> to vector<4x256xf32>
    %990 = arith.addf %988, %989 : vector<4x256xf32>
    %c6_272 = arith.constant 6 : index
    %c0_273 = arith.constant 0 : index
    %c0_274 = arith.constant 0 : index
    %991 = vector.load %arg10[%c6_272, %c0_273, %c0_274] : memref<8x4x4xf32, #tpu.memory_space<vmem>>, vector<1x4x4xf32>
    %992 = vector.shape_cast %991 : vector<1x4x4xf32> to vector<4x4xf32>
    %993 = vector.extract_strided_slice %364 {offsets = [0, 9], sizes = [4, 9], strides = [1, 1]} : vector<4x18xf32> to vector<4x9xf32>
    %994 = vector.extract_strided_slice %993 {offsets = [0, 4], sizes = [4, 1], strides = [1, 1]} : vector<4x9xf32> to vector<4x1xf32>
    %995 = vector.broadcast %994 : vector<4x1xf32> to vector<4x256xf32>
    %996 = arith.mulf %990, %995 : vector<4x256xf32>
    %997 = vector.broadcast %390 : vector<4x1xf32> to vector<4x256xf32>
    %998 = arith.addf %996, %997 : vector<4x256xf32>
    %c10_i32_275 = arith.constant 10 : i32
    %999 = tpu.dynamic_rotate %990 by %c10_i32_275 dim 1 : vector<4x256xf32>, i32 -> vector<4x256xf32>
    %1000 = vector.broadcast %23 : vector<1x256xf32> to vector<4x256xf32>
    %1001 = arith.mulf %999, %1000 : vector<4x256xf32>
    %1002 = vector.extract_strided_slice %993 {offsets = [0, 0], sizes = [4, 1], strides = [1, 1]} : vector<4x9xf32> to vector<4x1xf32>
    %1003 = vector.broadcast %1002 : vector<4x1xf32> to vector<4x256xf32>
    %1004 = arith.mulf %1001, %1003 : vector<4x256xf32>
    %1005 = arith.addf %998, %1004 : vector<4x256xf32>
    %c9_i32_276 = arith.constant 9 : i32
    %1006 = tpu.dynamic_rotate %990 by %c9_i32_276 dim 1 : vector<4x256xf32>, i32 -> vector<4x256xf32>
    %1007 = vector.broadcast %45 : vector<1x256xf32> to vector<4x256xf32>
    %1008 = arith.mulf %1006, %1007 : vector<4x256xf32>
    %1009 = vector.extract_strided_slice %993 {offsets = [0, 1], sizes = [4, 1], strides = [1, 1]} : vector<4x9xf32> to vector<4x1xf32>
    %1010 = vector.broadcast %1009 : vector<4x1xf32> to vector<4x256xf32>
    %1011 = arith.mulf %1008, %1010 : vector<4x256xf32>
    %1012 = arith.addf %1005, %1011 : vector<4x256xf32>
    %c8_i32_277 = arith.constant 8 : i32
    %1013 = tpu.dynamic_rotate %990 by %c8_i32_277 dim 1 : vector<4x256xf32>, i32 -> vector<4x256xf32>
    %1014 = vector.broadcast %67 : vector<1x256xf32> to vector<4x256xf32>
    %1015 = arith.mulf %1013, %1014 : vector<4x256xf32>
    %1016 = vector.extract_strided_slice %993 {offsets = [0, 2], sizes = [4, 1], strides = [1, 1]} : vector<4x9xf32> to vector<4x1xf32>
    %1017 = vector.broadcast %1016 : vector<4x1xf32> to vector<4x256xf32>
    %1018 = arith.mulf %1015, %1017 : vector<4x256xf32>
    %1019 = arith.addf %1012, %1018 : vector<4x256xf32>
    %c1_i32_278 = arith.constant 1 : i32
    %1020 = tpu.dynamic_rotate %990 by %c1_i32_278 dim 1 : vector<4x256xf32>, i32 -> vector<4x256xf32>
    %1021 = vector.broadcast %89 : vector<1x256xf32> to vector<4x256xf32>
    %1022 = arith.mulf %1020, %1021 : vector<4x256xf32>
    %1023 = vector.extract_strided_slice %993 {offsets = [0, 3], sizes = [4, 1], strides = [1, 1]} : vector<4x9xf32> to vector<4x1xf32>
    %1024 = vector.broadcast %1023 : vector<4x1xf32> to vector<4x256xf32>
    %1025 = arith.mulf %1022, %1024 : vector<4x256xf32>
    %1026 = arith.addf %1019, %1025 : vector<4x256xf32>
    %c255_i32_279 = arith.constant 255 : i32
    %1027 = tpu.dynamic_rotate %990 by %c255_i32_279 dim 1 : vector<4x256xf32>, i32 -> vector<4x256xf32>
    %1028 = vector.broadcast %111 : vector<1x256xf32> to vector<4x256xf32>
    %1029 = arith.mulf %1027, %1028 : vector<4x256xf32>
    %1030 = vector.extract_strided_slice %993 {offsets = [0, 5], sizes = [4, 1], strides = [1, 1]} : vector<4x9xf32> to vector<4x1xf32>
    %1031 = vector.broadcast %1030 : vector<4x1xf32> to vector<4x256xf32>
    %1032 = arith.mulf %1029, %1031 : vector<4x256xf32>
    %1033 = arith.addf %1026, %1032 : vector<4x256xf32>
    %c248_i32_280 = arith.constant 248 : i32
    %1034 = tpu.dynamic_rotate %990 by %c248_i32_280 dim 1 : vector<4x256xf32>, i32 -> vector<4x256xf32>
    %1035 = vector.broadcast %133 : vector<1x256xf32> to vector<4x256xf32>
    %1036 = arith.mulf %1034, %1035 : vector<4x256xf32>
    %1037 = vector.extract_strided_slice %993 {offsets = [0, 6], sizes = [4, 1], strides = [1, 1]} : vector<4x9xf32> to vector<4x1xf32>
    %1038 = vector.broadcast %1037 : vector<4x1xf32> to vector<4x256xf32>
    %1039 = arith.mulf %1036, %1038 : vector<4x256xf32>
    %1040 = arith.addf %1033, %1039 : vector<4x256xf32>
    %c247_i32_281 = arith.constant 247 : i32
    %1041 = tpu.dynamic_rotate %990 by %c247_i32_281 dim 1 : vector<4x256xf32>, i32 -> vector<4x256xf32>
    %1042 = vector.broadcast %155 : vector<1x256xf32> to vector<4x256xf32>
    %1043 = arith.mulf %1041, %1042 : vector<4x256xf32>
    %1044 = vector.extract_strided_slice %993 {offsets = [0, 7], sizes = [4, 1], strides = [1, 1]} : vector<4x9xf32> to vector<4x1xf32>
    %1045 = vector.broadcast %1044 : vector<4x1xf32> to vector<4x256xf32>
    %1046 = arith.mulf %1043, %1045 : vector<4x256xf32>
    %1047 = arith.addf %1040, %1046 : vector<4x256xf32>
    %c246_i32_282 = arith.constant 246 : i32
    %1048 = tpu.dynamic_rotate %990 by %c246_i32_282 dim 1 : vector<4x256xf32>, i32 -> vector<4x256xf32>
    %1049 = vector.broadcast %177 : vector<1x256xf32> to vector<4x256xf32>
    %1050 = arith.mulf %1048, %1049 : vector<4x256xf32>
    %1051 = vector.extract_strided_slice %993 {offsets = [0, 8], sizes = [4, 1], strides = [1, 1]} : vector<4x9xf32> to vector<4x1xf32>
    %1052 = vector.broadcast %1051 : vector<4x1xf32> to vector<4x256xf32>
    %1053 = arith.mulf %1050, %1052 : vector<4x256xf32>
    %1054 = arith.addf %1047, %1053 : vector<4x256xf32>
    %cst_283 = arith.constant dense<0.000000e+00> : vector<4x256xf32>
    %1055 = tpu.matmul %992, %1054, %cst_283 {dimension_numbers = #tpu.dot_dimension_numbers<[1], [0], [0], [1], [0, 0, 1, 1], [], []>} : vector<4x4xf32>, vector<4x256xf32>, vector<4x256xf32> -> vector<4x256xf32>
    %1056 = vector.broadcast %391 : vector<4x1xf32> to vector<4x256xf32>
    %1057 = arith.addf %1055, %1056 : vector<4x256xf32>
    %1058 = vector.broadcast %392 : vector<4x1xf32> to vector<4x256xf32>
    %1059 = arith.mulf %1057, %1058 : vector<4x256xf32>
    %1060 = arith.addf %959, %1059 : vector<4x256xf32>
    %c0_284 = arith.constant 0 : index
    %c0_285 = arith.constant 0 : index
    %c0_286 = arith.constant 0 : index
    %1061 = vector.load %arg12[%c0_284, %c0_285, %c0_286] : memref<1x4x256xf32, #tpu.memory_space<vmem>>, vector<1x4x256xf32>
    %1062 = vector.shape_cast %1061 : vector<1x4x256xf32> to vector<4x256xf32>
    %1063 = vector.shape_cast %1060 : vector<4x256xf32> to vector<1x4x256xf32>
    tpu.vector_store %arg12[%c0_284, %c0_285, %c0_286], %1063 {strides = array<i32>} : memref<1x4x256xf32, #tpu.memory_space<vmem>>, vector<1x4x256xf32>,
    %1064 = vector.broadcast %393 : vector<4x1xf32> to vector<4x256xf32>
    %1065 = arith.mulf %1057, %1064 : vector<4x256xf32>
    %1066 = arith.addf %967, %1065 : vector<4x256xf32>
    %c0_287 = arith.constant 0 : index
    %c0_288 = arith.constant 0 : index
    %c0_289 = arith.constant 0 : index
    %1067 = vector.load %arg13[%c0_287, %c0_288, %c0_289] : memref<1x4x256xf32, #tpu.memory_space<vmem>>, vector<1x4x256xf32>
    %1068 = vector.shape_cast %1067 : vector<1x4x256xf32> to vector<4x256xf32>
    %1069 = vector.shape_cast %1066 : vector<4x256xf32> to vector<1x4x256xf32>
    tpu.vector_store %arg13[%c0_287, %c0_288, %c0_289], %1069 {strides = array<i32>} : memref<1x4x256xf32, #tpu.memory_space<vmem>>, vector<1x4x256xf32>,
    return
  }
  func.func @transform_0(%arg0: i32) -> (i32, i32, i32) {
    %c0_i32 = arith.constant 0 : i32
    %c0_i32_0 = arith.constant 0 : i32
    %c0_i32_1 = arith.constant 0 : i32
    return %arg0, %c0_i32, %c0_i32_0 : i32, i32, i32
  }
  func.func @transform_1(%arg0: i32) -> (i32, i32, i32) {
    %c0_i32 = arith.constant 0 : i32
    %c0_i32_0 = arith.constant 0 : i32
    %c0_i32_1 = arith.constant 0 : i32
    return %arg0, %c0_i32, %c0_i32_0 : i32, i32, i32
  }
  func.func @transform_2(%arg0: i32) -> (i32, i32) {
    %c0_i32 = arith.constant 0 : i32
    %c0_i32_0 = arith.constant 0 : i32
    %c0_i32_1 = arith.constant 0 : i32
    return %c0_i32, %c0_i32_0 : i32, i32
  }
  func.func @transform_3(%arg0: i32) -> (i32, i32) {
    %c0_i32 = arith.constant 0 : i32
    %c0_i32_0 = arith.constant 0 : i32
    %c0_i32_1 = arith.constant 0 : i32
    return %c0_i32, %c0_i32_0 : i32, i32
  }
  func.func @transform_4(%arg0: i32) -> (i32, i32) {
    %c0_i32 = arith.constant 0 : i32
    %c0_i32_0 = arith.constant 0 : i32
    %c0_i32_1 = arith.constant 0 : i32
    return %c0_i32, %c0_i32_0 : i32, i32
  }
  func.func @transform_5(%arg0: i32) -> (i32, i32) {
    %c0_i32 = arith.constant 0 : i32
    %c0_i32_0 = arith.constant 0 : i32
    %c0_i32_1 = arith.constant 0 : i32
    return %c0_i32, %c0_i32_0 : i32, i32
  }
  func.func @transform_6(%arg0: i32) -> (i32, i32) {
    %c0_i32 = arith.constant 0 : i32
    %c0_i32_0 = arith.constant 0 : i32
    %c0_i32_1 = arith.constant 0 : i32
    return %c0_i32, %c0_i32_0 : i32, i32
  }
  func.func @transform_7(%arg0: i32) -> (i32, i32) {
    %c0_i32 = arith.constant 0 : i32
    %c0_i32_0 = arith.constant 0 : i32
    %c0_i32_1 = arith.constant 0 : i32
    return %c0_i32, %c0_i32_0 : i32, i32
  }
  func.func @transform_8(%arg0: i32) -> (i32, i32) {
    %c0_i32 = arith.constant 0 : i32
    %c0_i32_0 = arith.constant 0 : i32
    %c0_i32_1 = arith.constant 0 : i32
    return %c0_i32, %c0_i32_0 : i32, i32
  }
  func.func @transform_9(%arg0: i32) -> (i32, i32, i32) {
    %c0_i32 = arith.constant 0 : i32
    %c0_i32_0 = arith.constant 0 : i32
    %c0_i32_1 = arith.constant 0 : i32
    %c0_i32_2 = arith.constant 0 : i32
    return %c0_i32, %c0_i32_0, %c0_i32_1 : i32, i32, i32
  }
  func.func @transform_10(%arg0: i32) -> i32 {
    %c0_i32 = arith.constant 0 : i32
    %c0_i32_0 = arith.constant 0 : i32
    return %c0_i32 : i32
  }
  func.func @transform_11(%arg0: i32) -> (i32, i32, i32) {
    %c0_i32 = arith.constant 0 : i32
    %c0_i32_0 = arith.constant 0 : i32
    %c0_i32_1 = arith.constant 0 : i32
    return %arg0, %c0_i32, %c0_i32_0 : i32, i32, i32
  }
  func.func @transform_12(%arg0: i32) -> (i32, i32, i32) {
    %c0_i32 = arith.constant 0 : i32
    %c0_i32_0 = arith.constant 0 : i32
    %c0_i32_1 = arith.constant 0 : i32
    return %arg0, %c0_i32, %c0_i32_0 : i32, i32, i32
  }
}

</mosaic_0001>

<llo_original>
// kernel: reverse.0
$region0: #{reverse.0}
  %s0 = inlined_call_operand.vmem [shape: f32[2,4,16,7], index: 0, kind: input, shape index: {}]
  %s1 = inlined_call_operand.vmem [shape: f32[2,4,16,7], index: 1, kind: output, shape index: {}]
  $region1: #{reverse.0} parent=0
    #allocation0 [shape = 'u8[65536]{0}', space=vmem, size = 0x10000, scoped, tag = 'operand span for operand 0']
    #allocation1 [shape = 'u8[32768]{0}', space=vmem, size = 0x8000, scoped, tag = 'operand span for operand 1']
    %s2 = scalar_lea.vmem [#allocation0], 8
    // Predicated region
    $region2: #{reverse.0} parent=1 // pred_check
      _
    $region3: #{reverse.0} parent=1 // pred_check_branch
      %4 = sbr.rel (0) target = $region5
    $region4: #{reverse.0} parent=1 // pred_region
      // Predicated region
      $region6: #{reverse.0} parent=4 // pred_check
        _
      $region7: #{reverse.0} parent=4 // pred_check_branch
        %6 = sbr.rel (0) target = $region9
      $region8: #{reverse.0} parent=4 // pred_region
        // Predicated region
        $region21: #{reverse.0} parent=8 // pred_check
          _
        $region22: #{reverse.0} parent=8 // pred_check_branch
          %36 = sbr.rel (0) target = $region24
        $region23: #{reverse.0} parent=8 // pred_region
          loop: start=0, step=1, limit=1
          $region25: #{reverse.0} parent=23 // loop_pre_header
            _
          $region26: #{reverse.0} parent=23 // loop_header
            %s38 = sphi 0, %s42
            %p39 = scmp.ge.s32.totalorder %s38, 1
            %s43 = sphi %s0, %s0
            %s44 = sphi %s2, %s2
          $region27: #{reverse.0} parent=23 // loop_header_branch
            %41 = sbr.rel (%p39) target = $region31
          $region28: #{reverse.0} parent=23 // loop_body
            %v45 = vld [vmem:[%s43] sm:$0xff]
            %46 = vst [vmem:[%s44] sm:$0xff] %v45
            %v47 = vld [vmem:[%s43 + $0x8] sm:$0xff]
            %48 = vst [vmem:[%s44 + $0x10] sm:$0xff] %v47
            %v49 = vld [vmem:[%s43 + $0x10] sm:$0xff]
            %50 = vst [vmem:[%s44 + $0x20] sm:$0xff] %v49
            %v51 = vld [vmem:[%s43 + $0x18] sm:$0xff]
            %52 = vst [vmem:[%s44 + $0x30] sm:$0xff] %v51
            %v53 = vld [vmem:[%s43 + $0x20] sm:$0xff]
            %54 = vst [vmem:[%s44 + $0x40] sm:$0xff] %v53
            %v55 = vld [vmem:[%s43 + $0x28] sm:$0xff]
            %56 = vst [vmem:[%s44 + $0x50] sm:$0xff] %v55
            %v57 = vld [vmem:[%s43 + $0x30] sm:$0xff]
            %58 = vst [vmem:[%s44 + $0x60] sm:$0xff] %v57
            %v59 = vld [vmem:[%s43 + $0x38] sm:$0xff]
            %60 = vst [vmem:[%s44 + $0x70] sm:$0xff] %v59
          $region29: #{reverse.0} parent=23 // loop_footer
            %s42 = sadd.s32 1, %s38
          $region30: #{reverse.0} parent=23 // loop_footer_branch
            %37 = sbr.rel target = $region26
          $region31: #{reverse.0} parent=23 // loop_exit
            _
        $region24: #{reverse.0} parent=8 // pred_fallthru
          _
        // Predicated region
        $region32: #{reverse.0} parent=8 // pred_check
          _
        $region33: #{reverse.0} parent=8 // pred_check_branch
          %62 = sbr.rel target = $region35
        $region34: #{reverse.0} parent=8 // pred_region
          _
        $region35: #{reverse.0} parent=8 // pred_fallthru
          _
      $region9: #{reverse.0} parent=4 // pred_fallthru
        _
      // Predicated region
      $region10: #{reverse.0} parent=4 // pred_check
        _
      $region11: #{reverse.0} parent=4 // pred_check_branch
        %8 = sbr.rel target = $region13
      $region12: #{reverse.0} parent=4 // pred_region
        %s10 = ssub.s32 256, 1
        loop: start=0, step=1, limit=1
        $region14: #{reverse.0} parent=12 // loop_pre_header
          _
        $region15: #{reverse.0} parent=12 // loop_header
          %s12 = sphi 0, %s16
          %p13 = scmp.ge.s32.totalorder %s12, 1
          %s17 = sphi %s0, %s0
          %s18 = sphi %s2, %s2
        $region16: #{reverse.0} parent=12 // loop_header_branch
          %15 = sbr.rel (%p13) target = $region20
        $region17: #{reverse.0} parent=12 // loop_body
          %v19 = vld [vmem:[%s17] sm:%s10]
          %20 = vst [vmem:[%s18] sm:%s10] %v19
          %v21 = vld [vmem:[%s17 + $0x8] sm:%s10]
          %22 = vst [vmem:[%s18 + $0x10] sm:%s10] %v21
          %v23 = vld [vmem:[%s17 + $0x10] sm:%s10]
          %24 = vst [vmem:[%s18 + $0x20] sm:%s10] %v23
          %v25 = vld [vmem:[%s17 + $0x18] sm:%s10]
          %26 = vst [vmem:[%s18 + $0x30] sm:%s10] %v25
          %v27 = vld [vmem:[%s17 + $0x20] sm:%s10]
          %28 = vst [vmem:[%s18 + $0x40] sm:%s10] %v27
          %v29 = vld [vmem:[%s17 + $0x28] sm:%s10]
          %30 = vst [vmem:[%s18 + $0x50] sm:%s10] %v29
          %v31 = vld [vmem:[%s17 + $0x30] sm:%s10]
          %32 = vst [vmem:[%s18 + $0x60] sm:%s10] %v31
          %v33 = vld [vmem:[%s17 + $0x38] sm:%s10]
          %34 = vst [vmem:[%s18 + $0x70] sm:%s10] %v33
        $region18: #{reverse.0} parent=12 // loop_footer
          %s16 = sadd.s32 1, %s12
        $region19: #{reverse.0} parent=12 // loop_footer_branch
          %11 = sbr.rel target = $region15
        $region20: #{reverse.0} parent=12 // loop_exit
          _
      $region13: #{reverse.0} parent=4 // pred_fallthru
        _
    $region5: #{reverse.0} parent=1 // pred_fallthru
      _
    %63 = vnop
    %s64 = scalar_lea.vmem [#allocation0], 7
    %v65 = vld [vmem:[%s64] ss:$-1 sm:$0xff]
    %v66 = vrot.slane %v65, 1
    %67 = vst [vmem:[#allocation1] sm:$0xff] %v66
    %s68 = scalar_lea.vmem [#allocation0], 8
    %s69 = scalar_lea.vmem %s68, 7 [#allocation0]
    %v70 = vld [vmem:[%s69] ss:$-1 sm:$0xff]
    %v71 = vrot.slane %v70, 1
    %v72 = vlaneseq
    %v73 = vshrl.u32 %v72, 7
    %vm74 = vcmp.lt.s32.totalorder %v73, 7
    %75 = vst.msk [vmem:[#allocation1] sm:$0xff] %vm74, %v71
    %s76 = scalar_lea.vmem [#allocation1], 8
    %s77 = scalar_lea.vmem [#allocation0], 16
    %s78 = scalar_lea.vmem %s77, 7 [#allocation0]
    %v79 = vld [vmem:[%s78] ss:$-1 sm:$0xff]
    %v80 = vrot.slane %v79, 1
    %81 = vst [vmem:[%s76] sm:$0xff] %v80
    %s82 = scalar_lea.vmem %s77, 8 [#allocation0]
    %s83 = scalar_lea.vmem %s82, 7 [#allocation0]
    %v84 = vld [vmem:[%s83] ss:$-1 sm:$0xff]
    %v85 = vrot.slane %v84, 1
    %v86 = vlaneseq
    %v87 = vshrl.u32 %v86, 7
    %vm88 = vcmp.lt.s32.totalorder %v87, 7
    %89 = vst.msk [vmem:[%s76] sm:$0xff] %vm88, %v85
    %s90 = scalar_lea.vmem [#allocation1], 16
    %s91 = scalar_lea.vmem [#allocation0], 32
    %s92 = scalar_lea.vmem %s91, 7 [#allocation0]
    %v93 = vld [vmem:[%s92] ss:$-1 sm:$0xff]
    %v94 = vrot.slane %v93, 1
    %95 = vst [vmem:[%s90] sm:$0xff] %v94
    %s96 = scalar_lea.vmem %s91, 8 [#allocation0]
    %s97 = scalar_lea.vmem %s96, 7 [#allocation0]
    %v98 = vld [vmem:[%s97] ss:$-1 sm:$0xff]
    %v99 = vrot.slane %v98, 1
    %v100 = vlaneseq
    %v101 = vshrl.u32 %v100, 7
    %vm102 = vcmp.lt.s32.totalorder %v101, 7
    %103 = vst.msk [vmem:[%s90] sm:$0xff] %vm102, %v99
    %s104 = scalar_lea.vmem [#allocation1], 24
    %s105 = scalar_lea.vmem [#allocation0], 48
    %s106 = scalar_lea.vmem %s105, 7 [#allocation0]
    %v107 = vld [vmem:[%s106] ss:$-1 sm:$0xff]
    %v108 = vrot.slane %v107, 1
    %109 = vst [vmem:[%s104] sm:$0xff] %v108
    %s110 = scalar_lea.vmem %s105, 8 [#allocation0]
    %s111 = scalar_lea.vmem %s110, 7 [#allocation0]
    %v112 = vld [vmem:[%s111] ss:$-1 sm:$0xff]
    %v113 = vrot.slane %v112, 1
    %v114 = vlaneseq
    %v115 = vshrl.u32 %v114, 7
    %vm116 = vcmp.lt.s32.totalorder %v115, 7
    %117 = vst.msk [vmem:[%s104] sm:$0xff] %vm116, %v113
    %s118 = scalar_lea.vmem [#allocation1], 32
    %s119 = scalar_lea.vmem [#allocation0], 64
    %s120 = scalar_lea.vmem %s119, 7 [#allocation0]
    %v121 = vld [vmem:[%s120] ss:$-1 sm:$0xff]
    %v122 = vrot.slane %v121, 1
    %123 = vst [vmem:[%s118] sm:$0xff] %v122
    %s124 = scalar_lea.vmem %s119, 8 [#allocation0]
    %s125 = scalar_lea.vmem %s124, 7 [#allocation0]
    %v126 = vld [vmem:[%s125] ss:$-1 sm:$0xff]
    %v127 = vrot.slane %v126, 1
    %v128 = vlaneseq
    %v129 = vshrl.u32 %v128, 7
    %vm130 = vcmp.lt.s32.totalorder %v129, 7
    %131 = vst.msk [vmem:[%s118] sm:$0xff] %vm130, %v127
    %s132 = scalar_lea.vmem [#allocation1], 40
    %s133 = scalar_lea.vmem [#allocation0], 80
    %s134 = scalar_lea.vmem %s133, 7 [#allocation0]
    %v135 = vld [vmem:[%s134] ss:$-1 sm:$0xff]
    %v136 = vrot.slane %v135, 1
    %137 = vst [vmem:[%s132] sm:$0xff] %v136
    %s138 = scalar_lea.vmem %s133, 8 [#allocation0]
    %s139 = scalar_lea.vmem %s138, 7 [#allocation0]
    %v140 = vld [vmem:[%s139] ss:$-1 sm:$0xff]
    %v141 = vrot.slane %v140, 1
    %v142 = vlaneseq
    %v143 = vshrl.u32 %v142, 7
    %vm144 = vcmp.lt.s32.totalorder %v143, 7
    %145 = vst.msk [vmem:[%s132] sm:$0xff] %vm144, %v141
    %s146 = scalar_lea.vmem [#allocation1], 48
    %s147 = scalar_lea.vmem [#allocation0], 96
    %s148 = scalar_lea.vmem %s147, 7 [#allocation0]
    %v149 = vld [vmem:[%s148] ss:$-1 sm:$0xff]
    %v150 = vrot.slane %v149, 1
    %151 = vst [vmem:[%s146] sm:$0xff] %v150
    %s152 = scalar_lea.vmem %s147, 8 [#allocation0]
    %s153 = scalar_lea.vmem %s152, 7 [#allocation0]
    %v154 = vld [vmem:[%s153] ss:$-1 sm:$0xff]
    %v155 = vrot.slane %v154, 1
    %v156 = vlaneseq
    %v157 = vshrl.u32 %v156, 7
    %vm158 = vcmp.lt.s32.totalorder %v157, 7
    %159 = vst.msk [vmem:[%s146] sm:$0xff] %vm158, %v155
    %s160 = scalar_lea.vmem [#allocation1], 56
    %s161 = scalar_lea.vmem [#allocation0], 112
    %s162 = scalar_lea.vmem %s161, 7 [#allocation0]
    %v163 = vld [vmem:[%s162] ss:$-1 sm:$0xff]
    %v164 = vrot.slane %v163, 1
    %165 = vst [vmem:[%s160] sm:$0xff] %v164
    %s166 = scalar_lea.vmem %s161, 8 [#allocation0]
    %s167 = scalar_lea.vmem %s166, 7 [#allocation0]
    %v168 = vld [vmem:[%s167] ss:$-1 sm:$0xff]
    %v169 = vrot.slane %v168, 1
    %v170 = vlaneseq
    %v171 = vshrl.u32 %v170, 7
    %vm172 = vcmp.lt.s32.totalorder %v171, 7
    %173 = vst.msk [vmem:[%s160] sm:$0xff] %vm172, %v169
    // Predicated region
    $region36: #{reverse.0} parent=1 // pred_check
      _
    $region37: #{reverse.0} parent=1 // pred_check_branch
      %175 = sbr.rel (0) target = $region39
    $region38: #{reverse.0} parent=1 // pred_region
      // Predicated region
      $region40: #{reverse.0} parent=38 // pred_check
        _
      $region41: #{reverse.0} parent=38 // pred_check_branch
        %177 = sbr.rel (0) target = $region43
      $region42: #{reverse.0} parent=38 // pred_region
        // Predicated region
        $region55: #{reverse.0} parent=42 // pred_check
          _
        $region56: #{reverse.0} parent=42 // pred_check_branch
          %207 = sbr.rel (0) target = $region58
        $region57: #{reverse.0} parent=42 // pred_region
          loop: start=0, step=1, limit=1
          $region59: #{reverse.0} parent=57 // loop_pre_header
            _
          $region60: #{reverse.0} parent=57 // loop_header
            %s209 = sphi 0, %s213
            %p210 = scmp.ge.s32.totalorder %s209, 1
            %s214 = sphi [#allocation1], [#allocation1]
            %s215 = sphi %s1, %s1
          $region61: #{reverse.0} parent=57 // loop_header_branch
            %212 = sbr.rel (%p210) target = $region65
          $region62: #{reverse.0} parent=57 // loop_body
            %v216 = vld [vmem:[%s214] sm:$0xff]
            %217 = vst [vmem:[%s215] sm:$0xff] %v216
            %v218 = vld [vmem:[%s214 + $0x8] sm:$0xff]
            %219 = vst [vmem:[%s215 + $0x8] sm:$0xff] %v218
            %v220 = vld [vmem:[%s214 + $0x10] sm:$0xff]
            %221 = vst [vmem:[%s215 + $0x10] sm:$0xff] %v220
            %v222 = vld [vmem:[%s214 + $0x18] sm:$0xff]
            %223 = vst [vmem:[%s215 + $0x18] sm:$0xff] %v222
            %v224 = vld [vmem:[%s214 + $0x20] sm:$0xff]
            %225 = vst [vmem:[%s215 + $0x20] sm:$0xff] %v224
            %v226 = vld [vmem:[%s214 + $0x28] sm:$0xff]
            %227 = vst [vmem:[%s215 + $0x28] sm:$0xff] %v226
            %v228 = vld [vmem:[%s214 + $0x30] sm:$0xff]
            %229 = vst [vmem:[%s215 + $0x30] sm:$0xff] %v228
            %v230 = vld [vmem:[%s214 + $0x38] sm:$0xff]
            %231 = vst [vmem:[%s215 + $0x38] sm:$0xff] %v230
          $region63: #{reverse.0} parent=57 // loop_footer
            %s213 = sadd.s32 1, %s209
          $region64: #{reverse.0} parent=57 // loop_footer_branch
            %208 = sbr.rel target = $region60
          $region65: #{reverse.0} parent=57 // loop_exit
            _
        $region58: #{reverse.0} parent=42 // pred_fallthru
          _
        // Predicated region
        $region66: #{reverse.0} parent=42 // pred_check
          _
        $region67: #{reverse.0} parent=42 // pred_check_branch
          %233 = sbr.rel target = $region69
        $region68: #{reverse.0} parent=42 // pred_region
          _
        $region69: #{reverse.0} parent=42 // pred_fallthru
          _
      $region43: #{reverse.0} parent=38 // pred_fallthru
        _
      // Predicated region
      $region44: #{reverse.0} parent=38 // pred_check
        _
      $region45: #{reverse.0} parent=38 // pred_check_branch
        %179 = sbr.rel target = $region47
      $region46: #{reverse.0} parent=38 // pred_region
        %s181 = ssub.s32 256, 1
        loop: start=0, step=1, limit=1
        $region48: #{reverse.0} parent=46 // loop_pre_header
          _
        $region49: #{reverse.0} parent=46 // loop_header
          %s183 = sphi 0, %s187
          %p184 = scmp.ge.s32.totalorder %s183, 1
          %s188 = sphi [#allocation1], [#allocation1]
          %s189 = sphi %s1, %s1
        $region50: #{reverse.0} parent=46 // loop_header_branch
          %186 = sbr.rel (%p184) target = $region54
        $region51: #{reverse.0} parent=46 // loop_body
          %v190 = vld [vmem:[%s188] sm:%s181]
          %191 = vst [vmem:[%s189] sm:%s181] %v190
          %v192 = vld [vmem:[%s188 + $0x8] sm:%s181]
          %193 = vst [vmem:[%s189 + $0x8] sm:%s181] %v192
          %v194 = vld [vmem:[%s188 + $0x10] sm:%s181]
          %195 = vst [vmem:[%s189 + $0x10] sm:%s181] %v194
          %v196 = vld [vmem:[%s188 + $0x18] sm:%s181]
          %197 = vst [vmem:[%s189 + $0x18] sm:%s181] %v196
          %v198 = vld [vmem:[%s188 + $0x20] sm:%s181]
          %199 = vst [vmem:[%s189 + $0x20] sm:%s181] %v198
          %v200 = vld [vmem:[%s188 + $0x28] sm:%s181]
          %201 = vst [vmem:[%s189 + $0x28] sm:%s181] %v200
          %v202 = vld [vmem:[%s188 + $0x30] sm:%s181]
          %203 = vst [vmem:[%s189 + $0x30] sm:%s181] %v202
          %v204 = vld [vmem:[%s188 + $0x38] sm:%s181]
          %205 = vst [vmem:[%s189 + $0x38] sm:%s181] %v204
        $region52: #{reverse.0} parent=46 // loop_footer
          %s187 = sadd.s32 1, %s183
        $region53: #{reverse.0} parent=46 // loop_footer_branch
          %182 = sbr.rel target = $region49
        $region54: #{reverse.0} parent=46 // loop_exit
          _
      $region47: #{reverse.0} parent=38 // pred_fallthru
        _
    $region39: #{reverse.0} parent=1 // pred_fallthru
      _
    %234 = vnop

// kernel: frequency_domain_processing.1
$region0: #{frequency_domain_processing.1}
  #allocation0 [shape = 'u32[]', space=smem, size = 0x4, offset = 0x4, fixed_abs, tag = 'smem constant byte address 0x4 - core index']
  #allocation1 [shape = 'u32[144,128]{1,0:T(1,128)}', space=vmem, size = 0x12000, scoped, tag = 'internal scratch']
  %s0 = inlined_call_operand.vmem [shape: f32[2,4,256], index: 0, kind: input, shape index: {}]
  %s1 = inlined_call_operand.vmem [shape: f32[2,4,256], index: 1, kind: input, shape index: {}]
  %s2 = inlined_call_operand.vmem [shape: f32[2,256], index: 2, kind: input, shape index: {}]
  %s3 = inlined_call_operand.vmem [shape: f32[4,10], index: 3, kind: input, shape index: {}]
  %s4 = inlined_call_operand.vmem [shape: f32[4,10], index: 4, kind: input, shape index: {}]
  %s5 = inlined_call_operand.vmem [shape: f32[4,9], index: 5, kind: input, shape index: {}]
  %s6 = inlined_call_operand.vmem [shape: f32[4,18], index: 6, kind: input, shape index: {}]
  %s7 = inlined_call_operand.vmem [shape: f32[4,18], index: 7, kind: input, shape index: {}]
  %s8 = inlined_call_operand.vmem [shape: f32[4,18], index: 8, kind: input, shape index: {}]
  %s9 = inlined_call_operand.vmem [shape: f32[8,4,4], index: 9, kind: input, shape index: {}]
  %s10 = inlined_call_operand.vmem [shape: f32[18], index: 10, kind: input, shape index: {}]
  %s11 = inlined_call_operand.vmem [shape: f32[2,4,256], index: 11, kind: output, shape index: {0}]
  %s12 = inlined_call_operand.vmem [shape: f32[2,4,256], index: 12, kind: output, shape index: {1}]
  %13 = xla_tuple %s11, %s12
  %s14 = sld [smem:[#allocation0]]
  $region89: #{frequency_domain_processing.1} parent=0
    _
  %s16 = ssub.s32 1, %s14
  %s17 = scalar_select 0, %s16, %s14
  $region1: #{frequency_domain_processing.1} parent=0
    #allocation2 [shape = 'u8[512]{0}', space=smem, size = 0x200, scoped, tag = 'input window, operand 10, single buffered']
    #allocation3 [shape = 's32[2]{0}', space=sflag, size = 0x8, scoped, tag = 'scoped memory for frequency_domain_processing.1']
    %18 = vsyncpa [#allocation3], 0
    loop: start=0, step=1, limit=4
    $region2: #{frequency_domain_processing.1} parent=1 // loop_pre_header
      _
    $region3: #{frequency_domain_processing.1} parent=1 // loop_header
      %s20 = sphi 0, %s24
      %p21 = scmp.ge.s32.totalorder %s20, 4
      %s30 = sphi 0, %s32
      %s33 = sphi 0, %s30
      %s34 = sphi 0, %s33
      %s50 = sphi 0, %s34
      %s56 = sphi 0, %s58
      %s59 = sphi 0, %s56
      %s60 = sphi 0, %s59
      %s76 = sphi 0, %s60
      %s80 = sphi 0, %s80
      %s82 = sphi 0, %s80
      %s83 = sphi 0, %s82
      %s97 = sphi 0, %s83
      %s101 = sphi 0, %s101
      %s103 = sphi 0, %s101
      %s104 = sphi 0, %s103
      %s118 = sphi 0, %s104
      %s122 = sphi 0, %s122
      %s124 = sphi 0, %s122
      %s125 = sphi 0, %s124
      %s139 = sphi 0, %s125
      %s143 = sphi 0, %s143
      %s145 = sphi 0, %s143
      %s146 = sphi 0, %s145
      %s160 = sphi 0, %s146
      %s164 = sphi 0, %s164
      %s166 = sphi 0, %s164
      %s167 = sphi 0, %s166
      %s181 = sphi 0, %s167
      %s185 = sphi 0, %s185
      %s187 = sphi 0, %s185
      %s188 = sphi 0, %s187
      %s202 = sphi 0, %s188
      %s206 = sphi 0, %s206
      %s208 = sphi 0, %s206
      %s209 = sphi 0, %s208
      %s223 = sphi 0, %s209
      %s227 = sphi 0, %s227
      %s229 = sphi 0, %s227
      %s230 = sphi 0, %s229
      %s244 = sphi 0, %s230
      %s248 = sphi 0, %s248
      %s250 = sphi 0, %s248
      %s251 = sphi 0, %s250
      %s265 = sphi 0, %s251
      %s271 = sphi 0, %s273
      %s274 = sphi 0, %s271
      %s275 = sphi 0, %s274
      %s291 = sphi 0, %s275
      %s297 = sphi 0, %s299
      %s300 = sphi 0, %s297
      %s301 = sphi 0, %s300
      %s317 = sphi 0, %s301
    $region4: #{frequency_domain_processing.1} parent=1 // loop_header_branch
      %23 = sbr.rel (%p21) target = $region8
    $region5: #{frequency_domain_processing.1} parent=1 // loop_body
      %s25 = ssub.s32 %s20, 1
      %s26 = ssub.s32 %s20, 2
      %s27 = sadd.s32 %s20, 1
      %s28 = ssub.s32 %s20, %s27
      %p29 = scmp.eq.s32.totalorder %s28, 0
      %s31 = sadd.s32 %s30, 1
      %s32 = scalar_select %p29, %s30, %s31
      %p35 = pneg %p29
      %p36 = scmp.eq.s32.totalorder %s20, 1
      %p37 = por %p35, %p36
      %p38 = scmp.ne.s32.totalorder %s30, %s33
      %p39 = scmp.eq.s32.totalorder %s20, 0
      %p40 = por %p38, %p39
      %p41 = scmp.ne.s32.totalorder %s30, %s33
      %p42 = scmp.eq.s32.totalorder %s25, 1
      %p43 = por %p41, %p42
      %p44 = scmp.ne.s32.totalorder %s33, %s34
      %p45 = scmp.eq.s32.totalorder %s25, 0
      %p46 = por %p44, %p45
      %p47 = scmp.ne.s32.totalorder %s33, %s34
      %p48 = scmp.eq.s32.totalorder %s26, 1
      %p49 = por %p47, %p48
      %p51 = scmp.ne.s32.totalorder %s34, %s50
      %p52 = scmp.eq.s32.totalorder %s26, 0
      %p53 = por %p51, %p52
      %s54 = ssub.s32 %s20, %s27
      %p55 = scmp.eq.s32.totalorder %s54, 0
      %s57 = sadd.s32 %s56, 1
      %s58 = scalar_select %p55, %s56, %s57
      %p61 = pneg %p55
      %p62 = scmp.eq.s32.totalorder %s20, 1
      %p63 = por %p61, %p62
      %p64 = scmp.ne.s32.totalorder %s56, %s59
      %p65 = scmp.eq.s32.totalorder %s20, 0
      %p66 = por %p64, %p65
      %p67 = scmp.ne.s32.totalorder %s56, %s59
      %p68 = scmp.eq.s32.totalorder %s25, 1
      %p69 = por %p67, %p68
      %p70 = scmp.ne.s32.totalorder %s59, %s60
      %p71 = scmp.eq.s32.totalorder %s25, 0
      %p72 = por %p70, %p71
      %p73 = scmp.ne.s32.totalorder %s59, %s60
      %p74 = scmp.eq.s32.totalorder %s26, 1
      %p75 = por %p73, %p74
      %p77 = scmp.ne.s32.totalorder %s60, %s76
      %p78 = scmp.eq.s32.totalorder %s26, 0
      %p79 = por %p77, %p78
      %s81 = sadd.s32 %s80, 1
      %p84 = scmp.eq.s32.totalorder %s20, 1
      %p85 = scmp.ne.s32.totalorder %s80, %s82
      %p86 = scmp.eq.s32.totalorder %s20, 0
      %p87 = por %p85, %p86
      %p88 = scmp.ne.s32.totalorder %s80, %s82
      %p89 = scmp.eq.s32.totalorder %s25, 1
      %p90 = por %p88, %p89
      %p91 = scmp.ne.s32.totalorder %s82, %s83
      %p92 = scmp.eq.s32.totalorder %s25, 0
      %p93 = por %p91, %p92
      %p94 = scmp.ne.s32.totalorder %s82, %s83
      %p95 = scmp.eq.s32.totalorder %s26, 1
      %p96 = por %p94, %p95
      %p98 = scmp.ne.s32.totalorder %s83, %s97
      %p99 = scmp.eq.s32.totalorder %s26, 0
      %p100 = por %p98, %p99
      %s102 = sadd.s32 %s101, 1
      %p105 = scmp.eq.s32.totalorder %s20, 1
      %p106 = scmp.ne.s32.totalorder %s101, %s103
      %p107 = scmp.eq.s32.totalorder %s20, 0
      %p108 = por %p106, %p107
      %p109 = scmp.ne.s32.totalorder %s101, %s103
      %p110 = scmp.eq.s32.totalorder %s25, 1
      %p111 = por %p109, %p110
      %p112 = scmp.ne.s32.totalorder %s103, %s104
      %p113 = scmp.eq.s32.totalorder %s25, 0
      %p114 = por %p112, %p113
      %p115 = scmp.ne.s32.totalorder %s103, %s104
      %p116 = scmp.eq.s32.totalorder %s26, 1
      %p117 = por %p115, %p116
      %p119 = scmp.ne.s32.totalorder %s104, %s118
      %p120 = scmp.eq.s32.totalorder %s26, 0
      %p121 = por %p119, %p120
      %s123 = sadd.s32 %s122, 1
      %p126 = scmp.eq.s32.totalorder %s20, 1
      %p127 = scmp.ne.s32.totalorder %s122, %s124
      %p128 = scmp.eq.s32.totalorder %s20, 0
      %p129 = por %p127, %p128
      %p130 = scmp.ne.s32.totalorder %s122, %s124
      %p131 = scmp.eq.s32.totalorder %s25, 1
      %p132 = por %p130, %p131
      %p133 = scmp.ne.s32.totalorder %s124, %s125
      %p134 = scmp.eq.s32.totalorder %s25, 0
      %p135 = por %p133, %p134
      %p136 = scmp.ne.s32.totalorder %s124, %s125
      %p137 = scmp.eq.s32.totalorder %s26, 1
      %p138 = por %p136, %p137
      %p140 = scmp.ne.s32.totalorder %s125, %s139
      %p141 = scmp.eq.s32.totalorder %s26, 0
      %p142 = por %p140, %p141
      %s144 = sadd.s32 %s143, 1
      %p147 = scmp.eq.s32.totalorder %s20, 1
      %p148 = scmp.ne.s32.totalorder %s143, %s145
      %p149 = scmp.eq.s32.totalorder %s20, 0
      %p150 = por %p148, %p149
      %p151 = scmp.ne.s32.totalorder %s143, %s145
      %p152 = scmp.eq.s32.totalorder %s25, 1
      %p153 = por %p151, %p152
      %p154 = scmp.ne.s32.totalorder %s145, %s146
      %p155 = scmp.eq.s32.totalorder %s25, 0
      %p156 = por %p154, %p155
      %p157 = scmp.ne.s32.totalorder %s145, %s146
      %p158 = scmp.eq.s32.totalorder %s26, 1
      %p159 = por %p157, %p158
      %p161 = scmp.ne.s32.totalorder %s146, %s160
      %p162 = scmp.eq.s32.totalorder %s26, 0
      %p163 = por %p161, %p162
      %s165 = sadd.s32 %s164, 1
      %p168 = scmp.eq.s32.totalorder %s20, 1
      %p169 = scmp.ne.s32.totalorder %s164, %s166
      %p170 = scmp.eq.s32.totalorder %s20, 0
      %p171 = por %p169, %p170
      %p172 = scmp.ne.s32.totalorder %s164, %s166
      %p173 = scmp.eq.s32.totalorder %s25, 1
      %p174 = por %p172, %p173
      %p175 = scmp.ne.s32.totalorder %s166, %s167
      %p176 = scmp.eq.s32.totalorder %s25, 0
      %p177 = por %p175, %p176
      %p178 = scmp.ne.s32.totalorder %s166, %s167
      %p179 = scmp.eq.s32.totalorder %s26, 1
      %p180 = por %p178, %p179
      %p182 = scmp.ne.s32.totalorder %s167, %s181
      %p183 = scmp.eq.s32.totalorder %s26, 0
      %p184 = por %p182, %p183
      %s186 = sadd.s32 %s185, 1
      %p189 = scmp.eq.s32.totalorder %s20, 1
      %p190 = scmp.ne.s32.totalorder %s185, %s187
      %p191 = scmp.eq.s32.totalorder %s20, 0
      %p192 = por %p190, %p191
      %p193 = scmp.ne.s32.totalorder %s185, %s187
      %p194 = scmp.eq.s32.totalorder %s25, 1
      %p195 = por %p193, %p194
      %p196 = scmp.ne.s32.totalorder %s187, %s188
      %p197 = scmp.eq.s32.totalorder %s25, 0
      %p198 = por %p196, %p197
      %p199 = scmp.ne.s32.totalorder %s187, %s188
      %p200 = scmp.eq.s32.totalorder %s26, 1
      %p201 = por %p199, %p200
      %p203 = scmp.ne.s32.totalorder %s188, %s202
      %p204 = scmp.eq.s32.totalorder %s26, 0
      %p205 = por %p203, %p204
      %s207 = sadd.s32 %s206, 1
      %p210 = scmp.eq.s32.totalorder %s20, 1
      %p211 = scmp.ne.s32.totalorder %s206, %s208
      %p212 = scmp.eq.s32.totalorder %s20, 0
      %p213 = por %p211, %p212
      %p214 = scmp.ne.s32.totalorder %s206, %s208
      %p215 = scmp.eq.s32.totalorder %s25, 1
      %p216 = por %p214, %p215
      %p217 = scmp.ne.s32.totalorder %s208, %s209
      %p218 = scmp.eq.s32.totalorder %s25, 0
      %p219 = por %p217, %p218
      %p220 = scmp.ne.s32.totalorder %s208, %s209
      %p221 = scmp.eq.s32.totalorder %s26, 1
      %p222 = por %p220, %p221
      %p224 = scmp.ne.s32.totalorder %s209, %s223
      %p225 = scmp.eq.s32.totalorder %s26, 0
      %p226 = por %p224, %p225
      %s228 = sadd.s32 %s227, 1
      %p231 = scmp.eq.s32.totalorder %s20, 1
      %p232 = scmp.ne.s32.totalorder %s227, %s229
      %p233 = scmp.eq.s32.totalorder %s20, 0
      %p234 = por %p232, %p233
      %p235 = scmp.ne.s32.totalorder %s227, %s229
      %p236 = scmp.eq.s32.totalorder %s25, 1
      %p237 = por %p235, %p236
      %p238 = scmp.ne.s32.totalorder %s229, %s230
      %p239 = scmp.eq.s32.totalorder %s25, 0
      %p240 = por %p238, %p239
      %p241 = scmp.ne.s32.totalorder %s229, %s230
      %p242 = scmp.eq.s32.totalorder %s26, 1
      %p243 = por %p241, %p242
      %p245 = scmp.ne.s32.totalorder %s230, %s244
      %p246 = scmp.eq.s32.totalorder %s26, 0
      %p247 = por %p245, %p246
      %s249 = sadd.s32 %s248, 1
      %p252 = scmp.eq.s32.totalorder %s20, 1
      %p253 = scmp.ne.s32.totalorder %s248, %s250
      %p254 = scmp.eq.s32.totalorder %s20, 0
      %p255 = por %p253, %p254
      %p256 = scmp.ne.s32.totalorder %s248, %s250
      %p257 = scmp.eq.s32.totalorder %s25, 1
      %p258 = por %p256, %p257
      %p259 = scmp.ne.s32.totalorder %s250, %s251
      %p260 = scmp.eq.s32.totalorder %s25, 0
      %p261 = por %p259, %p260
      %p262 = scmp.ne.s32.totalorder %s250, %s251
      %p263 = scmp.eq.s32.totalorder %s26, 1
      %p264 = por %p262, %p263
      %p266 = scmp.ne.s32.totalorder %s251, %s265
      %p267 = scmp.eq.s32.totalorder %s26, 0
      %p268 = por %p266, %p267
      %s269 = ssub.s32 %s20, %s27
      %p270 = scmp.eq.s32.totalorder %s269, 0
      %s272 = sadd.s32 %s271, 1
      %s273 = scalar_select %p270, %s271, %s272
      %p276 = pneg %p270
      %p277 = scmp.eq.s32.totalorder %s20, 1
      %p278 = por %p276, %p277
      %p279 = scmp.ne.s32.totalorder %s271, %s274
      %p280 = scmp.eq.s32.totalorder %s20, 0
      %p281 = por %p279, %p280
      %p282 = scmp.ne.s32.totalorder %s271, %s274
      %p283 = scmp.eq.s32.totalorder %s25, 1
      %p284 = por %p282, %p283
      %p285 = scmp.ne.s32.totalorder %s274, %s275
      %p286 = scmp.eq.s32.totalorder %s25, 0
      %p287 = por %p285, %p286
      %p288 = scmp.ne.s32.totalorder %s274, %s275
      %p289 = scmp.eq.s32.totalorder %s26, 1
      %p290 = por %p288, %p289
      %p292 = scmp.ne.s32.totalorder %s275, %s291
      %p293 = scmp.eq.s32.totalorder %s26, 0
      %p294 = por %p292, %p293
      %s295 = ssub.s32 %s20, %s27
      %p296 = scmp.eq.s32.totalorder %s295, 0
      %s298 = sadd.s32 %s297, 1
      %s299 = scalar_select %p296, %s297, %s298
      %p302 = pneg %p296
      %p303 = scmp.eq.s32.totalorder %s20, 1
      %p304 = por %p302, %p303
      %p305 = scmp.ne.s32.totalorder %s297, %s300
      %p306 = scmp.eq.s32.totalorder %s20, 0
      %p307 = por %p305, %p306
      %p308 = scmp.ne.s32.totalorder %s297, %s300
      %p309 = scmp.eq.s32.totalorder %s25, 1
      %p310 = por %p308, %p309
      %p311 = scmp.ne.s32.totalorder %s300, %s301
      %p312 = scmp.eq.s32.totalorder %s25, 0
      %p313 = por %p311, %p312
      %p314 = scmp.ne.s32.totalorder %s300, %s301
      %p315 = scmp.eq.s32.totalorder %s26, 1
      %p316 = por %p314, %p315
      %p318 = scmp.ne.s32.totalorder %s301, %s317
      %p319 = scmp.eq.s32.totalorder %s26, 0
      %p320 = por %p318, %p319
      %p321 = scmp.le.s32.totalorder 1, %s20
      %p322 = scmp.lt.s32.totalorder %s20, 3
      %p323 = pnand %p321, %p322
      %p324 = pneg %p323
      // Predicated region
      $region9: #{frequency_domain_processing.1} parent=5 // pred_check
        _
      $region10: #{frequency_domain_processing.1} parent=5 // pred_check_branch
        %326 = sbr.rel (%p323) target = $region12
      $region11: #{frequency_domain_processing.1} parent=5 // pred_region
        %s327 = ssub.s32 %s20, 1
        // Predicated region
        $region13: #{frequency_domain_processing.1} parent=11 // pred_check
          %p328 = pneg %p93
        $region14: #{frequency_domain_processing.1} parent=11 // pred_check_branch
          %330 = sbr.rel (%p328) target = $region16
        $region15: #{frequency_domain_processing.1} parent=11 // pred_region
          _
        $region16: #{frequency_domain_processing.1} parent=11 // pred_fallthru
          _
        // Predicated region
        $region17: #{frequency_domain_processing.1} parent=11 // pred_check
          %p331 = pneg %p114
        $region18: #{frequency_domain_processing.1} parent=11 // pred_check_branch
          %333 = sbr.rel (%p331) target = $region20
        $region19: #{frequency_domain_processing.1} parent=11 // pred_region
          _
        $region20: #{frequency_domain_processing.1} parent=11 // pred_fallthru
          _
        // Predicated region
        $region21: #{frequency_domain_processing.1} parent=11 // pred_check
          %p334 = pneg %p135
        $region22: #{frequency_domain_processing.1} parent=11 // pred_check_branch
          %336 = sbr.rel (%p334) target = $region24
        $region23: #{frequency_domain_processing.1} parent=11 // pred_region
          _
        $region24: #{frequency_domain_processing.1} parent=11 // pred_fallthru
          _
        // Predicated region
        $region25: #{frequency_domain_processing.1} parent=11 // pred_check
          %p337 = pneg %p156
        $region26: #{frequency_domain_processing.1} parent=11 // pred_check_branch
          %339 = sbr.rel (%p337) target = $region28
        $region27: #{frequency_domain_processing.1} parent=11 // pred_region
          _
        $region28: #{frequency_domain_processing.1} parent=11 // pred_fallthru
          _
        // Predicated region
        $region29: #{frequency_domain_processing.1} parent=11 // pred_check
          %p340 = pneg %p177
        $region30: #{frequency_domain_processing.1} parent=11 // pred_check_branch
          %342 = sbr.rel (%p340) target = $region32
        $region31: #{frequency_domain_processing.1} parent=11 // pred_region
          _
        $region32: #{frequency_domain_processing.1} parent=11 // pred_fallthru
          _
        // Predicated region
        $region33: #{frequency_domain_processing.1} parent=11 // pred_check
          %p343 = pneg %p198
        $region34: #{frequency_domain_processing.1} parent=11 // pred_check_branch
          %345 = sbr.rel (%p343) target = $region36
        $region35: #{frequency_domain_processing.1} parent=11 // pred_region
          _
        $region36: #{frequency_domain_processing.1} parent=11 // pred_fallthru
          _
        // Predicated region
        $region37: #{frequency_domain_processing.1} parent=11 // pred_check
          %p346 = pneg %p219
        $region38: #{frequency_domain_processing.1} parent=11 // pred_check_branch
          %348 = sbr.rel (%p346) target = $region40
        $region39: #{frequency_domain_processing.1} parent=11 // pred_region
          _
        $region40: #{frequency_domain_processing.1} parent=11 // pred_fallthru
          _
        // Predicated region
        $region41: #{frequency_domain_processing.1} parent=11 // pred_check
          %p349 = pneg %p240
        $region42: #{frequency_domain_processing.1} parent=11 // pred_check_branch
          %351 = sbr.rel (%p349) target = $region44
        $region43: #{frequency_domain_processing.1} parent=11 // pred_region
          _
        $region44: #{frequency_domain_processing.1} parent=11 // pred_fallthru
          _
        // Predicated region
        $region45: #{frequency_domain_processing.1} parent=11 // pred_check
          %p352 = pneg %p261
        $region46: #{frequency_domain_processing.1} parent=11 // pred_check_branch
          %354 = sbr.rel (%p352) target = $region48
        $region47: #{frequency_domain_processing.1} parent=11 // pred_region
          %s356 = ssub.s32 16, 16
          %357 = vsyncadd [#allocation3], %s356
          %s359 = sshll.u32 %s10, 4
          %s360 = int_to_ptr.vmem [resolvable:$true] %s359
          %362 = dma.vmem_to_smem %s360, 16, [#allocation2], [#allocation3]
        $region48: #{frequency_domain_processing.1} parent=11 // pred_fallthru
          _
      $region12: #{frequency_domain_processing.1} parent=5 // pred_fallthru
        _
      %p363 = scmp.lt.s32.totalorder %s20, 2
      // Predicated region
      $region49: #{frequency_domain_processing.1} parent=5 // pred_check
        %p364 = pneg %p363
      $region50: #{frequency_domain_processing.1} parent=5 // pred_check_branch
        %366 = sbr.rel (%p364) target = $region52
      $region51: #{frequency_domain_processing.1} parent=5 // pred_region
        // Predicated region
        $region53: #{frequency_domain_processing.1} parent=51 // pred_check
          %p367 = pneg %p40
        $region54: #{frequency_domain_processing.1} parent=51 // pred_check_branch
          %369 = sbr.rel (%p367) target = $region56
        $region55: #{frequency_domain_processing.1} parent=51 // pred_region
          %p370 = scmp.lt.s32.totalorder %s20, 1
          %s371 = scalar_select %p370, %s20, 1
          %s372 = smul.addr %s371, 2
          %s373 = smul.addr %s372, 4
          %s374 = scalar_lea.vmem %s0, %s373
        $region56: #{frequency_domain_processing.1} parent=51 // pred_fallthru
          _
        // Predicated region
        $region57: #{frequency_domain_processing.1} parent=51 // pred_check
          %p375 = pneg %p66
        $region58: #{frequency_domain_processing.1} parent=51 // pred_check_branch
          %377 = sbr.rel (%p375) target = $region60
        $region59: #{frequency_domain_processing.1} parent=51 // pred_region
          %p378 = scmp.lt.s32.totalorder %s20, 1
          %s379 = scalar_select %p378, %s20, 1
          %s380 = smul.addr %s379, 2
          %s381 = smul.addr %s380, 4
          %s382 = scalar_lea.vmem %s1, %s381
        $region60: #{frequency_domain_processing.1} parent=51 // pred_fallthru
          _
      $region52: #{frequency_domain_processing.1} parent=5 // pred_fallthru
        _
      %p383 = scmp.le.s32.totalorder 1, %s20
      %p384 = scmp.lt.s32.totalorder %s20, 3
      %p385 = pnand %p383, %p384
      %p386 = pneg %p385
      // Predicated region
      $region61: #{frequency_domain_processing.1} parent=5 // pred_check
        _
      $region62: #{frequency_domain_processing.1} parent=5 // pred_check_branch
        %388 = sbr.rel (%p385) target = $region64
      $region63: #{frequency_domain_processing.1} parent=5 // pred_region
        %s389 = ssub.s32 %s20, 1
        // Predicated region
        $region65: #{frequency_domain_processing.1} parent=63 // pred_check
          %p390 = pneg %p261
        $region66: #{frequency_domain_processing.1} parent=63 // pred_check_branch
          %392 = sbr.rel (%p390) target = $region68
        $region67: #{frequency_domain_processing.1} parent=63 // pred_region
          %393 = dma.done [#allocation3], 16
        $region68: #{frequency_domain_processing.1} parent=63 // pred_fallthru
          _
        %394 = sfence
        %p395 = scmp.lt.s32.totalorder %s25, 1
        %s396 = scalar_select %p395, %s25, 1
        %s397 = smul.addr %s396, 2
        %s398 = smul.addr %s397, 4
        %s399 = scalar_lea.vmem %s0, %s398
        %p400 = pneg %p46
        %p401 = pneg %p43
        %p402 = scmp.lt.s32.totalorder %s25, 1
        %s403 = scalar_select %p402, %s25, 1
        %s404 = smul.addr %s403, 2
        %s405 = smul.addr %s404, 4
        %s406 = scalar_lea.vmem %s1, %s405
        %p407 = pneg %p72
        %p408 = pneg %p69
        %p409 = pneg %p93
        %p410 = pneg %p90
        %p411 = pneg %p114
        %p412 = pneg %p111
        %p413 = pneg %p135
        %p414 = pneg %p132
        %p415 = pneg %p156
        %p416 = pneg %p153
        %p417 = pneg %p177
        %p418 = pneg %p174
        %p419 = pneg %p198
        %p420 = pneg %p195
        %p421 = pneg %p219
        %p422 = pneg %p216
        %p423 = pneg %p240
        %p424 = pneg %p237
        %p425 = pneg %p261
        %p426 = pneg %p258
        %p427 = pneg %p287
        %p428 = pneg %p284
        %p429 = scmp.lt.s32.totalorder %s25, 1
        %s430 = scalar_select %p429, %s25, 1
        %s431 = smul.addr %s430, 2
        %s432 = smul.addr %s431, 4
        %s433 = scalar_lea.vmem %s11, %s432
        %p434 = pneg %p313
        %p435 = pneg %p310
        %p436 = scmp.lt.s32.totalorder %s25, 1
        %s437 = scalar_select %p436, %s25, 1
        %s438 = smul.addr %s437, 2
        %s439 = smul.addr %s438, 4
        %s440 = scalar_lea.vmem %s12, %s439
        %p441 = scmp.lt.s32.totalorder %s25, 1
        %s442 = scalar_select %p441, %s25, 1
        %s443 = smul.addr %s442, 2
        %s444 = smul.addr %s443, 4
        %s445 = scalar_lea.vmem %s0, %s444
        %p446 = scmp.lt.s32.totalorder %s25, 1
        %s447 = scalar_select %p446, %s25, 1
        %s448 = smul.addr %s447, 2
        %s449 = smul.addr %s448, 4
        %s450 = scalar_lea.vmem %s1, %s449
        %p451 = scmp.lt.s32.totalorder %s25, 1
        %s452 = scalar_select %p451, %s25, 1
        %s453 = smul.addr %s452, 2
        %s454 = smul.addr %s453, 4
        %s455 = scalar_lea.vmem %s11, %s454
        %p456 = scmp.lt.s32.totalorder %s25, 1
        %s457 = scalar_select %p456, %s25, 1
        %s458 = smul.addr %s457, 2
        %s459 = smul.addr %s458, 4
        %s460 = scalar_lea.vmem %s12, %s459
        %v461 = vld [vmem:[%s2] ss:$2 sm:$0x3]
        %s462 = scalar_lea.vmem %s2, 1
        %v463 = vld [vmem:[%s462] ss:$2 sm:$0x3]
        %v464 = vadd.f32 %v461, -1.0
        %vm465 = vcmp.ge.f32.partialorder %v464, 0.0
        %vm466 = vcmp.le.f32.partialorder %v464, 15.0
        %vm467 = vmand %vm465, %vm466
        %v468 = vadd.f32 %v463, -1.0
        %vm469 = vcmp.ge.f32.partialorder %v468, 0.0
        %vm470 = vmand %vm467, %vm469
        %vm471 = vcmp.le.f32.partialorder %v468, 8.0
        %vm472 = vmand %vm470, %vm471
        %v473 = vsel %vm472, 1.0, 0.0
        %v474 = vadd.f32 %v463, 0.0
        %vm475 = vcmp.ge.f32.partialorder %v474, 0.0
        %vm476 = vmand %vm467, %vm475
        %vm477 = vcmp.le.f32.partialorder %v474, 8.0
        %vm478 = vmand %vm476, %vm477
        %v479 = vsel %vm478, 1.0, 0.0
        %v480 = vadd.f32 %v463, 1.0
        %vm481 = vcmp.ge.f32.partialorder %v480, 0.0
        %vm482 = vmand %vm467, %vm481
        %vm483 = vcmp.le.f32.partialorder %v480, 8.0
        %vm484 = vmand %vm482, %vm483
        %v485 = vsel %vm484, 1.0, 0.0
        %v486 = vadd.f32 %v461, 0.0
        %vm487 = vcmp.ge.f32.partialorder %v486, 0.0
        %vm488 = vcmp.le.f32.partialorder %v486, 15.0
        %vm489 = vmand %vm487, %vm488
        %vm490 = vmand %vm489, %vm469
        %vm491 = vmand %vm490, %vm471
        %v492 = vsel %vm491, 1.0, 0.0
        %vm493 = vmand %vm489, %vm481
        %vm494 = vmand %vm493, %vm483
        %v495 = vsel %vm494, 1.0, 0.0
        %v496 = vadd.f32 %v461, 1.0
        %vm497 = vcmp.ge.f32.partialorder %v496, 0.0
        %vm498 = vcmp.le.f32.partialorder %v496, 15.0
        %vm499 = vmand %vm497, %vm498
        %vm500 = vmand %vm499, %vm469
        %vm501 = vmand %vm500, %vm471
        %v502 = vsel %vm501, 1.0, 0.0
        %vm503 = vmand %vm499, %vm475
        %vm504 = vmand %vm503, %vm477
        %v505 = vsel %vm504, 1.0, 0.0
        %vm506 = vmand %vm499, %vm481
        %vm507 = vmand %vm506, %vm483
        %v508 = vsel %vm507, 1.0, 0.0
        %v509 = vadd.f32 %v461, -5.0
        %vm510 = vcmp.ge.f32.partialorder %v509, 0.0
        %vm511 = vcmp.le.f32.partialorder %v509, 15.0
        %vm512 = vmand %vm510, %vm511
        %v513 = vadd.f32 %v463, -5.0
        %vm514 = vcmp.ge.f32.partialorder %v513, 0.0
        %vm515 = vmand %vm512, %vm514
        %vm516 = vcmp.le.f32.partialorder %v513, 8.0
        %vm517 = vmand %vm515, %vm516
        %v518 = vsel %vm517, 1.0, 0.0
        %vm519 = vmand %vm512, %vm475
        %vm520 = vmand %vm519, %vm477
        %v521 = vsel %vm520, 1.0, 0.0
        %v522 = vadd.f32 %v463, 5.0
        %vm523 = vcmp.ge.f32.partialorder %v522, 0.0
        %vm524 = vmand %vm512, %vm523
        %vm525 = vcmp.le.f32.partialorder %v522, 8.0
        %vm526 = vmand %vm524, %vm525
        %v527 = vsel %vm526, 1.0, 0.0
        %vm528 = vmand %vm489, %vm514
        %vm529 = vmand %vm528, %vm516
        %v530 = vsel %vm529, 1.0, 0.0
        %vm531 = vmand %vm489, %vm523
        %vm532 = vmand %vm531, %vm525
        %v533 = vsel %vm532, 1.0, 0.0
        %v534 = vadd.f32 %v461, 5.0
        %vm535 = vcmp.ge.f32.partialorder %v534, 0.0
        %vm536 = vcmp.le.f32.partialorder %v534, 15.0
        %vm537 = vmand %vm535, %vm536
        %vm538 = vmand %vm537, %vm514
        %vm539 = vmand %vm538, %vm516
        %v540 = vsel %vm539, 1.0, 0.0
        %vm541 = vmand %vm537, %vm475
        %vm542 = vmand %vm541, %vm477
        %v543 = vsel %vm542, 1.0, 0.0
        %vm544 = vmand %vm537, %vm523
        %vm545 = vmand %vm544, %vm525
        %v546 = vsel %vm545, 1.0, 0.0
        %vm547 = vcmp.le.f32.partialorder %v461, 15.0
        %v548 = vsel %vm547, 1.0, 0.0
        %v549 = vld [vmem:[%s3] sm:$0xf]
        %v550 = vld [vmem:[%s4] sm:$0xf]
        %v551 = vld [vmem:[%s5] sm:$0xf]
        %v552 = vld [vmem:[%s6] sm:$0xf]
        %v553 = vld [vmem:[%s7] sm:$0xf]
        %v554 = vld [vmem:[%s8] sm:$0xf]
        %v555 = vld [vmem:[%s445] sm:$0xff]
        %v557 = vcombine.high %v555, %v555
        %vm559 = vcmask 1043456
        %v560 = vsel %vm559, %v555, 0.0
        %v561 = vrot.slane %v560, 4
        %v562 = vadd.f32 %v560, %v561
        %v563 = vrot.slane %v562, 2
        %v564 = vadd.f32 %v562, %v563
        %v565 = vrot.slane %v564, 1
        %v566 = vadd.f32 %v564, %v565
        %v567 = vsel %vm559, %v557, 0.0
        %v568 = vrot.slane %v567, 4
        %v569 = vadd.f32 %v567, %v568
        %v570 = vrot.slane %v569, 2
        %v571 = vadd.f32 %v569, %v570
        %v572 = vrot.slane %v571, 1
        %v573 = vadd.f32 %v571, %v572
        %v574 = vrcp.pop 4.0
        %v575 = vmul.f32 %v566, %v574
        %v576 = vmul.f32 %v573, %v574
        %v579 = vcombine.low %v575, %v576
        %v581 = vsub.f32 %v555, %v579
        %v582 = vmul.f32 %v581, %v581
        %v584 = vcombine.high %v582, %v582
        %v586 = vsel %vm559, %v582, 0.0
        %v587 = vrot.slane %v586, 4
        %v588 = vadd.f32 %v586, %v587
        %v589 = vrot.slane %v588, 2
        %v590 = vadd.f32 %v588, %v589
        %v591 = vrot.slane %v590, 1
        %v592 = vadd.f32 %v590, %v591
        %v593 = vsel %vm559, %v584, 0.0
        %v594 = vrot.slane %v593, 4
        %v595 = vadd.f32 %v593, %v594
        %v596 = vrot.slane %v595, 2
        %v597 = vadd.f32 %v595, %v596
        %v598 = vrot.slane %v597, 1
        %v599 = vadd.f32 %v597, %v598
        %v600 = vmul.f32 %v592, %v574
        %v601 = vmul.f32 %v599, %v574
        %v602 = vadd.f32 %v600, 1e-06
        %v603 = vadd.f32 %v601, 1e-06
        %v604 = vrsqrt.pop %v602
        %v605 = vrsqrt.pop %v603
        %v608 = vcombine.low %v604, %v605
        %v610 = vmul.f32 %v581, %v608
        %612 = vset.pattern.permute.xlu0 0
        %613 = vperm.xlu0 %612, %v549
        %v614 = vpop.permute.xlu0 %613
        %v616 = vunpack.c.l.s4 839922192
        %v617 = vunpack.c.0.s8 %v616
        %v618 = vlaneseq
        %v619 = vshrl.u32 %v618, 7
        %v620 = vsub.s32 %v617, %v619
        %v621 = vrot.slane %v614, %v620
        %v623 = vmul.f32 %v610, %v621
        %624 = vset.pattern.permute.xlu0 1
        %625 = vperm.xlu0 %624, %v549
        %v626 = vpop.permute.xlu0 %625
        %v628 = vunpack.c.l.s4 839922192
        %v629 = vunpack.c.0.s8 %v628
        %v630 = vlaneseq
        %v631 = vshrl.u32 %v630, 7
        %v632 = vsub.s32 %v629, %v631
        %v633 = vrot.slane %v626, %v632
        %v635 = vadd.f32 %v623, %v633
        %636 = vset.pattern.permute.xlu0 2
        %637 = vperm.xlu0 %636, %v549
        %v638 = vpop.permute.xlu0 %637
        %v640 = vunpack.c.l.s4 839922192
        %v641 = vunpack.c.0.s8 %v640
        %v642 = vlaneseq
        %v643 = vshrl.u32 %v642, 7
        %v644 = vsub.s32 %v641, %v643
        %v645 = vrot.slane %v638, %v644
        %v647 = vmul.f32 %v635, %v645
        %v648 = vld [vmem:[%s450] sm:$0xff]
        %v650 = vcombine.high %v648, %v648
        %v652 = vsel %vm559, %v648, 0.0
        %v653 = vrot.slane %v652, 4
        %v654 = vadd.f32 %v652, %v653
        %v655 = vrot.slane %v654, 2
        %v656 = vadd.f32 %v654, %v655
        %v657 = vrot.slane %v656, 1
        %v658 = vadd.f32 %v656, %v657
        %v659 = vsel %vm559, %v650, 0.0
        %v660 = vrot.slane %v659, 4
        %v661 = vadd.f32 %v659, %v660
        %v662 = vrot.slane %v661, 2
        %v663 = vadd.f32 %v661, %v662
        %v664 = vrot.slane %v663, 1
        %v665 = vadd.f32 %v663, %v664
        %v666 = vmul.f32 %v658, %v574
        %v667 = vmul.f32 %v665, %v574
        %v670 = vcombine.low %v666, %v667
        %v672 = vsub.f32 %v648, %v670
        %v673 = vmul.f32 %v672, %v672
        %v675 = vcombine.high %v673, %v673
        %v677 = vsel %vm559, %v673, 0.0
        %v678 = vrot.slane %v677, 4
        %v679 = vadd.f32 %v677, %v678
        %v680 = vrot.slane %v679, 2
        %v681 = vadd.f32 %v679, %v680
        %v682 = vrot.slane %v681, 1
        %v683 = vadd.f32 %v681, %v682
        %v684 = vsel %vm559, %v675, 0.0
        %v685 = vrot.slane %v684, 4
        %v686 = vadd.f32 %v684, %v685
        %v687 = vrot.slane %v686, 2
        %v688 = vadd.f32 %v686, %v687
        %v689 = vrot.slane %v688, 1
        %v690 = vadd.f32 %v688, %v689
        %v691 = vmul.f32 %v683, %v574
        %v692 = vmul.f32 %v690, %v574
        %v693 = vadd.f32 %v691, 1e-06
        %v694 = vadd.f32 %v692, 1e-06
        %v695 = vrsqrt.pop %v693
        %v696 = vrsqrt.pop %v694
        %v699 = vcombine.low %v695, %v696
        %v701 = vmul.f32 %v672, %v699
        %703 = vset.pattern.permute.xlu0 0
        %704 = vperm.xlu0 %703, %v550
        %v705 = vpop.permute.xlu0 %704
        %v707 = vunpack.c.l.s4 839922192
        %v708 = vunpack.c.0.s8 %v707
        %v709 = vlaneseq
        %v710 = vshrl.u32 %v709, 7
        %v711 = vsub.s32 %v708, %v710
        %v712 = vrot.slane %v705, %v711
        %v714 = vmul.f32 %v701, %v712
        %715 = vset.pattern.permute.xlu0 1
        %716 = vperm.xlu0 %715, %v550
        %v717 = vpop.permute.xlu0 %716
        %v719 = vunpack.c.l.s4 839922192
        %v720 = vunpack.c.0.s8 %v719
        %v721 = vlaneseq
        %v722 = vshrl.u32 %v721, 7
        %v723 = vsub.s32 %v720, %v722
        %v724 = vrot.slane %v717, %v723
        %v726 = vadd.f32 %v714, %v724
        %727 = vset.pattern.permute.xlu0 2
        %728 = vperm.xlu0 %727, %v550
        %v729 = vpop.permute.xlu0 %728
        %v731 = vunpack.c.l.s4 839922192
        %v732 = vunpack.c.0.s8 %v731
        %v733 = vlaneseq
        %v734 = vshrl.u32 %v733, 7
        %v735 = vsub.s32 %v732, %v734
        %v736 = vrot.slane %v729, %v735
        %v738 = vmul.f32 %v726, %v736
        %v739 = vld [vmem:[%s9] sm:$0xf]
        %741 = vset.pattern.permute.xlu0 4
        %742 = vperm.xlu0 %741, %v552
        %v743 = vpop.permute.xlu0 %742
        %v745 = vunpack.c.l.s4 839922192
        %v746 = vunpack.c.0.s8 %v745
        %v747 = vlaneseq
        %v748 = vshrl.u32 %v747, 7
        %v749 = vsub.s32 %v746, %v748
        %v750 = vrot.slane %v743, %v749
        %v752 = vmul.f32 %v647, %v750
        %753 = vset.pattern.permute.xlu0 3
        %754 = vperm.xlu0 %753, %v549
        %v755 = vpop.permute.xlu0 %754
        %v757 = vunpack.c.l.s4 839922192
        %v758 = vunpack.c.0.s8 %v757
        %v759 = vlaneseq
        %v760 = vshrl.u32 %v759, 7
        %v761 = vsub.s32 %v758, %v760
        %v762 = vrot.slane %v755, %v761
        %v764 = vadd.f32 %v752, %v762
        %v766 = vcombine.high %v647, %v647
        %768 = vrot.lane.b32.xlu0 %v647, 10
        %v769 = vpop.permute.xlu0 %768
        %770 = vrot.lane.b32.xlu0 %v766, 10
        %v771 = vpop.permute.xlu0 %770
        %v772 = vlaneseq
        %v773 = vand.u32 %v772, 127
        %vm774 = vcmp.lt.s32.totalorder %v773, 10
        %v775 = vsel %vm774, %v769, %v771
        %v776 = vsel %vm774, %v771, %v769
        %v778 = vlaneseq
        %v779 = vshrl.u32 %v778, 7
        %v780 = vsub.s32 0, %v779
        %v781 = vrot.slane %v473, %v780
        %v782 = vlaneseq
        %v783 = vshrl.u32 %v782, 7
        %v784 = vsub.s32 1, %v783
        %v785 = vrot.slane %v473, %v784
        %v788 = vmul.f32 %v776, %v781
        %v789 = vmul.f32 %v775, %v785
        %790 = vset.pattern.permute.xlu0 0
        %791 = vperm.xlu0 %790, %v552
        %v792 = vpop.permute.xlu0 %791
        %v794 = vmul.f32 %v788, %v792
        %v795 = vmul.f32 %v789, %v792
        %v798 = vcombine.low %v794, %v795
        %v800 = vadd.f32 %v764, %v798
        %801 = vrot.lane.b32.xlu0 %v647, 9
        %v802 = vpop.permute.xlu0 %801
        %803 = vrot.lane.b32.xlu0 %v766, 9
        %v804 = vpop.permute.xlu0 %803
        %vm805 = vcmp.lt.s32.totalorder %v773, 9
        %v806 = vsel %vm805, %v802, %v804
        %v807 = vsel %vm805, %v804, %v802
        %v809 = vlaneseq
        %v810 = vshrl.u32 %v809, 7
        %v811 = vsub.s32 0, %v810
        %v812 = vrot.slane %v479, %v811
        %v813 = vlaneseq
        %v814 = vshrl.u32 %v813, 7
        %v815 = vsub.s32 1, %v814
        %v816 = vrot.slane %v479, %v815
        %v819 = vmul.f32 %v807, %v812
        %v820 = vmul.f32 %v806, %v816
        %821 = vset.pattern.permute.xlu0 1
        %822 = vperm.xlu0 %821, %v552
        %v823 = vpop.permute.xlu0 %822
        %v825 = vmul.f32 %v819, %v823
        %v826 = vmul.f32 %v820, %v823
        %v829 = vcombine.low %v825, %v826
        %v831 = vadd.f32 %v800, %v829
        %832 = vrot.lane.b32.xlu0 %v647, 8
        %v833 = vpop.permute.xlu0 %832
        %834 = vrot.lane.b32.xlu0 %v766, 8
        %v835 = vpop.permute.xlu0 %834
        %vm836 = vcmp.lt.s32.totalorder %v773, 8
        %v837 = vsel %vm836, %v833, %v835
        %v838 = vsel %vm836, %v835, %v833
        %v840 = vlaneseq
        %v841 = vshrl.u32 %v840, 7
        %v842 = vsub.s32 0, %v841
        %v843 = vrot.slane %v485, %v842
        %v844 = vlaneseq
        %v845 = vshrl.u32 %v844, 7
        %v846 = vsub.s32 1, %v845
        %v847 = vrot.slane %v485, %v846
        %v850 = vmul.f32 %v838, %v843
        %v851 = vmul.f32 %v837, %v847
        %852 = vset.pattern.permute.xlu0 2
        %853 = vperm.xlu0 %852, %v552
        %v854 = vpop.permute.xlu0 %853
        %v856 = vmul.f32 %v850, %v854
        %v857 = vmul.f32 %v851, %v854
        %v860 = vcombine.low %v856, %v857
        %v862 = vadd.f32 %v831, %v860
        %863 = vrot.lane.b32.xlu0 %v647, 1
        %v864 = vpop.permute.xlu0 %863
        %865 = vrot.lane.b32.xlu0 %v766, 1
        %v866 = vpop.permute.xlu0 %865
        %vm867 = vcmp.lt.s32.totalorder %v773, 1
        %v868 = vsel %vm867, %v864, %v866
        %v869 = vsel %vm867, %v866, %v864
        %v871 = vlaneseq
        %v872 = vshrl.u32 %v871, 7
        %v873 = vsub.s32 0, %v872
        %v874 = vrot.slane %v492, %v873
        %v875 = vlaneseq
        %v876 = vshrl.u32 %v875, 7
        %v877 = vsub.s32 1, %v876
        %v878 = vrot.slane %v492, %v877
        %v881 = vmul.f32 %v869, %v874
        %v882 = vmul.f32 %v868, %v878
        %883 = vset.pattern.permute.xlu0 3
        %884 = vperm.xlu0 %883, %v552
        %v885 = vpop.permute.xlu0 %884
        %v887 = vmul.f32 %v881, %v885
        %v888 = vmul.f32 %v882, %v885
        %v891 = vcombine.low %v887, %v888
        %v893 = vadd.f32 %v862, %v891
        %894 = vrot.lane.b32.xlu0 %v647, 127
        %v895 = vpop.permute.xlu0 %894
        %896 = vrot.lane.b32.xlu0 %v766, 127
        %v897 = vpop.permute.xlu0 %896
        %vm898 = vcmp.lt.s32.totalorder %v773, 127
        %v899 = vsel %vm898, %v895, %v897
        %v900 = vsel %vm898, %v897, %v895
        %v902 = vlaneseq
        %v903 = vshrl.u32 %v902, 7
        %v904 = vsub.s32 0, %v903
        %v905 = vrot.slane %v495, %v904
        %v906 = vlaneseq
        %v907 = vshrl.u32 %v906, 7
        %v908 = vsub.s32 1, %v907
        %v909 = vrot.slane %v495, %v908
        %v912 = vmul.f32 %v899, %v905
        %v913 = vmul.f32 %v900, %v909
        %914 = vset.pattern.permute.xlu0 5
        %915 = vperm.xlu0 %914, %v552
        %v916 = vpop.permute.xlu0 %915
        %v918 = vmul.f32 %v912, %v916
        %v919 = vmul.f32 %v913, %v916
        %v922 = vcombine.low %v918, %v919
        %v924 = vadd.f32 %v893, %v922
        %925 = vrot.lane.b32.xlu0 %v647, 120
        %v926 = vpop.permute.xlu0 %925
        %927 = vrot.lane.b32.xlu0 %v766, 120
        %v928 = vpop.permute.xlu0 %927
        %vm929 = vcmp.lt.s32.totalorder %v773, 120
        %v930 = vsel %vm929, %v926, %v928
        %v931 = vsel %vm929, %v928, %v926
        %v933 = vlaneseq
        %v934 = vshrl.u32 %v933, 7
        %v935 = vsub.s32 0, %v934
        %v936 = vrot.slane %v502, %v935
        %v937 = vlaneseq
        %v938 = vshrl.u32 %v937, 7
        %v939 = vsub.s32 1, %v938
        %v940 = vrot.slane %v502, %v939
        %v943 = vmul.f32 %v930, %v936
        %v944 = vmul.f32 %v931, %v940
        %945 = vset.pattern.permute.xlu0 6
        %946 = vperm.xlu0 %945, %v552
        %v947 = vpop.permute.xlu0 %946
        %v949 = vmul.f32 %v943, %v947
        %v950 = vmul.f32 %v944, %v947
        %v953 = vcombine.low %v949, %v950
        %v955 = vadd.f32 %v924, %v953
        %956 = vrot.lane.b32.xlu0 %v647, 119
        %v957 = vpop.permute.xlu0 %956
        %958 = vrot.lane.b32.xlu0 %v766, 119
        %v959 = vpop.permute.xlu0 %958
        %vm960 = vcmp.lt.s32.totalorder %v773, 119
        %v961 = vsel %vm960, %v957, %v959
        %v962 = vsel %vm960, %v959, %v957
        %v964 = vlaneseq
        %v965 = vshrl.u32 %v964, 7
        %v966 = vsub.s32 0, %v965
        %v967 = vrot.slane %v505, %v966
        %v968 = vlaneseq
        %v969 = vshrl.u32 %v968, 7
        %v970 = vsub.s32 1, %v969
        %v971 = vrot.slane %v505, %v970
        %v974 = vmul.f32 %v961, %v967
        %v975 = vmul.f32 %v962, %v971
        %976 = vset.pattern.permute.xlu0 7
        %977 = vperm.xlu0 %976, %v552
        %v978 = vpop.permute.xlu0 %977
        %v980 = vmul.f32 %v974, %v978
        %v981 = vmul.f32 %v975, %v978
        %v984 = vcombine.low %v980, %v981
        %v986 = vadd.f32 %v955, %v984
        %987 = vrot.lane.b32.xlu0 %v647, 118
        %v988 = vpop.permute.xlu0 %987
        %989 = vrot.lane.b32.xlu0 %v766, 118
        %v990 = vpop.permute.xlu0 %989
        %vm991 = vcmp.lt.s32.totalorder %v773, 118
        %v992 = vsel %vm991, %v988, %v990
        %v993 = vsel %vm991, %v990, %v988
        %v995 = vlaneseq
        %v996 = vshrl.u32 %v995, 7
        %v997 = vsub.s32 0, %v996
        %v998 = vrot.slane %v508, %v997
        %v999 = vlaneseq
        %v1000 = vshrl.u32 %v999, 7
        %v1001 = vsub.s32 1, %v1000
        %v1002 = vrot.slane %v508, %v1001
        %v1005 = vmul.f32 %v992, %v998
        %v1006 = vmul.f32 %v993, %v1002
        %1007 = vset.pattern.permute.xlu0 8
        %1008 = vperm.xlu0 %1007, %v552
        %v1009 = vpop.permute.xlu0 %1008
        %v1011 = vmul.f32 %v1005, %v1009
        %v1012 = vmul.f32 %v1006, %v1009
        %v1015 = vcombine.low %v1011, %v1012
        %v1017 = vadd.f32 %v986, %v1015
        %1018 = vset.pattern.permute.xlu0 4
        %1019 = vperm.xlu0 %1018, %v549
        %v1020 = vpop.permute.xlu0 %1019
        %v1023 = vcombine.high %v1017, %v1017
        %vm1024 = vcmask 31744
        %v1026 = vsel %vm1024, %v739, 0
        %v1028 = vsel %vm559, %v1017, 0
        %v1030 = vsel %vm559, %v1023, 0
        %1032 = vmatprep.subr.mxu0 0.0
        %1033 = vmatpush1.msra.mxu0 0.0
        %1034 = vmatprep.subr.mxu0 0.0
        %1035 = vmatpush1.msra.mxu0 0.0
        %1036 = vmatprep.subr.mxu0 0.0
        %1037 = vmatpush1.msra.mxu0 0.0
        %1038 = vmatprep.subr.mxu0 0.0
        %1039 = vmatpush1.msra.mxu0 0.0
        %1040 = vmatprep.subr.mxu0 0.0
        %1041 = vmatpush1.msra.mxu0 0.0
        %1042 = vmatprep.subr.mxu0 0.0
        %1043 = vmatpush1.msra.mxu0 0.0
        %1044 = vmatprep.subr.mxu0 0.0
        %1045 = vmatpush1.msra.mxu0 0.0
        %1046 = vmatprep.subr.mxu0 0.0
        %1047 = vmatpush1.msra.mxu0 0.0
        %1048 = vmatprep.subr.mxu0 0.0
        %1049 = vmatpush1.msra.mxu0 0.0
        %1050 = vmatprep.subr.mxu0 0.0
        %1051 = vmatpush1.msra.mxu0 0.0
        %1052 = vmatprep.subr.mxu0 0.0
        %1053 = vmatpush1.msra.mxu0 0.0
        %1054 = vmatprep.subr.mxu0 0.0
        %1055 = vmatpush1.msra.mxu0 0.0
        %1056 = vmatprep.subr.mxu0 0.0
        %1057 = vmatpush1.msra.mxu0 0.0
        %1058 = vmatprep.subr.mxu0 0.0
        %1059 = vmatpush1.msra.mxu0 0.0
        %1060 = vmatprep.subr.mxu0 0.0
        %1061 = vmatpush1.msra.mxu0 0.0
        %1062 = vmatprep.subr.mxu0 %v1030
        %1063 = vmatpush1.msra.mxu0 %v1028
        %1064 = vmatprep.subr.mxu0 0.0
        %1065 = vmatpush2.msra.mxu0 0.0
        %1066 = vmatprep.subr.mxu0 0.0
        %1067 = vmatpush2.msra.mxu0 0.0
        %1068 = vmatprep.subr.mxu0 0.0
        %1069 = vmatpush2.msra.mxu0 0.0
        %1070 = vmatprep.subr.mxu0 0.0
        %1071 = vmatpush2.msra.mxu0 0.0
        %1072 = vmatprep.subr.mxu0 0.0
        %1073 = vmatpush2.msra.mxu0 0.0
        %1074 = vmatprep.subr.mxu0 0.0
        %1075 = vmatpush2.msra.mxu0 0.0
        %1076 = vmatprep.subr.mxu0 0.0
        %1077 = vmatpush2.msra.mxu0 0.0
        %1078 = vmatprep.subr.mxu0 0.0
        %1079 = vmatpush2.msra.mxu0 0.0
        %1080 = vmatprep.subr.mxu0 0.0
        %1081 = vmatpush2.msra.mxu0 0.0
        %1082 = vmatprep.subr.mxu0 0.0
        %1083 = vmatpush2.msra.mxu0 0.0
        %1084 = vmatprep.subr.mxu0 0.0
        %1085 = vmatpush2.msra.mxu0 0.0
        %1086 = vmatprep.subr.mxu0 0.0
        %1087 = vmatpush2.msra.mxu0 0.0
        %1088 = vmatprep.subr.mxu0 0.0
        %1089 = vmatpush2.msra.mxu0 0.0
        %1090 = vmatprep.subr.mxu0 0.0
        %1091 = vmatpush2.msra.mxu0 0.0
        %1092 = vmatprep.subr.mxu0 0.0
        %1093 = vmatpush2.msra.mxu0 0.0
        %1094 = vmatprep.subr.mxu0 0.0
        %1095 = vmatpush2.msra.mxu0 0.0
        %1096 = vmatprep.mubr.f32.mxu0 0.0
        %1097 = vmatmul.mubr.f32.gmra.mxu0 %v1026
        %v1098 = vpop.f32.mrf.mxu0
        %v1099 = vadd.f32 %v1020, %v1098
        %v1100 = vpop.f32.mrf.mxu0
        %v1101 = vadd.f32 %v1020, %v1100
        %1102 = vdwg.mxu0
        %s1103 = scalar_lea.vmem %s9, 4
        %v1104 = vld [vmem:[%s1103] sm:$0xf]
        %1106 = vset.pattern.permute.xlu0 4
        %1107 = vperm.xlu0 %1106, %v553
        %v1108 = vpop.permute.xlu0 %1107
        %v1110 = vunpack.c.l.s4 839922192
        %v1111 = vunpack.c.0.s8 %v1110
        %v1112 = vlaneseq
        %v1113 = vshrl.u32 %v1112, 7
        %v1114 = vsub.s32 %v1111, %v1113
        %v1115 = vrot.slane %v1108, %v1114
        %v1117 = vmul.f32 %v738, %v1115
        %1118 = vset.pattern.permute.xlu0 3
        %1119 = vperm.xlu0 %1118, %v550
        %v1120 = vpop.permute.xlu0 %1119
        %v1122 = vunpack.c.l.s4 839922192
        %v1123 = vunpack.c.0.s8 %v1122
        %v1124 = vlaneseq
        %v1125 = vshrl.u32 %v1124, 7
        %v1126 = vsub.s32 %v1123, %v1125
        %v1127 = vrot.slane %v1120, %v1126
        %v1129 = vadd.f32 %v1117, %v1127
        %v1131 = vcombine.high %v738, %v738
        %1133 = vrot.lane.b32.xlu0 %v738, 10
        %v1134 = vpop.permute.xlu0 %1133
        %1135 = vrot.lane.b32.xlu0 %v1131, 10
        %v1136 = vpop.permute.xlu0 %1135
        %v1137 = vsel %vm774, %v1134, %v1136
        %v1138 = vsel %vm774, %v1136, %v1134
        %v1139 = vmul.f32 %v1138, %v781
        %v1140 = vmul.f32 %v1137, %v785
        %1141 = vset.pattern.permute.xlu0 0
        %1142 = vperm.xlu0 %1141, %v553
        %v1143 = vpop.permute.xlu0 %1142
        %v1145 = vmul.f32 %v1139, %v1143
        %v1146 = vmul.f32 %v1140, %v1143
        %v1149 = vcombine.low %v1145, %v1146
        %v1151 = vadd.f32 %v1129, %v1149
        %1152 = vrot.lane.b32.xlu0 %v738, 9
        %v1153 = vpop.permute.xlu0 %1152
        %1154 = vrot.lane.b32.xlu0 %v1131, 9
        %v1155 = vpop.permute.xlu0 %1154
        %v1156 = vsel %vm805, %v1153, %v1155
        %v1157 = vsel %vm805, %v1155, %v1153
        %v1158 = vmul.f32 %v1157, %v812
        %v1159 = vmul.f32 %v1156, %v816
        %1160 = vset.pattern.permute.xlu0 1
        %1161 = vperm.xlu0 %1160, %v553
        %v1162 = vpop.permute.xlu0 %1161
        %v1164 = vmul.f32 %v1158, %v1162
        %v1165 = vmul.f32 %v1159, %v1162
        %v1168 = vcombine.low %v1164, %v1165
        %v1170 = vadd.f32 %v1151, %v1168
        %1171 = vrot.lane.b32.xlu0 %v738, 8
        %v1172 = vpop.permute.xlu0 %1171
        %1173 = vrot.lane.b32.xlu0 %v1131, 8
        %v1174 = vpop.permute.xlu0 %1173
        %v1175 = vsel %vm836, %v1172, %v1174
        %v1176 = vsel %vm836, %v1174, %v1172
        %v1177 = vmul.f32 %v1176, %v843
        %v1178 = vmul.f32 %v1175, %v847
        %1179 = vset.pattern.permute.xlu0 2
        %1180 = vperm.xlu0 %1179, %v553
        %v1181 = vpop.permute.xlu0 %1180
        %v1183 = vmul.f32 %v1177, %v1181
        %v1184 = vmul.f32 %v1178, %v1181
        %v1187 = vcombine.low %v1183, %v1184
        %v1189 = vadd.f32 %v1170, %v1187
        %1190 = vrot.lane.b32.xlu0 %v738, 1
        %v1191 = vpop.permute.xlu0 %1190
        %1192 = vrot.lane.b32.xlu0 %v1131, 1
        %v1193 = vpop.permute.xlu0 %1192
        %v1194 = vsel %vm867, %v1191, %v1193
        %v1195 = vsel %vm867, %v1193, %v1191
        %v1196 = vmul.f32 %v1195, %v874
        %v1197 = vmul.f32 %v1194, %v878
        %1198 = vset.pattern.permute.xlu0 3
        %1199 = vperm.xlu0 %1198, %v553
        %v1200 = vpop.permute.xlu0 %1199
        %v1202 = vmul.f32 %v1196, %v1200
        %v1203 = vmul.f32 %v1197, %v1200
        %v1206 = vcombine.low %v1202, %v1203
        %v1208 = vadd.f32 %v1189, %v1206
        %1209 = vrot.lane.b32.xlu0 %v738, 127
        %v1210 = vpop.permute.xlu0 %1209
        %1211 = vrot.lane.b32.xlu0 %v1131, 127
        %v1212 = vpop.permute.xlu0 %1211
        %v1213 = vsel %vm898, %v1210, %v1212
        %v1214 = vsel %vm898, %v1212, %v1210
        %v1215 = vmul.f32 %v1213, %v905
        %v1216 = vmul.f32 %v1214, %v909
        %1217 = vset.pattern.permute.xlu0 5
        %1218 = vperm.xlu0 %1217, %v553
        %v1219 = vpop.permute.xlu0 %1218
        %v1221 = vmul.f32 %v1215, %v1219
        %v1222 = vmul.f32 %v1216, %v1219
        %v1225 = vcombine.low %v1221, %v1222
        %v1227 = vadd.f32 %v1208, %v1225
        %1228 = vrot.lane.b32.xlu0 %v738, 120
        %v1229 = vpop.permute.xlu0 %1228
        %1230 = vrot.lane.b32.xlu0 %v1131, 120
        %v1231 = vpop.permute.xlu0 %1230
        %v1232 = vsel %vm929, %v1229, %v1231
        %v1233 = vsel %vm929, %v1231, %v1229
        %v1234 = vmul.f32 %v1232, %v936
        %v1235 = vmul.f32 %v1233, %v940
        %1236 = vset.pattern.permute.xlu0 6
        %1237 = vperm.xlu0 %1236, %v553
        %v1238 = vpop.permute.xlu0 %1237
        %v1240 = vmul.f32 %v1234, %v1238
        %v1241 = vmul.f32 %v1235, %v1238
        %v1244 = vcombine.low %v1240, %v1241
        %v1246 = vadd.f32 %v1227, %v1244
        %1247 = vrot.lane.b32.xlu0 %v738, 119
        %v1248 = vpop.permute.xlu0 %1247
        %1249 = vrot.lane.b32.xlu0 %v1131, 119
        %v1250 = vpop.permute.xlu0 %1249
        %v1251 = vsel %vm960, %v1248, %v1250
        %v1252 = vsel %vm960, %v1250, %v1248
        %v1253 = vmul.f32 %v1251, %v967
        %v1254 = vmul.f32 %v1252, %v971
        %1255 = vset.pattern.permute.xlu0 7
        %1256 = vperm.xlu0 %1255, %v553
        %v1257 = vpop.permute.xlu0 %1256
        %v1259 = vmul.f32 %v1253, %v1257
        %v1260 = vmul.f32 %v1254, %v1257
        %v1263 = vcombine.low %v1259, %v1260
        %v1265 = vadd.f32 %v1246, %v1263
        %1266 = vrot.lane.b32.xlu0 %v738, 118
        %v1267 = vpop.permute.xlu0 %1266
        %1268 = vrot.lane.b32.xlu0 %v1131, 118
        %v1269 = vpop.permute.xlu0 %1268
        %v1270 = vsel %vm991, %v1267, %v1269
        %v1271 = vsel %vm991, %v1269, %v1267
        %v1272 = vmul.f32 %v1270, %v998
        %v1273 = vmul.f32 %v1271, %v1002
        %1274 = vset.pattern.permute.xlu0 8
        %1275 = vperm.xlu0 %1274, %v553
        %v1276 = vpop.permute.xlu0 %1275
        %v1278 = vmul.f32 %v1272, %v1276
        %v1279 = vmul.f32 %v1273, %v1276
        %v1282 = vcombine.low %v1278, %v1279
        %v1284 = vadd.f32 %v1265, %v1282
        %1285 = vset.pattern.permute.xlu0 4
        %1286 = vperm.xlu0 %1285, %v550
        %v1287 = vpop.permute.xlu0 %1286
        %v1290 = vcombine.high %v1284, %v1284
        %v1292 = vsel %vm1024, %v1104, 0
        %v1294 = vsel %vm559, %v1284, 0
        %v1296 = vsel %vm559, %v1290, 0
        %1298 = vmatprep.subr.mxu0 0.0
        %1299 = vmatpush1.msra.mxu0 0.0
        %1300 = vmatprep.subr.mxu0 0.0
        %1301 = vmatpush1.msra.mxu0 0.0
        %1302 = vmatprep.subr.mxu0 0.0
        %1303 = vmatpush1.msra.mxu0 0.0
        %1304 = vmatprep.subr.mxu0 0.0
        %1305 = vmatpush1.msra.mxu0 0.0
        %1306 = vmatprep.subr.mxu0 0.0
        %1307 = vmatpush1.msra.mxu0 0.0
        %1308 = vmatprep.subr.mxu0 0.0
        %1309 = vmatpush1.msra.mxu0 0.0
        %1310 = vmatprep.subr.mxu0 0.0
        %1311 = vmatpush1.msra.mxu0 0.0
        %1312 = vmatprep.subr.mxu0 0.0
        %1313 = vmatpush1.msra.mxu0 0.0
        %1314 = vmatprep.subr.mxu0 0.0
        %1315 = vmatpush1.msra.mxu0 0.0
        %1316 = vmatprep.subr.mxu0 0.0
        %1317 = vmatpush1.msra.mxu0 0.0
        %1318 = vmatprep.subr.mxu0 0.0
        %1319 = vmatpush1.msra.mxu0 0.0
        %1320 = vmatprep.subr.mxu0 0.0
        %1321 = vmatpush1.msra.mxu0 0.0
        %1322 = vmatprep.subr.mxu0 0.0
        %1323 = vmatpush1.msra.mxu0 0.0
        %1324 = vmatprep.subr.mxu0 0.0
        %1325 = vmatpush1.msra.mxu0 0.0
        %1326 = vmatprep.subr.mxu0 0.0
        %1327 = vmatpush1.msra.mxu0 0.0
        %1328 = vmatprep.subr.mxu0 %v1296
        %1329 = vmatpush1.msra.mxu0 %v1294
        %1330 = vmatprep.subr.mxu0 0.0
        %1331 = vmatpush2.msra.mxu0 0.0
        %1332 = vmatprep.subr.mxu0 0.0
        %1333 = vmatpush2.msra.mxu0 0.0
        %1334 = vmatprep.subr.mxu0 0.0
        %1335 = vmatpush2.msra.mxu0 0.0
        %1336 = vmatprep.subr.mxu0 0.0
        %1337 = vmatpush2.msra.mxu0 0.0
        %1338 = vmatprep.subr.mxu0 0.0
        %1339 = vmatpush2.msra.mxu0 0.0
        %1340 = vmatprep.subr.mxu0 0.0
        %1341 = vmatpush2.msra.mxu0 0.0
        %1342 = vmatprep.subr.mxu0 0.0
        %1343 = vmatpush2.msra.mxu0 0.0
        %1344 = vmatprep.subr.mxu0 0.0
        %1345 = vmatpush2.msra.mxu0 0.0
        %1346 = vmatprep.subr.mxu0 0.0
        %1347 = vmatpush2.msra.mxu0 0.0
        %1348 = vmatprep.subr.mxu0 0.0
        %1349 = vmatpush2.msra.mxu0 0.0
        %1350 = vmatprep.subr.mxu0 0.0
        %1351 = vmatpush2.msra.mxu0 0.0
        %1352 = vmatprep.subr.mxu0 0.0
        %1353 = vmatpush2.msra.mxu0 0.0
        %1354 = vmatprep.subr.mxu0 0.0
        %1355 = vmatpush2.msra.mxu0 0.0
        %1356 = vmatprep.subr.mxu0 0.0
        %1357 = vmatpush2.msra.mxu0 0.0
        %1358 = vmatprep.subr.mxu0 0.0
        %1359 = vmatpush2.msra.mxu0 0.0
        %1360 = vmatprep.subr.mxu0 0.0
        %1361 = vmatpush2.msra.mxu0 0.0
        %1362 = vmatprep.mubr.f32.mxu0 0.0
        %1363 = vmatmul.mubr.f32.gmra.mxu0 %v1292
        %v1364 = vpop.f32.mrf.mxu0
        %v1365 = vadd.f32 %v1287, %v1364
        %v1366 = vpop.f32.mrf.mxu0
        %v1367 = vadd.f32 %v1287, %v1366
        %1368 = vdwg.mxu0
        %v1369 = vsel %vm559, %v1099, 0.0
        %v1370 = vrot.slane %v1369, 4
        %v1371 = vadd.f32 %v1369, %v1370
        %v1372 = vrot.slane %v1371, 2
        %v1373 = vadd.f32 %v1371, %v1372
        %v1374 = vrot.slane %v1373, 1
        %v1375 = vadd.f32 %v1373, %v1374
        %v1376 = vsel %vm559, %v1101, 0.0
        %v1377 = vrot.slane %v1376, 4
        %v1378 = vadd.f32 %v1376, %v1377
        %v1379 = vrot.slane %v1378, 2
        %v1380 = vadd.f32 %v1378, %v1379
        %v1381 = vrot.slane %v1380, 1
        %v1382 = vadd.f32 %v1380, %v1381
        %v1383 = vsel %vm559, %v1365, 0.0
        %v1384 = vrot.slane %v1383, 4
        %v1385 = vadd.f32 %v1383, %v1384
        %v1386 = vrot.slane %v1385, 2
        %v1387 = vadd.f32 %v1385, %v1386
        %v1388 = vrot.slane %v1387, 1
        %v1389 = vadd.f32 %v1387, %v1388
        %v1390 = vsel %vm559, %v1367, 0.0
        %v1391 = vrot.slane %v1390, 4
        %v1392 = vadd.f32 %v1390, %v1391
        %v1393 = vrot.slane %v1392, 2
        %v1394 = vadd.f32 %v1392, %v1393
        %v1395 = vrot.slane %v1394, 1
        %v1396 = vadd.f32 %v1394, %v1395
        %v1397 = vadd.f32 %v1375, %v1389
        %v1398 = vadd.f32 %v1382, %v1396
        %v1399 = vmul.f32 %v1397, 0.125
        %v1400 = vmul.f32 %v1398, 0.125
        %v1401 = vsub.f32 %v1099, %v1399
        %v1402 = vsub.f32 %v1101, %v1400
        %v1403 = vmul.f32 %v1401, %v1401
        %v1404 = vmul.f32 %v1402, %v1402
        %v1405 = vsel %vm559, %v1403, 0.0
        %v1406 = vrot.slane %v1405, 4
        %v1407 = vadd.f32 %v1405, %v1406
        %v1408 = vrot.slane %v1407, 2
        %v1409 = vadd.f32 %v1407, %v1408
        %v1410 = vrot.slane %v1409, 1
        %v1411 = vadd.f32 %v1409, %v1410
        %v1412 = vsel %vm559, %v1404, 0.0
        %v1413 = vrot.slane %v1412, 4
        %v1414 = vadd.f32 %v1412, %v1413
        %v1415 = vrot.slane %v1414, 2
        %v1416 = vadd.f32 %v1414, %v1415
        %v1417 = vrot.slane %v1416, 1
        %v1418 = vadd.f32 %v1416, %v1417
        %v1419 = vsub.f32 %v1365, %v1399
        %v1420 = vsub.f32 %v1367, %v1400
        %v1421 = vmul.f32 %v1419, %v1419
        %v1422 = vmul.f32 %v1420, %v1420
        %v1423 = vsel %vm559, %v1421, 0.0
        %v1424 = vrot.slane %v1423, 4
        %v1425 = vadd.f32 %v1423, %v1424
        %v1426 = vrot.slane %v1425, 2
        %v1427 = vadd.f32 %v1425, %v1426
        %v1428 = vrot.slane %v1427, 1
        %v1429 = vadd.f32 %v1427, %v1428
        %v1430 = vsel %vm559, %v1422, 0.0
        %v1431 = vrot.slane %v1430, 4
        %v1432 = vadd.f32 %v1430, %v1431
        %v1433 = vrot.slane %v1432, 2
        %v1434 = vadd.f32 %v1432, %v1433
        %v1435 = vrot.slane %v1434, 1
        %v1436 = vadd.f32 %v1434, %v1435
        %v1437 = vadd.f32 %v1411, %v1429
        %v1438 = vadd.f32 %v1418, %v1436
        %v1439 = vmul.f32 %v1437, 0.125
        %v1440 = vmul.f32 %v1438, 0.125
        %v1441 = vadd.f32 %v1439, 1e-06
        %v1442 = vadd.f32 %v1440, 1e-06
        %v1443 = vrsqrt.pop %v1441
        %v1444 = vrsqrt.pop %v1442
        %v1445 = vmul.f32 %v1401, %v1443
        %v1446 = vmul.f32 %v1402, %v1444
        %1447 = vset.pattern.permute.xlu0 5
        %1448 = vperm.xlu0 %1447, %v549
        %v1449 = vpop.permute.xlu0 %1448
        %v1451 = vmul.f32 %v1445, %v1449
        %v1452 = vmul.f32 %v1446, %v1449
        %1453 = vset.pattern.permute.xlu0 6
        %1454 = vperm.xlu0 %1453, %v549
        %v1455 = vpop.permute.xlu0 %1454
        %v1457 = vadd.f32 %v1451, %v1455
        %v1458 = vadd.f32 %v1452, %v1455
        %v1459 = vmul.f32 %v1419, %v1443
        %v1460 = vmul.f32 %v1420, %v1444
        %1461 = vset.pattern.permute.xlu0 5
        %1462 = vperm.xlu0 %1461, %v550
        %v1463 = vpop.permute.xlu0 %1462
        %v1465 = vmul.f32 %v1459, %v1463
        %v1466 = vmul.f32 %v1460, %v1463
        %1467 = vset.pattern.permute.xlu0 6
        %1468 = vperm.xlu0 %1467, %v550
        %v1469 = vpop.permute.xlu0 %1468
        %v1471 = vadd.f32 %v1465, %v1469
        %v1472 = vadd.f32 %v1466, %v1469
        %1473 = vset.pattern.permute.xlu0 13
        %1474 = vperm.xlu0 %1473, %v552
        %v1475 = vpop.permute.xlu0 %1474
        %v1477 = vmul.f32 %v1457, %v1475
        %v1478 = vmul.f32 %v1458, %v1475
        %1479 = vset.pattern.permute.xlu0 7
        %1480 = vperm.xlu0 %1479, %v549
        %v1481 = vpop.permute.xlu0 %1480
        %v1483 = vadd.f32 %v1477, %v1481
        %v1484 = vadd.f32 %v1478, %v1481
        %1485 = vrot.lane.b32.xlu0 %v1457, 10
        %v1486 = vpop.permute.xlu0 %1485
        %1487 = vrot.lane.b32.xlu0 %v1458, 10
        %v1488 = vpop.permute.xlu0 %1487
        %v1489 = vsel %vm774, %v1486, %v1488
        %v1490 = vsel %vm774, %v1488, %v1486
        %v1491 = vmul.f32 %v1490, %v781
        %v1492 = vmul.f32 %v1489, %v785
        %1493 = vset.pattern.permute.xlu0 9
        %1494 = vperm.xlu0 %1493, %v552
        %v1495 = vpop.permute.xlu0 %1494
        %v1497 = vmul.f32 %v1491, %v1495
        %v1498 = vmul.f32 %v1492, %v1495
        %v1499 = vadd.f32 %v1483, %v1497
        %v1500 = vadd.f32 %v1484, %v1498
        %1501 = vrot.lane.b32.xlu0 %v1457, 9
        %v1502 = vpop.permute.xlu0 %1501
        %1503 = vrot.lane.b32.xlu0 %v1458, 9
        %v1504 = vpop.permute.xlu0 %1503
        %v1505 = vsel %vm805, %v1502, %v1504
        %v1506 = vsel %vm805, %v1504, %v1502
        %v1507 = vmul.f32 %v1506, %v812
        %v1508 = vmul.f32 %v1505, %v816
        %1509 = vset.pattern.permute.xlu0 10
        %1510 = vperm.xlu0 %1509, %v552
        %v1511 = vpop.permute.xlu0 %1510
        %v1513 = vmul.f32 %v1507, %v1511
        %v1514 = vmul.f32 %v1508, %v1511
        %v1515 = vadd.f32 %v1499, %v1513
        %v1516 = vadd.f32 %v1500, %v1514
        %1517 = vrot.lane.b32.xlu0 %v1457, 8
        %v1518 = vpop.permute.xlu0 %1517
        %1519 = vrot.lane.b32.xlu0 %v1458, 8
        %v1520 = vpop.permute.xlu0 %1519
        %v1521 = vsel %vm836, %v1518, %v1520
        %v1522 = vsel %vm836, %v1520, %v1518
        %v1523 = vmul.f32 %v1522, %v843
        %v1524 = vmul.f32 %v1521, %v847
        %1525 = vset.pattern.permute.xlu0 11
        %1526 = vperm.xlu0 %1525, %v552
        %v1527 = vpop.permute.xlu0 %1526
        %v1529 = vmul.f32 %v1523, %v1527
        %v1530 = vmul.f32 %v1524, %v1527
        %v1531 = vadd.f32 %v1515, %v1529
        %v1532 = vadd.f32 %v1516, %v1530
        %1533 = vrot.lane.b32.xlu0 %v1457, 1
        %v1534 = vpop.permute.xlu0 %1533
        %1535 = vrot.lane.b32.xlu0 %v1458, 1
        %v1536 = vpop.permute.xlu0 %1535
        %v1537 = vsel %vm867, %v1534, %v1536
        %v1538 = vsel %vm867, %v1536, %v1534
        %v1539 = vmul.f32 %v1538, %v874
        %v1540 = vmul.f32 %v1537, %v878
        %1541 = vset.pattern.permute.xlu0 12
        %1542 = vperm.xlu0 %1541, %v552
        %v1543 = vpop.permute.xlu0 %1542
        %v1545 = vmul.f32 %v1539, %v1543
        %v1546 = vmul.f32 %v1540, %v1543
        %v1547 = vadd.f32 %v1531, %v1545
        %v1548 = vadd.f32 %v1532, %v1546
        %1549 = vrot.lane.b32.xlu0 %v1457, 127
        %v1550 = vpop.permute.xlu0 %1549
        %1551 = vrot.lane.b32.xlu0 %v1458, 127
        %v1552 = vpop.permute.xlu0 %1551
        %v1553 = vsel %vm898, %v1550, %v1552
        %v1554 = vsel %vm898, %v1552, %v1550
        %v1555 = vmul.f32 %v1553, %v905
        %v1556 = vmul.f32 %v1554, %v909
        %1557 = vset.pattern.permute.xlu0 14
        %1558 = vperm.xlu0 %1557, %v552
        %v1559 = vpop.permute.xlu0 %1558
        %v1561 = vmul.f32 %v1555, %v1559
        %v1562 = vmul.f32 %v1556, %v1559
        %v1563 = vadd.f32 %v1547, %v1561
        %v1564 = vadd.f32 %v1548, %v1562
        %1565 = vrot.lane.b32.xlu0 %v1457, 120
        %v1566 = vpop.permute.xlu0 %1565
        %1567 = vrot.lane.b32.xlu0 %v1458, 120
        %v1568 = vpop.permute.xlu0 %1567
        %v1569 = vsel %vm929, %v1566, %v1568
        %v1570 = vsel %vm929, %v1568, %v1566
        %v1571 = vmul.f32 %v1569, %v936
        %v1572 = vmul.f32 %v1570, %v940
        %1573 = vset.pattern.permute.xlu0 15
        %1574 = vperm.xlu0 %1573, %v552
        %v1575 = vpop.permute.xlu0 %1574
        %v1577 = vmul.f32 %v1571, %v1575
        %v1578 = vmul.f32 %v1572, %v1575
        %v1579 = vadd.f32 %v1563, %v1577
        %v1580 = vadd.f32 %v1564, %v1578
        %1581 = vrot.lane.b32.xlu0 %v1457, 119
        %v1582 = vpop.permute.xlu0 %1581
        %1583 = vrot.lane.b32.xlu0 %v1458, 119
        %v1584 = vpop.permute.xlu0 %1583
        %v1585 = vsel %vm960, %v1582, %v1584
        %v1586 = vsel %vm960, %v1584, %v1582
        %v1587 = vmul.f32 %v1585, %v967
        %v1588 = vmul.f32 %v1586, %v971
        %1589 = vset.pattern.permute.xlu0 16
        %1590 = vperm.xlu0 %1589, %v552
        %v1591 = vpop.permute.xlu0 %1590
        %v1593 = vmul.f32 %v1587, %v1591
        %v1594 = vmul.f32 %v1588, %v1591
        %v1595 = vadd.f32 %v1579, %v1593
        %v1596 = vadd.f32 %v1580, %v1594
        %1597 = vrot.lane.b32.xlu0 %v1457, 118
        %v1598 = vpop.permute.xlu0 %1597
        %1599 = vrot.lane.b32.xlu0 %v1458, 118
        %v1600 = vpop.permute.xlu0 %1599
        %v1601 = vsel %vm991, %v1598, %v1600
        %v1602 = vsel %vm991, %v1600, %v1598
        %v1603 = vmul.f32 %v1601, %v998
        %v1604 = vmul.f32 %v1602, %v1002
        %1605 = vset.pattern.permute.xlu0 17
        %1606 = vperm.xlu0 %1605, %v552
        %v1607 = vpop.permute.xlu0 %1606
        %v1609 = vmul.f32 %v1603, %v1607
        %v1610 = vmul.f32 %v1604, %v1607
        %v1611 = vadd.f32 %v1595, %v1609
        %v1612 = vadd.f32 %v1596, %v1610
        %1613 = vset.pattern.permute.xlu0 13
        %1614 = vperm.xlu0 %1613, %v553
        %v1615 = vpop.permute.xlu0 %1614
        %v1617 = vmul.f32 %v1471, %v1615
        %v1618 = vmul.f32 %v1472, %v1615
        %1619 = vset.pattern.permute.xlu0 7
        %1620 = vperm.xlu0 %1619, %v550
        %v1621 = vpop.permute.xlu0 %1620
        %v1623 = vadd.f32 %v1617, %v1621
        %v1624 = vadd.f32 %v1618, %v1621
        %1625 = vrot.lane.b32.xlu0 %v1471, 10
        %v1626 = vpop.permute.xlu0 %1625
        %1627 = vrot.lane.b32.xlu0 %v1472, 10
        %v1628 = vpop.permute.xlu0 %1627
        %v1629 = vsel %vm774, %v1626, %v1628
        %v1630 = vsel %vm774, %v1628, %v1626
        %v1631 = vmul.f32 %v1630, %v781
        %v1632 = vmul.f32 %v1629, %v785
        %1633 = vset.pattern.permute.xlu0 9
        %1634 = vperm.xlu0 %1633, %v553
        %v1635 = vpop.permute.xlu0 %1634
        %v1637 = vmul.f32 %v1631, %v1635
        %v1638 = vmul.f32 %v1632, %v1635
        %v1639 = vadd.f32 %v1623, %v1637
        %v1640 = vadd.f32 %v1624, %v1638
        %1641 = vrot.lane.b32.xlu0 %v1471, 9
        %v1642 = vpop.permute.xlu0 %1641
        %1643 = vrot.lane.b32.xlu0 %v1472, 9
        %v1644 = vpop.permute.xlu0 %1643
        %v1645 = vsel %vm805, %v1642, %v1644
        %v1646 = vsel %vm805, %v1644, %v1642
        %v1647 = vmul.f32 %v1646, %v812
        %v1648 = vmul.f32 %v1645, %v816
        %1649 = vset.pattern.permute.xlu0 10
        %1650 = vperm.xlu0 %1649, %v553
        %v1651 = vpop.permute.xlu0 %1650
        %v1653 = vmul.f32 %v1647, %v1651
        %v1654 = vmul.f32 %v1648, %v1651
        %v1655 = vadd.f32 %v1639, %v1653
        %v1656 = vadd.f32 %v1640, %v1654
        %1657 = vrot.lane.b32.xlu0 %v1471, 8
        %v1658 = vpop.permute.xlu0 %1657
        %1659 = vrot.lane.b32.xlu0 %v1472, 8
        %v1660 = vpop.permute.xlu0 %1659
        %v1661 = vsel %vm836, %v1658, %v1660
        %v1662 = vsel %vm836, %v1660, %v1658
        %v1663 = vmul.f32 %v1662, %v843
        %v1664 = vmul.f32 %v1661, %v847
        %1665 = vset.pattern.permute.xlu0 11
        %1666 = vperm.xlu0 %1665, %v553
        %v1667 = vpop.permute.xlu0 %1666
        %v1669 = vmul.f32 %v1663, %v1667
        %v1670 = vmul.f32 %v1664, %v1667
        %v1671 = vadd.f32 %v1655, %v1669
        %v1672 = vadd.f32 %v1656, %v1670
        %1673 = vrot.lane.b32.xlu0 %v1471, 1
        %v1674 = vpop.permute.xlu0 %1673
        %1675 = vrot.lane.b32.xlu0 %v1472, 1
        %v1676 = vpop.permute.xlu0 %1675
        %v1677 = vsel %vm867, %v1674, %v1676
        %v1678 = vsel %vm867, %v1676, %v1674
        %v1679 = vmul.f32 %v1678, %v874
        %v1680 = vmul.f32 %v1677, %v878
        %1681 = vset.pattern.permute.xlu0 12
        %1682 = vperm.xlu0 %1681, %v553
        %v1683 = vpop.permute.xlu0 %1682
        %v1685 = vmul.f32 %v1679, %v1683
        %v1686 = vmul.f32 %v1680, %v1683
        %v1687 = vadd.f32 %v1671, %v1685
        %v1688 = vadd.f32 %v1672, %v1686
        %1689 = vrot.lane.b32.xlu0 %v1471, 127
        %v1690 = vpop.permute.xlu0 %1689
        %1691 = vrot.lane.b32.xlu0 %v1472, 127
        %v1692 = vpop.permute.xlu0 %1691
        %v1693 = vsel %vm898, %v1690, %v1692
        %v1694 = vsel %vm898, %v1692, %v1690
        %v1695 = vmul.f32 %v1693, %v905
        %v1696 = vmul.f32 %v1694, %v909
        %1697 = vset.pattern.permute.xlu0 14
        %1698 = vperm.xlu0 %1697, %v553
        %v1699 = vpop.permute.xlu0 %1698
        %v1701 = vmul.f32 %v1695, %v1699
        %v1702 = vmul.f32 %v1696, %v1699
        %v1703 = vadd.f32 %v1687, %v1701
        %v1704 = vadd.f32 %v1688, %v1702
        %1705 = vrot.lane.b32.xlu0 %v1471, 120
        %v1706 = vpop.permute.xlu0 %1705
        %1707 = vrot.lane.b32.xlu0 %v1472, 120
        %v1708 = vpop.permute.xlu0 %1707
        %v1709 = vsel %vm929, %v1706, %v1708
        %v1710 = vsel %vm929, %v1708, %v1706
        %v1711 = vmul.f32 %v1709, %v936
        %v1712 = vmul.f32 %v1710, %v940
        %1713 = vset.pattern.permute.xlu0 15
        %1714 = vperm.xlu0 %1713, %v553
        %v1715 = vpop.permute.xlu0 %1714
        %v1717 = vmul.f32 %v1711, %v1715
        %v1718 = vmul.f32 %v1712, %v1715
        %v1719 = vadd.f32 %v1703, %v1717
        %v1720 = vadd.f32 %v1704, %v1718
        %1721 = vrot.lane.b32.xlu0 %v1471, 119
        %v1722 = vpop.permute.xlu0 %1721
        %1723 = vrot.lane.b32.xlu0 %v1472, 119
        %v1724 = vpop.permute.xlu0 %1723
        %v1725 = vsel %vm960, %v1722, %v1724
        %v1726 = vsel %vm960, %v1724, %v1722
        %v1727 = vmul.f32 %v1725, %v967
        %v1728 = vmul.f32 %v1726, %v971
        %1729 = vset.pattern.permute.xlu0 16
        %1730 = vperm.xlu0 %1729, %v553
        %v1731 = vpop.permute.xlu0 %1730
        %v1733 = vmul.f32 %v1727, %v1731
        %v1734 = vmul.f32 %v1728, %v1731
        %v1735 = vadd.f32 %v1719, %v1733
        %v1736 = vadd.f32 %v1720, %v1734
        %1737 = vrot.lane.b32.xlu0 %v1471, 118
        %v1738 = vpop.permute.xlu0 %1737
        %1739 = vrot.lane.b32.xlu0 %v1472, 118
        %v1740 = vpop.permute.xlu0 %1739
        %v1741 = vsel %vm991, %v1738, %v1740
        %v1742 = vsel %vm991, %v1740, %v1738
        %v1743 = vmul.f32 %v1741, %v998
        %v1744 = vmul.f32 %v1742, %v1002
        %1745 = vset.pattern.permute.xlu0 17
        %1746 = vperm.xlu0 %1745, %v553
        %v1747 = vpop.permute.xlu0 %1746
        %v1749 = vmul.f32 %v1743, %v1747
        %v1750 = vmul.f32 %v1744, %v1747
        %v1751 = vadd.f32 %v1735, %v1749
        %v1752 = vadd.f32 %v1736, %v1750
        %s1753 = scalar_lea.vmem %s9, 8
        %v1754 = vld [vmem:[%s1753] sm:$0xf]
        %1756 = vset.pattern.permute.xlu0 0
        %1757 = vperm.xlu0 %1756, %v551
        %v1758 = vpop.permute.xlu0 %1757
        %v1761 = vsel %vm1024, %v1754, 0
        %v1764 = vsel %vm559, %v1611, 0
        %v1767 = vsel %vm559, %v1612, 0
        %1769 = vmatprep.subr.mxu0 0.0
        %1770 = vmatpush1.msra.mxu0 0.0
        %1771 = vmatprep.subr.mxu0 0.0
        %1772 = vmatpush1.msra.mxu0 0.0
        %1773 = vmatprep.subr.mxu0 0.0
        %1774 = vmatpush1.msra.mxu0 0.0
        %1775 = vmatprep.subr.mxu0 0.0
        %1776 = vmatpush1.msra.mxu0 0.0
        %1777 = vmatprep.subr.mxu0 0.0
        %1778 = vmatpush1.msra.mxu0 0.0
        %1779 = vmatprep.subr.mxu0 0.0
        %1780 = vmatpush1.msra.mxu0 0.0
        %1781 = vmatprep.subr.mxu0 0.0
        %1782 = vmatpush1.msra.mxu0 0.0
        %1783 = vmatprep.subr.mxu0 0.0
        %1784 = vmatpush1.msra.mxu0 0.0
        %1785 = vmatprep.subr.mxu0 0.0
        %1786 = vmatpush1.msra.mxu0 0.0
        %1787 = vmatprep.subr.mxu0 0.0
        %1788 = vmatpush1.msra.mxu0 0.0
        %1789 = vmatprep.subr.mxu0 0.0
        %1790 = vmatpush1.msra.mxu0 0.0
        %1791 = vmatprep.subr.mxu0 0.0
        %1792 = vmatpush1.msra.mxu0 0.0
        %1793 = vmatprep.subr.mxu0 0.0
        %1794 = vmatpush1.msra.mxu0 0.0
        %1795 = vmatprep.subr.mxu0 0.0
        %1796 = vmatpush1.msra.mxu0 0.0
        %1797 = vmatprep.subr.mxu0 0.0
        %1798 = vmatpush1.msra.mxu0 0.0
        %1799 = vmatprep.subr.mxu0 %v1767
        %1800 = vmatpush1.msra.mxu0 %v1764
        %1801 = vmatprep.subr.mxu0 0.0
        %1802 = vmatpush2.msra.mxu0 0.0
        %1803 = vmatprep.subr.mxu0 0.0
        %1804 = vmatpush2.msra.mxu0 0.0
        %1805 = vmatprep.subr.mxu0 0.0
        %1806 = vmatpush2.msra.mxu0 0.0
        %1807 = vmatprep.subr.mxu0 0.0
        %1808 = vmatpush2.msra.mxu0 0.0
        %1809 = vmatprep.subr.mxu0 0.0
        %1810 = vmatpush2.msra.mxu0 0.0
        %1811 = vmatprep.subr.mxu0 0.0
        %1812 = vmatpush2.msra.mxu0 0.0
        %1813 = vmatprep.subr.mxu0 0.0
        %1814 = vmatpush2.msra.mxu0 0.0
        %1815 = vmatprep.subr.mxu0 0.0
        %1816 = vmatpush2.msra.mxu0 0.0
        %1817 = vmatprep.subr.mxu0 0.0
        %1818 = vmatpush2.msra.mxu0 0.0
        %1819 = vmatprep.subr.mxu0 0.0
        %1820 = vmatpush2.msra.mxu0 0.0
        %1821 = vmatprep.subr.mxu0 0.0
        %1822 = vmatpush2.msra.mxu0 0.0
        %1823 = vmatprep.subr.mxu0 0.0
        %1824 = vmatpush2.msra.mxu0 0.0
        %1825 = vmatprep.subr.mxu0 0.0
        %1826 = vmatpush2.msra.mxu0 0.0
        %1827 = vmatprep.subr.mxu0 0.0
        %1828 = vmatpush2.msra.mxu0 0.0
        %1829 = vmatprep.subr.mxu0 0.0
        %1830 = vmatpush2.msra.mxu0 0.0
        %1831 = vmatprep.subr.mxu0 0.0
        %1832 = vmatpush2.msra.mxu0 0.0
        %1833 = vmatprep.mubr.f32.mxu0 0.0
        %1834 = vmatmul.mubr.f32.gmra.mxu0 %v1761
        %v1835 = vpop.f32.mrf.mxu0
        %v1836 = vadd.f32 %v1758, %v1835
        %v1837 = vpop.f32.mrf.mxu0
        %v1838 = vadd.f32 %v1758, %v1837
        %1839 = vdwg.mxu0
        %s1840 = scalar_lea.vmem %s9, 12
        %v1841 = vld [vmem:[%s1840] sm:$0xf]
        %v1843 = vsel %vm1024, %v1841, 0
        %v1846 = vsel %vm559, %v1751, 0
        %v1849 = vsel %vm559, %v1752, 0
        %1851 = vmatprep.subr.mxu0 0.0
        %1852 = vmatpush1.msra.mxu0 0.0
        %1853 = vmatprep.subr.mxu0 0.0
        %1854 = vmatpush1.msra.mxu0 0.0
        %1855 = vmatprep.subr.mxu0 0.0
        %1856 = vmatpush1.msra.mxu0 0.0
        %1857 = vmatprep.subr.mxu0 0.0
        %1858 = vmatpush1.msra.mxu0 0.0
        %1859 = vmatprep.subr.mxu0 0.0
        %1860 = vmatpush1.msra.mxu0 0.0
        %1861 = vmatprep.subr.mxu0 0.0
        %1862 = vmatpush1.msra.mxu0 0.0
        %1863 = vmatprep.subr.mxu0 0.0
        %1864 = vmatpush1.msra.mxu0 0.0
        %1865 = vmatprep.subr.mxu0 0.0
        %1866 = vmatpush1.msra.mxu0 0.0
        %1867 = vmatprep.subr.mxu0 0.0
        %1868 = vmatpush1.msra.mxu0 0.0
        %1869 = vmatprep.subr.mxu0 0.0
        %1870 = vmatpush1.msra.mxu0 0.0
        %1871 = vmatprep.subr.mxu0 0.0
        %1872 = vmatpush1.msra.mxu0 0.0
        %1873 = vmatprep.subr.mxu0 0.0
        %1874 = vmatpush1.msra.mxu0 0.0
        %1875 = vmatprep.subr.mxu0 0.0
        %1876 = vmatpush1.msra.mxu0 0.0
        %1877 = vmatprep.subr.mxu0 0.0
        %1878 = vmatpush1.msra.mxu0 0.0
        %1879 = vmatprep.subr.mxu0 0.0
        %1880 = vmatpush1.msra.mxu0 0.0
        %1881 = vmatprep.subr.mxu0 %v1849
        %1882 = vmatpush1.msra.mxu0 %v1846
        %1883 = vmatprep.subr.mxu0 0.0
        %1884 = vmatpush2.msra.mxu0 0.0
        %1885 = vmatprep.subr.mxu0 0.0
        %1886 = vmatpush2.msra.mxu0 0.0
        %1887 = vmatprep.subr.mxu0 0.0
        %1888 = vmatpush2.msra.mxu0 0.0
        %1889 = vmatprep.subr.mxu0 0.0
        %1890 = vmatpush2.msra.mxu0 0.0
        %1891 = vmatprep.subr.mxu0 0.0
        %1892 = vmatpush2.msra.mxu0 0.0
        %1893 = vmatprep.subr.mxu0 0.0
        %1894 = vmatpush2.msra.mxu0 0.0
        %1895 = vmatprep.subr.mxu0 0.0
        %1896 = vmatpush2.msra.mxu0 0.0
        %1897 = vmatprep.subr.mxu0 0.0
        %1898 = vmatpush2.msra.mxu0 0.0
        %1899 = vmatprep.subr.mxu0 0.0
        %1900 = vmatpush2.msra.mxu0 0.0
        %1901 = vmatprep.subr.mxu0 0.0
        %1902 = vmatpush2.msra.mxu0 0.0
        %1903 = vmatprep.subr.mxu0 0.0
        %1904 = vmatpush2.msra.mxu0 0.0
        %1905 = vmatprep.subr.mxu0 0.0
        %1906 = vmatpush2.msra.mxu0 0.0
        %1907 = vmatprep.subr.mxu0 0.0
        %1908 = vmatpush2.msra.mxu0 0.0
        %1909 = vmatprep.subr.mxu0 0.0
        %1910 = vmatpush2.msra.mxu0 0.0
        %1911 = vmatprep.subr.mxu0 0.0
        %1912 = vmatpush2.msra.mxu0 0.0
        %1913 = vmatprep.subr.mxu0 0.0
        %1914 = vmatpush2.msra.mxu0 0.0
        %1915 = vmatprep.mubr.f32.mxu0 0.0
        %1916 = vmatmul.mubr.f32.gmra.mxu0 %v1843
        %v1917 = vpop.f32.mrf.mxu0
        %v1918 = vadd.f32 0.0, %v1917
        %v1919 = vpop.f32.mrf.mxu0
        %v1920 = vadd.f32 0.0, %v1919
        %1921 = vdwg.mxu0
        %v1922 = vadd.f32 %v1836, %v1918
        %v1923 = vadd.f32 %v1838, %v1920
        %s1924 = scalar_lea.vmem %s9, 28
        %v1925 = vld [vmem:[%s1924] sm:$0xf]
        %v1927 = vsel %vm1024, %v1925, 0
        %v1930 = vsel %vm559, %v1922, 0
        %v1933 = vsel %vm559, %v1923, 0
        %1935 = vmatprep.subr.mxu0 0.0
        %1936 = vmatpush1.msra.mxu0 0.0
        %1937 = vmatprep.subr.mxu0 0.0
        %1938 = vmatpush1.msra.mxu0 0.0
        %1939 = vmatprep.subr.mxu0 0.0
        %1940 = vmatpush1.msra.mxu0 0.0
        %1941 = vmatprep.subr.mxu0 0.0
        %1942 = vmatpush1.msra.mxu0 0.0
        %1943 = vmatprep.subr.mxu0 0.0
        %1944 = vmatpush1.msra.mxu0 0.0
        %1945 = vmatprep.subr.mxu0 0.0
        %1946 = vmatpush1.msra.mxu0 0.0
        %1947 = vmatprep.subr.mxu0 0.0
        %1948 = vmatpush1.msra.mxu0 0.0
        %1949 = vmatprep.subr.mxu0 0.0
        %1950 = vmatpush1.msra.mxu0 0.0
        %1951 = vmatprep.subr.mxu0 0.0
        %1952 = vmatpush1.msra.mxu0 0.0
        %1953 = vmatprep.subr.mxu0 0.0
        %1954 = vmatpush1.msra.mxu0 0.0
        %1955 = vmatprep.subr.mxu0 0.0
        %1956 = vmatpush1.msra.mxu0 0.0
        %1957 = vmatprep.subr.mxu0 0.0
        %1958 = vmatpush1.msra.mxu0 0.0
        %1959 = vmatprep.subr.mxu0 0.0
        %1960 = vmatpush1.msra.mxu0 0.0
        %1961 = vmatprep.subr.mxu0 0.0
        %1962 = vmatpush1.msra.mxu0 0.0
        %1963 = vmatprep.subr.mxu0 0.0
        %1964 = vmatpush1.msra.mxu0 0.0
        %1965 = vmatprep.subr.mxu0 %v1933
        %1966 = vmatpush1.msra.mxu0 %v1930
        %1967 = vmatprep.subr.mxu0 0.0
        %1968 = vmatpush2.msra.mxu0 0.0
        %1969 = vmatprep.subr.mxu0 0.0
        %1970 = vmatpush2.msra.mxu0 0.0
        %1971 = vmatprep.subr.mxu0 0.0
        %1972 = vmatpush2.msra.mxu0 0.0
        %1973 = vmatprep.subr.mxu0 0.0
        %1974 = vmatpush2.msra.mxu0 0.0
        %1975 = vmatprep.subr.mxu0 0.0
        %1976 = vmatpush2.msra.mxu0 0.0
        %1977 = vmatprep.subr.mxu0 0.0
        %1978 = vmatpush2.msra.mxu0 0.0
        %1979 = vmatprep.subr.mxu0 0.0
        %1980 = vmatpush2.msra.mxu0 0.0
        %1981 = vmatprep.subr.mxu0 0.0
        %1982 = vmatpush2.msra.mxu0 0.0
        %1983 = vmatprep.subr.mxu0 0.0
        %1984 = vmatpush2.msra.mxu0 0.0
        %1985 = vmatprep.subr.mxu0 0.0
        %1986 = vmatpush2.msra.mxu0 0.0
        %1987 = vmatprep.subr.mxu0 0.0
        %1988 = vmatpush2.msra.mxu0 0.0
        %1989 = vmatprep.subr.mxu0 0.0
        %1990 = vmatpush2.msra.mxu0 0.0
        %1991 = vmatprep.subr.mxu0 0.0
        %1992 = vmatpush2.msra.mxu0 0.0
        %1993 = vmatprep.subr.mxu0 0.0
        %1994 = vmatpush2.msra.mxu0 0.0
        %1995 = vmatprep.subr.mxu0 0.0
        %1996 = vmatpush2.msra.mxu0 0.0
        %1997 = vmatprep.subr.mxu0 0.0
        %1998 = vmatpush2.msra.mxu0 0.0
        %1999 = vmatprep.mubr.f32.mxu0 0.0
        %2000 = vmatmul.mubr.f32.gmra.mxu0 %v1927
        %v2001 = vpop.f32.mrf.mxu0
        %v2002 = vadd.f32 0.0, %v2001
        %v2003 = vpop.f32.mrf.mxu0
        %v2004 = vadd.f32 0.0, %v2003
        %2005 = vdwg.mxu0
        %v2007 = vlaneseq
        %v2008 = vshrl.u32 %v2007, 7
        %v2009 = vsub.s32 0, %v2008
        %v2010 = vrot.slane %v548, %v2009
        %v2011 = vlaneseq
        %v2012 = vshrl.u32 %v2011, 7
        %v2013 = vsub.s32 1, %v2012
        %v2014 = vrot.slane %v548, %v2013
        %v2017 = vmul.f32 %v2002, %v2010
        %v2018 = vmul.f32 %v2004, %v2014
        %v2019 = vsel %vm559, %v2017, 0.0
        %v2020 = vsel %vm559, %v2018, 0.0
        %v2021 = vadd.f32 %v2019, %v2020
        %2022 = vadd.xlane.f32.xlu0 %v2021
        %v2023 = vpop.xlane.xlu0 %2022
        %v2024 = vmul.f32 %v2023, 0.0069444445
        %v2025 = vadd.f32 %v2024, %v551
        %v2026 = vsel %vm559, %v1922, 0.0
        %v2027 = vrot.slane %v2026, 4
        %v2028 = vadd.f32 %v2026, %v2027
        %v2029 = vrot.slane %v2028, 2
        %v2030 = vadd.f32 %v2028, %v2029
        %v2031 = vrot.slane %v2030, 1
        %v2032 = vadd.f32 %v2030, %v2031
        %v2033 = vsel %vm559, %v1923, 0.0
        %v2034 = vrot.slane %v2033, 4
        %v2035 = vadd.f32 %v2033, %v2034
        %v2036 = vrot.slane %v2035, 2
        %v2037 = vadd.f32 %v2035, %v2036
        %v2038 = vrot.slane %v2037, 1
        %v2039 = vadd.f32 %v2037, %v2038
        %v2040 = vmul.f32 %v2032, %v574
        %v2041 = vmul.f32 %v2039, %v574
        %v2042 = vsel %vm559, %v1922, -inf
        %v2043 = vrot.slane %v2042, 4
        %v2044 = vmax.f32 %v2042, %v2043
        %v2045 = vrot.slane %v2044, 2
        %v2046 = vmax.f32 %v2044, %v2045
        %v2047 = vrot.slane %v2046, 1
        %v2048 = vmax.f32 %v2046, %v2047
        %v2049 = vsel %vm559, %v1923, -inf
        %v2050 = vrot.slane %v2049, 4
        %v2051 = vmax.f32 %v2049, %v2050
        %v2052 = vrot.slane %v2051, 2
        %v2053 = vmax.f32 %v2051, %v2052
        %v2054 = vrot.slane %v2053, 1
        %v2055 = vmax.f32 %v2053, %v2054
        %vm2056 = vcmask 1040384
        %v2057 = vsel %vm2056, %v2040, %v2048
        %v2058 = vsel %vm2056, %v2041, %v2055
        %s2059 = sld [smem:[#allocation2 + $0x8]]
        %v2060 = vstv %s2059
        %v2061 = vmul.f32 %v2057, %v2060
        %v2062 = vmul.f32 %v2058, %v2060
        %s2063 = sld [smem:[#allocation2 + $0x9]]
        %v2064 = vstv %s2063
        %v2065 = vmul.f32 %v2057, %v2064
        %v2066 = vmul.f32 %v2058, %v2064
        %v2069 = vrot.slane %v2065, 1
        %v2070 = vrot.slane %v2066, 1
        %v2073 = vadd.f32 %v2061, %v2069
        %v2074 = vadd.f32 %v2062, %v2070
        %2075 = vrot.lane.b32.xlu0 %v2057, 50
        %v2076 = vpop.permute.xlu0 %2075
        %2077 = vrot.lane.b32.xlu0 %v2058, 50
        %v2078 = vpop.permute.xlu0 %2077
        %vm2079 = vcmp.lt.s32.totalorder %v773, 50
        %v2080 = vsel %vm2079, %v2076, %v2078
        %v2081 = vsel %vm2079, %v2078, %v2076
        %v2083 = vlaneseq
        %v2084 = vshrl.u32 %v2083, 7
        %v2085 = vsub.s32 0, %v2084
        %v2086 = vrot.slane %v518, %v2085
        %v2087 = vlaneseq
        %v2088 = vshrl.u32 %v2087, 7
        %v2089 = vsub.s32 1, %v2088
        %v2090 = vrot.slane %v518, %v2089
        %v2093 = vmul.f32 %v2081, %v2086
        %v2094 = vmul.f32 %v2080, %v2090
        %s2095 = sld [smem:[#allocation2]]
        %v2096 = vstv %s2095
        %v2097 = vmul.f32 %v2093, %v2096
        %v2098 = vmul.f32 %v2094, %v2096
        %s2099 = sld [smem:[#allocation2 + $0x1]]
        %v2100 = vstv %s2099
        %v2101 = vmul.f32 %v2093, %v2100
        %v2102 = vmul.f32 %v2094, %v2100
        %v2105 = vrot.slane %v2101, 1
        %v2106 = vrot.slane %v2102, 1
        %v2109 = vadd.f32 %v2097, %v2105
        %v2110 = vadd.f32 %v2098, %v2106
        %v2111 = vadd.f32 %v2073, %v2109
        %v2112 = vadd.f32 %v2074, %v2110
        %2113 = vrot.lane.b32.xlu0 %v2057, 45
        %v2114 = vpop.permute.xlu0 %2113
        %2115 = vrot.lane.b32.xlu0 %v2058, 45
        %v2116 = vpop.permute.xlu0 %2115
        %vm2117 = vcmp.lt.s32.totalorder %v773, 45
        %v2118 = vsel %vm2117, %v2114, %v2116
        %v2119 = vsel %vm2117, %v2116, %v2114
        %v2121 = vlaneseq
        %v2122 = vshrl.u32 %v2121, 7
        %v2123 = vsub.s32 0, %v2122
        %v2124 = vrot.slane %v521, %v2123
        %v2125 = vlaneseq
        %v2126 = vshrl.u32 %v2125, 7
        %v2127 = vsub.s32 1, %v2126
        %v2128 = vrot.slane %v521, %v2127
        %v2131 = vmul.f32 %v2119, %v2124
        %v2132 = vmul.f32 %v2118, %v2128
        %s2133 = sld [smem:[#allocation2 + $0x2]]
        %v2134 = vstv %s2133
        %v2135 = vmul.f32 %v2131, %v2134
        %v2136 = vmul.f32 %v2132, %v2134
        %s2137 = sld [smem:[#allocation2 + $0x3]]
        %v2138 = vstv %s2137
        %v2139 = vmul.f32 %v2131, %v2138
        %v2140 = vmul.f32 %v2132, %v2138
        %v2143 = vrot.slane %v2139, 1
        %v2144 = vrot.slane %v2140, 1
        %v2147 = vadd.f32 %v2135, %v2143
        %v2148 = vadd.f32 %v2136, %v2144
        %v2149 = vadd.f32 %v2111, %v2147
        %v2150 = vadd.f32 %v2112, %v2148
        %2151 = vrot.lane.b32.xlu0 %v2057, 40
        %v2152 = vpop.permute.xlu0 %2151
        %2153 = vrot.lane.b32.xlu0 %v2058, 40
        %v2154 = vpop.permute.xlu0 %2153
        %vm2155 = vcmp.lt.s32.totalorder %v773, 40
        %v2156 = vsel %vm2155, %v2152, %v2154
        %v2157 = vsel %vm2155, %v2154, %v2152
        %v2159 = vlaneseq
        %v2160 = vshrl.u32 %v2159, 7
        %v2161 = vsub.s32 0, %v2160
        %v2162 = vrot.slane %v527, %v2161
        %v2163 = vlaneseq
        %v2164 = vshrl.u32 %v2163, 7
        %v2165 = vsub.s32 1, %v2164
        %v2166 = vrot.slane %v527, %v2165
        %v2169 = vmul.f32 %v2157, %v2162
        %v2170 = vmul.f32 %v2156, %v2166
        %s2171 = sld [smem:[#allocation2 + $0x4]]
        %v2172 = vstv %s2171
        %v2173 = vmul.f32 %v2169, %v2172
        %v2174 = vmul.f32 %v2170, %v2172
        %s2175 = sld [smem:[#allocation2 + $0x5]]
        %v2176 = vstv %s2175
        %v2177 = vmul.f32 %v2169, %v2176
        %v2178 = vmul.f32 %v2170, %v2176
        %v2181 = vrot.slane %v2177, 1
        %v2182 = vrot.slane %v2178, 1
        %v2185 = vadd.f32 %v2173, %v2181
        %v2186 = vadd.f32 %v2174, %v2182
        %v2187 = vadd.f32 %v2149, %v2185
        %v2188 = vadd.f32 %v2150, %v2186
        %2189 = vrot.lane.b32.xlu0 %v2057, 5
        %v2190 = vpop.permute.xlu0 %2189
        %2191 = vrot.lane.b32.xlu0 %v2058, 5
        %v2192 = vpop.permute.xlu0 %2191
        %vm2193 = vcmp.lt.s32.totalorder %v773, 5
        %v2194 = vsel %vm2193, %v2190, %v2192
        %v2195 = vsel %vm2193, %v2192, %v2190
        %v2197 = vlaneseq
        %v2198 = vshrl.u32 %v2197, 7
        %v2199 = vsub.s32 0, %v2198
        %v2200 = vrot.slane %v530, %v2199
        %v2201 = vlaneseq
        %v2202 = vshrl.u32 %v2201, 7
        %v2203 = vsub.s32 1, %v2202
        %v2204 = vrot.slane %v530, %v2203
        %v2207 = vmul.f32 %v2195, %v2200
        %v2208 = vmul.f32 %v2194, %v2204
        %s2209 = sld [smem:[#allocation2 + $0x6]]
        %v2210 = vstv %s2209
        %v2211 = vmul.f32 %v2207, %v2210
        %v2212 = vmul.f32 %v2208, %v2210
        %s2213 = sld [smem:[#allocation2 + $0x7]]
        %v2214 = vstv %s2213
        %v2215 = vmul.f32 %v2207, %v2214
        %v2216 = vmul.f32 %v2208, %v2214
        %v2219 = vrot.slane %v2215, 1
        %v2220 = vrot.slane %v2216, 1
        %v2223 = vadd.f32 %v2211, %v2219
        %v2224 = vadd.f32 %v2212, %v2220
        %v2225 = vadd.f32 %v2187, %v2223
        %v2226 = vadd.f32 %v2188, %v2224
        %2227 = vrot.lane.b32.xlu0 %v2057, 123
        %v2228 = vpop.permute.xlu0 %2227
        %2229 = vrot.lane.b32.xlu0 %v2058, 123
        %v2230 = vpop.permute.xlu0 %2229
        %vm2231 = vcmp.lt.s32.totalorder %v773, 123
        %v2232 = vsel %vm2231, %v2228, %v2230
        %v2233 = vsel %vm2231, %v2230, %v2228
        %v2235 = vlaneseq
        %v2236 = vshrl.u32 %v2235, 7
        %v2237 = vsub.s32 0, %v2236
        %v2238 = vrot.slane %v533, %v2237
        %v2239 = vlaneseq
        %v2240 = vshrl.u32 %v2239, 7
        %v2241 = vsub.s32 1, %v2240
        %v2242 = vrot.slane %v533, %v2241
        %v2245 = vmul.f32 %v2232, %v2238
        %v2246 = vmul.f32 %v2233, %v2242
        %s2247 = sld [smem:[#allocation2 + $0xa]]
        %v2248 = vstv %s2247
        %v2249 = vmul.f32 %v2245, %v2248
        %v2250 = vmul.f32 %v2246, %v2248
        %s2251 = sld [smem:[#allocation2 + $0xb]]
        %v2252 = vstv %s2251
        %v2253 = vmul.f32 %v2245, %v2252
        %v2254 = vmul.f32 %v2246, %v2252
        %v2257 = vrot.slane %v2253, 1
        %v2258 = vrot.slane %v2254, 1
        %v2261 = vadd.f32 %v2249, %v2257
        %v2262 = vadd.f32 %v2250, %v2258
        %v2263 = vadd.f32 %v2225, %v2261
        %v2264 = vadd.f32 %v2226, %v2262
        %2265 = vrot.lane.b32.xlu0 %v2057, 88
        %v2266 = vpop.permute.xlu0 %2265
        %2267 = vrot.lane.b32.xlu0 %v2058, 88
        %v2268 = vpop.permute.xlu0 %2267
        %vm2269 = vcmp.lt.s32.totalorder %v773, 88
        %v2270 = vsel %vm2269, %v2266, %v2268
        %v2271 = vsel %vm2269, %v2268, %v2266
        %v2273 = vlaneseq
        %v2274 = vshrl.u32 %v2273, 7
        %v2275 = vsub.s32 0, %v2274
        %v2276 = vrot.slane %v540, %v2275
        %v2277 = vlaneseq
        %v2278 = vshrl.u32 %v2277, 7
        %v2279 = vsub.s32 1, %v2278
        %v2280 = vrot.slane %v540, %v2279
        %v2283 = vmul.f32 %v2270, %v2276
        %v2284 = vmul.f32 %v2271, %v2280
        %s2285 = sld [smem:[#allocation2 + $0xc]]
        %v2286 = vstv %s2285
        %v2287 = vmul.f32 %v2283, %v2286
        %v2288 = vmul.f32 %v2284, %v2286
        %s2289 = sld [smem:[#allocation2 + $0xd]]
        %v2290 = vstv %s2289
        %v2291 = vmul.f32 %v2283, %v2290
        %v2292 = vmul.f32 %v2284, %v2290
        %v2295 = vrot.slane %v2291, 1
        %v2296 = vrot.slane %v2292, 1
        %v2299 = vadd.f32 %v2287, %v2295
        %v2300 = vadd.f32 %v2288, %v2296
        %v2301 = vadd.f32 %v2263, %v2299
        %v2302 = vadd.f32 %v2264, %v2300
        %2303 = vrot.lane.b32.xlu0 %v2057, 83
        %v2304 = vpop.permute.xlu0 %2303
        %2305 = vrot.lane.b32.xlu0 %v2058, 83
        %v2306 = vpop.permute.xlu0 %2305
        %vm2307 = vcmp.lt.s32.totalorder %v773, 83
        %v2308 = vsel %vm2307, %v2304, %v2306
        %v2309 = vsel %vm2307, %v2306, %v2304
        %v2311 = vlaneseq
        %v2312 = vshrl.u32 %v2311, 7
        %v2313 = vsub.s32 0, %v2312
        %v2314 = vrot.slane %v543, %v2313
        %v2315 = vlaneseq
        %v2316 = vshrl.u32 %v2315, 7
        %v2317 = vsub.s32 1, %v2316
        %v2318 = vrot.slane %v543, %v2317
        %v2321 = vmul.f32 %v2308, %v2314
        %v2322 = vmul.f32 %v2309, %v2318
        %s2323 = sld [smem:[#allocation2 + $0xe]]
        %v2324 = vstv %s2323
        %v2325 = vmul.f32 %v2321, %v2324
        %v2326 = vmul.f32 %v2322, %v2324
        %s2327 = sld [smem:[#allocation2 + $0xf]]
        %v2328 = vstv %s2327
        %v2329 = vmul.f32 %v2321, %v2328
        %v2330 = vmul.f32 %v2322, %v2328
        %v2333 = vrot.slane %v2329, 1
        %v2334 = vrot.slane %v2330, 1
        %v2337 = vadd.f32 %v2325, %v2333
        %v2338 = vadd.f32 %v2326, %v2334
        %v2339 = vadd.f32 %v2301, %v2337
        %v2340 = vadd.f32 %v2302, %v2338
        %2341 = vrot.lane.b32.xlu0 %v2057, 78
        %v2342 = vpop.permute.xlu0 %2341
        %2343 = vrot.lane.b32.xlu0 %v2058, 78
        %v2344 = vpop.permute.xlu0 %2343
        %vm2345 = vcmp.lt.s32.totalorder %v773, 78
        %v2346 = vsel %vm2345, %v2342, %v2344
        %v2347 = vsel %vm2345, %v2344, %v2342
        %v2349 = vlaneseq
        %v2350 = vshrl.u32 %v2349, 7
        %v2351 = vsub.s32 0, %v2350
        %v2352 = vrot.slane %v546, %v2351
        %v2353 = vlaneseq
        %v2354 = vshrl.u32 %v2353, 7
        %v2355 = vsub.s32 1, %v2354
        %v2356 = vrot.slane %v546, %v2355
        %v2359 = vmul.f32 %v2346, %v2352
        %v2360 = vmul.f32 %v2347, %v2356
        %s2361 = sld [smem:[#allocation2 + $0x10]]
        %v2362 = vstv %s2361
        %v2363 = vmul.f32 %v2359, %v2362
        %v2364 = vmul.f32 %v2360, %v2362
        %s2365 = sld [smem:[#allocation2 + $0x11]]
        %v2366 = vstv %s2365
        %v2367 = vmul.f32 %v2359, %v2366
        %v2368 = vmul.f32 %v2360, %v2366
        %v2371 = vrot.slane %v2367, 1
        %v2372 = vrot.slane %v2368, 1
        %v2375 = vadd.f32 %v2363, %v2371
        %v2376 = vadd.f32 %v2364, %v2372
        %v2377 = vadd.f32 %v2339, %v2375
        %v2378 = vadd.f32 %v2340, %v2376
        %2380 = vset.pattern.permute.xlu0 1
        %2381 = vperm.xlu0 %2380, %v2025
        %v2382 = vpop.permute.xlu0 %2381
        %v2384 = vlaneseq
        %v2385 = vshrl.u32 %v2384, 7
        %v2386 = vsub.s32 0, %v2385
        %v2387 = vrot.slane %v2377, %v2386
        %v2388 = vlaneseq
        %v2389 = vshrl.u32 %v2388, 7
        %v2390 = vsub.s32 0, %v2389
        %v2391 = vrot.slane %v2378, %v2390
        %v2392 = vmul.f32 %v2382, %v2387
        %v2393 = vmul.f32 %v2382, %v2391
        %v2394 = vxor.u32 %v2392, 2147483648
        %v2395 = vxor.u32 %v2393, 2147483648
        %v2396 = vmul.f32 %v2394, 1.442695
        %v2397 = vpow.pop %v2396
        %v2398 = vmul.f32 %v2395, 1.442695
        %v2399 = vpow.pop %v2398
        %v2400 = vadd.f32 %v2397, 1.0
        %v2401 = vadd.f32 %v2399, 1.0
        %v2402 = vrcp.pop %v2400
        %v2403 = vmul.f32 1.0, %v2402
        %v2404 = vrcp.pop %v2401
        %v2405 = vmul.f32 1.0, %v2404
        %2407 = vset.pattern.permute.xlu0 4
        %2408 = vperm.xlu0 %2407, %v554
        %v2409 = vpop.permute.xlu0 %2408
        %v2411 = vmul.f32 %v2403, %v2409
        %v2412 = vmul.f32 %v2405, %v2409
        %2413 = vset.pattern.permute.xlu0 2
        %2414 = vperm.xlu0 %2413, %v551
        %v2415 = vpop.permute.xlu0 %2414
        %v2417 = vadd.f32 %v2411, %v2415
        %v2418 = vadd.f32 %v2412, %v2415
        %2419 = vrot.lane.b32.xlu0 %v2403, 10
        %v2420 = vpop.permute.xlu0 %2419
        %2421 = vrot.lane.b32.xlu0 %v2405, 10
        %v2422 = vpop.permute.xlu0 %2421
        %v2423 = vsel %vm774, %v2420, %v2422
        %v2424 = vsel %vm774, %v2422, %v2420
        %v2425 = vmul.f32 %v2424, %v781
        %v2426 = vmul.f32 %v2423, %v785
        %2427 = vset.pattern.permute.xlu0 0
        %2428 = vperm.xlu0 %2427, %v554
        %v2429 = vpop.permute.xlu0 %2428
        %v2431 = vmul.f32 %v2425, %v2429
        %v2432 = vmul.f32 %v2426, %v2429
        %v2433 = vadd.f32 %v2417, %v2431
        %v2434 = vadd.f32 %v2418, %v2432
        %2435 = vrot.lane.b32.xlu0 %v2403, 9
        %v2436 = vpop.permute.xlu0 %2435
        %2437 = vrot.lane.b32.xlu0 %v2405, 9
        %v2438 = vpop.permute.xlu0 %2437
        %v2439 = vsel %vm805, %v2436, %v2438
        %v2440 = vsel %vm805, %v2438, %v2436
        %v2441 = vmul.f32 %v2440, %v812
        %v2442 = vmul.f32 %v2439, %v816
        %2443 = vset.pattern.permute.xlu0 1
        %2444 = vperm.xlu0 %2443, %v554
        %v2445 = vpop.permute.xlu0 %2444
        %v2447 = vmul.f32 %v2441, %v2445
        %v2448 = vmul.f32 %v2442, %v2445
        %v2449 = vadd.f32 %v2433, %v2447
        %v2450 = vadd.f32 %v2434, %v2448
        %2451 = vrot.lane.b32.xlu0 %v2403, 8
        %v2452 = vpop.permute.xlu0 %2451
        %2453 = vrot.lane.b32.xlu0 %v2405, 8
        %v2454 = vpop.permute.xlu0 %2453
        %v2455 = vsel %vm836, %v2452, %v2454
        %v2456 = vsel %vm836, %v2454, %v2452
        %v2457 = vmul.f32 %v2456, %v843
        %v2458 = vmul.f32 %v2455, %v847
        %2459 = vset.pattern.permute.xlu0 2
        %2460 = vperm.xlu0 %2459, %v554
        %v2461 = vpop.permute.xlu0 %2460
        %v2463 = vmul.f32 %v2457, %v2461
        %v2464 = vmul.f32 %v2458, %v2461
        %v2465 = vadd.f32 %v2449, %v2463
        %v2466 = vadd.f32 %v2450, %v2464
        %2467 = vrot.lane.b32.xlu0 %v2403, 1
        %v2468 = vpop.permute.xlu0 %2467
        %2469 = vrot.lane.b32.xlu0 %v2405, 1
        %v2470 = vpop.permute.xlu0 %2469
        %v2471 = vsel %vm867, %v2468, %v2470
        %v2472 = vsel %vm867, %v2470, %v2468
        %v2473 = vmul.f32 %v2472, %v874
        %v2474 = vmul.f32 %v2471, %v878
        %2475 = vset.pattern.permute.xlu0 3
        %2476 = vperm.xlu0 %2475, %v554
        %v2477 = vpop.permute.xlu0 %2476
        %v2479 = vmul.f32 %v2473, %v2477
        %v2480 = vmul.f32 %v2474, %v2477
        %v2481 = vadd.f32 %v2465, %v2479
        %v2482 = vadd.f32 %v2466, %v2480
        %2483 = vrot.lane.b32.xlu0 %v2403, 127
        %v2484 = vpop.permute.xlu0 %2483
        %2485 = vrot.lane.b32.xlu0 %v2405, 127
        %v2486 = vpop.permute.xlu0 %2485
        %v2487 = vsel %vm898, %v2484, %v2486
        %v2488 = vsel %vm898, %v2486, %v2484
        %v2489 = vmul.f32 %v2487, %v905
        %v2490 = vmul.f32 %v2488, %v909
        %2491 = vset.pattern.permute.xlu0 5
        %2492 = vperm.xlu0 %2491, %v554
        %v2493 = vpop.permute.xlu0 %2492
        %v2495 = vmul.f32 %v2489, %v2493
        %v2496 = vmul.f32 %v2490, %v2493
        %v2497 = vadd.f32 %v2481, %v2495
        %v2498 = vadd.f32 %v2482, %v2496
        %2499 = vrot.lane.b32.xlu0 %v2403, 120
        %v2500 = vpop.permute.xlu0 %2499
        %2501 = vrot.lane.b32.xlu0 %v2405, 120
        %v2502 = vpop.permute.xlu0 %2501
        %v2503 = vsel %vm929, %v2500, %v2502
        %v2504 = vsel %vm929, %v2502, %v2500
        %v2505 = vmul.f32 %v2503, %v936
        %v2506 = vmul.f32 %v2504, %v940
        %2507 = vset.pattern.permute.xlu0 6
        %2508 = vperm.xlu0 %2507, %v554
        %v2509 = vpop.permute.xlu0 %2508
        %v2511 = vmul.f32 %v2505, %v2509
        %v2512 = vmul.f32 %v2506, %v2509
        %v2513 = vadd.f32 %v2497, %v2511
        %v2514 = vadd.f32 %v2498, %v2512
        %2515 = vrot.lane.b32.xlu0 %v2403, 119
        %v2516 = vpop.permute.xlu0 %2515
        %2517 = vrot.lane.b32.xlu0 %v2405, 119
        %v2518 = vpop.permute.xlu0 %2517
        %v2519 = vsel %vm960, %v2516, %v2518
        %v2520 = vsel %vm960, %v2518, %v2516
        %v2521 = vmul.f32 %v2519, %v967
        %v2522 = vmul.f32 %v2520, %v971
        %2523 = vset.pattern.permute.xlu0 7
        %2524 = vperm.xlu0 %2523, %v554
        %v2525 = vpop.permute.xlu0 %2524
        %v2527 = vmul.f32 %v2521, %v2525
        %v2528 = vmul.f32 %v2522, %v2525
        %v2529 = vadd.f32 %v2513, %v2527
        %v2530 = vadd.f32 %v2514, %v2528
        %2531 = vrot.lane.b32.xlu0 %v2403, 118
        %v2532 = vpop.permute.xlu0 %2531
        %2533 = vrot.lane.b32.xlu0 %v2405, 118
        %v2534 = vpop.permute.xlu0 %2533
        %v2535 = vsel %vm991, %v2532, %v2534
        %v2536 = vsel %vm991, %v2534, %v2532
        %v2537 = vmul.f32 %v2535, %v998
        %v2538 = vmul.f32 %v2536, %v1002
        %2539 = vset.pattern.permute.xlu0 8
        %2540 = vperm.xlu0 %2539, %v554
        %v2541 = vpop.permute.xlu0 %2540
        %v2543 = vmul.f32 %v2537, %v2541
        %v2544 = vmul.f32 %v2538, %v2541
        %v2545 = vadd.f32 %v2529, %v2543
        %v2546 = vadd.f32 %v2530, %v2544
        %s2547 = scalar_lea.vmem %s9, 16
        %v2548 = vld [vmem:[%s2547] sm:$0xf]
        %2549 = vset.pattern.permute.xlu0 8
        %2550 = vperm.xlu0 %2549, %v549
        %v2551 = vpop.permute.xlu0 %2550
        %v2554 = vsel %vm1024, %v2548, 0
        %v2557 = vsel %vm559, %v2545, 0
        %v2560 = vsel %vm559, %v2546, 0
        %2562 = vmatprep.subr.mxu0 0.0
        %2563 = vmatpush1.msra.mxu0 0.0
        %2564 = vmatprep.subr.mxu0 0.0
        %2565 = vmatpush1.msra.mxu0 0.0
        %2566 = vmatprep.subr.mxu0 0.0
        %2567 = vmatpush1.msra.mxu0 0.0
        %2568 = vmatprep.subr.mxu0 0.0
        %2569 = vmatpush1.msra.mxu0 0.0
        %2570 = vmatprep.subr.mxu0 0.0
        %2571 = vmatpush1.msra.mxu0 0.0
        %2572 = vmatprep.subr.mxu0 0.0
        %2573 = vmatpush1.msra.mxu0 0.0
        %2574 = vmatprep.subr.mxu0 0.0
        %2575 = vmatpush1.msra.mxu0 0.0
        %2576 = vmatprep.subr.mxu0 0.0
        %2577 = vmatpush1.msra.mxu0 0.0
        %2578 = vmatprep.subr.mxu0 0.0
        %2579 = vmatpush1.msra.mxu0 0.0
        %2580 = vmatprep.subr.mxu0 0.0
        %2581 = vmatpush1.msra.mxu0 0.0
        %2582 = vmatprep.subr.mxu0 0.0
        %2583 = vmatpush1.msra.mxu0 0.0
        %2584 = vmatprep.subr.mxu0 0.0
        %2585 = vmatpush1.msra.mxu0 0.0
        %2586 = vmatprep.subr.mxu0 0.0
        %2587 = vmatpush1.msra.mxu0 0.0
        %2588 = vmatprep.subr.mxu0 0.0
        %2589 = vmatpush1.msra.mxu0 0.0
        %2590 = vmatprep.subr.mxu0 0.0
        %2591 = vmatpush1.msra.mxu0 0.0
        %2592 = vmatprep.subr.mxu0 %v2560
        %2593 = vmatpush1.msra.mxu0 %v2557
        %2594 = vmatprep.subr.mxu0 0.0
        %2595 = vmatpush2.msra.mxu0 0.0
        %2596 = vmatprep.subr.mxu0 0.0
        %2597 = vmatpush2.msra.mxu0 0.0
        %2598 = vmatprep.subr.mxu0 0.0
        %2599 = vmatpush2.msra.mxu0 0.0
        %2600 = vmatprep.subr.mxu0 0.0
        %2601 = vmatpush2.msra.mxu0 0.0
        %2602 = vmatprep.subr.mxu0 0.0
        %2603 = vmatpush2.msra.mxu0 0.0
        %2604 = vmatprep.subr.mxu0 0.0
        %2605 = vmatpush2.msra.mxu0 0.0
        %2606 = vmatprep.subr.mxu0 0.0
        %2607 = vmatpush2.msra.mxu0 0.0
        %2608 = vmatprep.subr.mxu0 0.0
        %2609 = vmatpush2.msra.mxu0 0.0
        %2610 = vmatprep.subr.mxu0 0.0
        %2611 = vmatpush2.msra.mxu0 0.0
        %2612 = vmatprep.subr.mxu0 0.0
        %2613 = vmatpush2.msra.mxu0 0.0
        %2614 = vmatprep.subr.mxu0 0.0
        %2615 = vmatpush2.msra.mxu0 0.0
        %2616 = vmatprep.subr.mxu0 0.0
        %2617 = vmatpush2.msra.mxu0 0.0
        %2618 = vmatprep.subr.mxu0 0.0
        %2619 = vmatpush2.msra.mxu0 0.0
        %2620 = vmatprep.subr.mxu0 0.0
        %2621 = vmatpush2.msra.mxu0 0.0
        %2622 = vmatprep.subr.mxu0 0.0
        %2623 = vmatpush2.msra.mxu0 0.0
        %2624 = vmatprep.subr.mxu0 0.0
        %2625 = vmatpush2.msra.mxu0 0.0
        %2626 = vmatprep.mubr.f32.mxu0 0.0
        %2627 = vmatmul.mubr.f32.gmra.mxu0 %v2554
        %v2628 = vpop.f32.mrf.mxu0
        %v2629 = vadd.f32 %v2551, %v2628
        %v2630 = vpop.f32.mrf.mxu0
        %v2631 = vadd.f32 %v2551, %v2630
        %2632 = vdwg.mxu0
        %v2633 = vmul.f32 %v1099, %v2629
        %v2634 = vmul.f32 %v1101, %v2631
        %2635 = vset.pattern.permute.xlu0 9
        %2636 = vperm.xlu0 %2635, %v549
        %v2637 = vpop.permute.xlu0 %2636
        %v2639 = vmul.f32 %v2633, %v2637
        %v2640 = vmul.f32 %v2634, %v2637
        %s2641 = scalar_lea.vmem %s9, 20
        %v2642 = vld [vmem:[%s2641] sm:$0xf]
        %2643 = vset.pattern.permute.xlu0 8
        %2644 = vperm.xlu0 %2643, %v550
        %v2645 = vpop.permute.xlu0 %2644
        %v2648 = vsel %vm1024, %v2642, 0
        %2650 = vmatprep.subr.mxu0 0.0
        %2651 = vmatpush1.msra.mxu0 0.0
        %2652 = vmatprep.subr.mxu0 0.0
        %2653 = vmatpush1.msra.mxu0 0.0
        %2654 = vmatprep.subr.mxu0 0.0
        %2655 = vmatpush1.msra.mxu0 0.0
        %2656 = vmatprep.subr.mxu0 0.0
        %2657 = vmatpush1.msra.mxu0 0.0
        %2658 = vmatprep.subr.mxu0 0.0
        %2659 = vmatpush1.msra.mxu0 0.0
        %2660 = vmatprep.subr.mxu0 0.0
        %2661 = vmatpush1.msra.mxu0 0.0
        %2662 = vmatprep.subr.mxu0 0.0
        %2663 = vmatpush1.msra.mxu0 0.0
        %2664 = vmatprep.subr.mxu0 0.0
        %2665 = vmatpush1.msra.mxu0 0.0
        %2666 = vmatprep.subr.mxu0 0.0
        %2667 = vmatpush1.msra.mxu0 0.0
        %2668 = vmatprep.subr.mxu0 0.0
        %2669 = vmatpush1.msra.mxu0 0.0
        %2670 = vmatprep.subr.mxu0 0.0
        %2671 = vmatpush1.msra.mxu0 0.0
        %2672 = vmatprep.subr.mxu0 0.0
        %2673 = vmatpush1.msra.mxu0 0.0
        %2674 = vmatprep.subr.mxu0 0.0
        %2675 = vmatpush1.msra.mxu0 0.0
        %2676 = vmatprep.subr.mxu0 0.0
        %2677 = vmatpush1.msra.mxu0 0.0
        %2678 = vmatprep.subr.mxu0 0.0
        %2679 = vmatpush1.msra.mxu0 0.0
        %2680 = vmatprep.subr.mxu0 %v2560
        %2681 = vmatpush1.msra.mxu0 %v2557
        %2682 = vmatprep.subr.mxu0 0.0
        %2683 = vmatpush2.msra.mxu0 0.0
        %2684 = vmatprep.subr.mxu0 0.0
        %2685 = vmatpush2.msra.mxu0 0.0
        %2686 = vmatprep.subr.mxu0 0.0
        %2687 = vmatpush2.msra.mxu0 0.0
        %2688 = vmatprep.subr.mxu0 0.0
        %2689 = vmatpush2.msra.mxu0 0.0
        %2690 = vmatprep.subr.mxu0 0.0
        %2691 = vmatpush2.msra.mxu0 0.0
        %2692 = vmatprep.subr.mxu0 0.0
        %2693 = vmatpush2.msra.mxu0 0.0
        %2694 = vmatprep.subr.mxu0 0.0
        %2695 = vmatpush2.msra.mxu0 0.0
        %2696 = vmatprep.subr.mxu0 0.0
        %2697 = vmatpush2.msra.mxu0 0.0
        %2698 = vmatprep.subr.mxu0 0.0
        %2699 = vmatpush2.msra.mxu0 0.0
        %2700 = vmatprep.subr.mxu0 0.0
        %2701 = vmatpush2.msra.mxu0 0.0
        %2702 = vmatprep.subr.mxu0 0.0
        %2703 = vmatpush2.msra.mxu0 0.0
        %2704 = vmatprep.subr.mxu0 0.0
        %2705 = vmatpush2.msra.mxu0 0.0
        %2706 = vmatprep.subr.mxu0 0.0
        %2707 = vmatpush2.msra.mxu0 0.0
        %2708 = vmatprep.subr.mxu0 0.0
        %2709 = vmatpush2.msra.mxu0 0.0
        %2710 = vmatprep.subr.mxu0 0.0
        %2711 = vmatpush2.msra.mxu0 0.0
        %2712 = vmatprep.subr.mxu0 0.0
        %2713 = vmatpush2.msra.mxu0 0.0
        %2714 = vmatprep.mubr.f32.mxu0 0.0
        %2715 = vmatmul.mubr.f32.gmra.mxu0 %v2648
        %v2716 = vpop.f32.mrf.mxu0
        %v2717 = vadd.f32 %v2645, %v2716
        %v2718 = vpop.f32.mrf.mxu0
        %v2719 = vadd.f32 %v2645, %v2718
        %2720 = vdwg.mxu0
        %v2721 = vmul.f32 %v1365, %v2717
        %v2722 = vmul.f32 %v1367, %v2719
        %2723 = vset.pattern.permute.xlu0 9
        %2724 = vperm.xlu0 %2723, %v550
        %v2725 = vpop.permute.xlu0 %2724
        %v2727 = vmul.f32 %v2721, %v2725
        %v2728 = vmul.f32 %v2722, %v2725
        %v2729 = vmul.f32 %v2639, %v2727
        %v2730 = vmul.f32 %v2640, %v2728
        %v2731 = vsel %vm559, %v2729, 0.0
        %v2732 = vrot.slane %v2731, 4
        %v2733 = vadd.f32 %v2731, %v2732
        %v2734 = vrot.slane %v2733, 2
        %v2735 = vadd.f32 %v2733, %v2734
        %v2736 = vrot.slane %v2735, 1
        %v2737 = vadd.f32 %v2735, %v2736
        %v2738 = vsel %vm559, %v2730, 0.0
        %v2739 = vrot.slane %v2738, 4
        %v2740 = vadd.f32 %v2738, %v2739
        %v2741 = vrot.slane %v2740, 2
        %v2742 = vadd.f32 %v2740, %v2741
        %v2743 = vrot.slane %v2742, 1
        %v2744 = vadd.f32 %v2742, %v2743
        %v2745 = vmul.f32 %v2737, %v574
        %v2746 = vmul.f32 %v2744, %v574
        %v2747 = vsub.f32 %v2729, %v2745
        %v2748 = vsub.f32 %v2730, %v2746
        %v2749 = vmul.f32 %v2747, %v2747
        %v2750 = vmul.f32 %v2748, %v2748
        %v2751 = vsel %vm559, %v2749, 0.0
        %v2752 = vrot.slane %v2751, 4
        %v2753 = vadd.f32 %v2751, %v2752
        %v2754 = vrot.slane %v2753, 2
        %v2755 = vadd.f32 %v2753, %v2754
        %v2756 = vrot.slane %v2755, 1
        %v2757 = vadd.f32 %v2755, %v2756
        %v2758 = vsel %vm559, %v2750, 0.0
        %v2759 = vrot.slane %v2758, 4
        %v2760 = vadd.f32 %v2758, %v2759
        %v2761 = vrot.slane %v2760, 2
        %v2762 = vadd.f32 %v2760, %v2761
        %v2763 = vrot.slane %v2762, 1
        %v2764 = vadd.f32 %v2762, %v2763
        %v2765 = vmul.f32 %v2757, %v574
        %v2766 = vmul.f32 %v2764, %v574
        %v2767 = vadd.f32 %v2765, 1e-06
        %v2768 = vadd.f32 %v2766, 1e-06
        %v2769 = vrsqrt.pop %v2767
        %v2770 = vrsqrt.pop %v2768
        %v2771 = vmul.f32 %v2747, %v2769
        %v2772 = vmul.f32 %v2748, %v2770
        %2773 = vset.pattern.permute.xlu0 3
        %2774 = vperm.xlu0 %2773, %v551
        %v2775 = vpop.permute.xlu0 %2774
        %v2777 = vmul.f32 %v2771, %v2775
        %v2778 = vmul.f32 %v2772, %v2775
        %2779 = vset.pattern.permute.xlu0 4
        %2780 = vperm.xlu0 %2779, %v551
        %v2781 = vpop.permute.xlu0 %2780
        %v2783 = vadd.f32 %v2777, %v2781
        %v2784 = vadd.f32 %v2778, %v2781
        %s2785 = scalar_lea.vmem %s9, 24
        %v2786 = vld [vmem:[%s2785] sm:$0xf]
        %2787 = vset.pattern.permute.xlu0 13
        %2788 = vperm.xlu0 %2787, %v554
        %v2789 = vpop.permute.xlu0 %2788
        %v2791 = vmul.f32 %v2783, %v2789
        %v2792 = vmul.f32 %v2784, %v2789
        %2793 = vset.pattern.permute.xlu0 5
        %2794 = vperm.xlu0 %2793, %v551
        %v2795 = vpop.permute.xlu0 %2794
        %v2797 = vadd.f32 %v2791, %v2795
        %v2798 = vadd.f32 %v2792, %v2795
        %2799 = vrot.lane.b32.xlu0 %v2783, 10
        %v2800 = vpop.permute.xlu0 %2799
        %2801 = vrot.lane.b32.xlu0 %v2784, 10
        %v2802 = vpop.permute.xlu0 %2801
        %v2803 = vsel %vm774, %v2800, %v2802
        %v2804 = vsel %vm774, %v2802, %v2800
        %v2805 = vmul.f32 %v2804, %v781
        %v2806 = vmul.f32 %v2803, %v785
        %2807 = vset.pattern.permute.xlu0 9
        %2808 = vperm.xlu0 %2807, %v554
        %v2809 = vpop.permute.xlu0 %2808
        %v2811 = vmul.f32 %v2805, %v2809
        %v2812 = vmul.f32 %v2806, %v2809
        %v2813 = vadd.f32 %v2797, %v2811
        %v2814 = vadd.f32 %v2798, %v2812
        %2815 = vrot.lane.b32.xlu0 %v2783, 9
        %v2816 = vpop.permute.xlu0 %2815
        %2817 = vrot.lane.b32.xlu0 %v2784, 9
        %v2818 = vpop.permute.xlu0 %2817
        %v2819 = vsel %vm805, %v2816, %v2818
        %v2820 = vsel %vm805, %v2818, %v2816
        %v2821 = vmul.f32 %v2820, %v812
        %v2822 = vmul.f32 %v2819, %v816
        %2823 = vset.pattern.permute.xlu0 10
        %2824 = vperm.xlu0 %2823, %v554
        %v2825 = vpop.permute.xlu0 %2824
        %v2827 = vmul.f32 %v2821, %v2825
        %v2828 = vmul.f32 %v2822, %v2825
        %v2829 = vadd.f32 %v2813, %v2827
        %v2830 = vadd.f32 %v2814, %v2828
        %2831 = vrot.lane.b32.xlu0 %v2783, 8
        %v2832 = vpop.permute.xlu0 %2831
        %2833 = vrot.lane.b32.xlu0 %v2784, 8
        %v2834 = vpop.permute.xlu0 %2833
        %v2835 = vsel %vm836, %v2832, %v2834
        %v2836 = vsel %vm836, %v2834, %v2832
        %v2837 = vmul.f32 %v2836, %v843
        %v2838 = vmul.f32 %v2835, %v847
        %2839 = vset.pattern.permute.xlu0 11
        %2840 = vperm.xlu0 %2839, %v554
        %v2841 = vpop.permute.xlu0 %2840
        %v2843 = vmul.f32 %v2837, %v2841
        %v2844 = vmul.f32 %v2838, %v2841
        %v2845 = vadd.f32 %v2829, %v2843
        %v2846 = vadd.f32 %v2830, %v2844
        %2847 = vrot.lane.b32.xlu0 %v2783, 1
        %v2848 = vpop.permute.xlu0 %2847
        %2849 = vrot.lane.b32.xlu0 %v2784, 1
        %v2850 = vpop.permute.xlu0 %2849
        %v2851 = vsel %vm867, %v2848, %v2850
        %v2852 = vsel %vm867, %v2850, %v2848
        %v2853 = vmul.f32 %v2852, %v874
        %v2854 = vmul.f32 %v2851, %v878
        %2855 = vset.pattern.permute.xlu0 12
        %2856 = vperm.xlu0 %2855, %v554
        %v2857 = vpop.permute.xlu0 %2856
        %v2859 = vmul.f32 %v2853, %v2857
        %v2860 = vmul.f32 %v2854, %v2857
        %v2861 = vadd.f32 %v2845, %v2859
        %v2862 = vadd.f32 %v2846, %v2860
        %2863 = vrot.lane.b32.xlu0 %v2783, 127
        %v2864 = vpop.permute.xlu0 %2863
        %2865 = vrot.lane.b32.xlu0 %v2784, 127
        %v2866 = vpop.permute.xlu0 %2865
        %v2867 = vsel %vm898, %v2864, %v2866
        %v2868 = vsel %vm898, %v2866, %v2864
        %v2869 = vmul.f32 %v2867, %v905
        %v2870 = vmul.f32 %v2868, %v909
        %2871 = vset.pattern.permute.xlu0 14
        %2872 = vperm.xlu0 %2871, %v554
        %v2873 = vpop.permute.xlu0 %2872
        %v2875 = vmul.f32 %v2869, %v2873
        %v2876 = vmul.f32 %v2870, %v2873
        %v2877 = vadd.f32 %v2861, %v2875
        %v2878 = vadd.f32 %v2862, %v2876
        %2879 = vrot.lane.b32.xlu0 %v2783, 120
        %v2880 = vpop.permute.xlu0 %2879
        %2881 = vrot.lane.b32.xlu0 %v2784, 120
        %v2882 = vpop.permute.xlu0 %2881
        %v2883 = vsel %vm929, %v2880, %v2882
        %v2884 = vsel %vm929, %v2882, %v2880
        %v2885 = vmul.f32 %v2883, %v936
        %v2886 = vmul.f32 %v2884, %v940
        %2887 = vset.pattern.permute.xlu0 15
        %2888 = vperm.xlu0 %2887, %v554
        %v2889 = vpop.permute.xlu0 %2888
        %v2891 = vmul.f32 %v2885, %v2889
        %v2892 = vmul.f32 %v2886, %v2889
        %v2893 = vadd.f32 %v2877, %v2891
        %v2894 = vadd.f32 %v2878, %v2892
        %2895 = vrot.lane.b32.xlu0 %v2783, 119
        %v2896 = vpop.permute.xlu0 %2895
        %2897 = vrot.lane.b32.xlu0 %v2784, 119
        %v2898 = vpop.permute.xlu0 %2897
        %v2899 = vsel %vm960, %v2896, %v2898
        %v2900 = vsel %vm960, %v2898, %v2896
        %v2901 = vmul.f32 %v2899, %v967
        %v2902 = vmul.f32 %v2900, %v971
        %2903 = vset.pattern.permute.xlu0 16
        %2904 = vperm.xlu0 %2903, %v554
        %v2905 = vpop.permute.xlu0 %2904
        %v2907 = vmul.f32 %v2901, %v2905
        %v2908 = vmul.f32 %v2902, %v2905
        %v2909 = vadd.f32 %v2893, %v2907
        %v2910 = vadd.f32 %v2894, %v2908
        %2911 = vrot.lane.b32.xlu0 %v2783, 118
        %v2912 = vpop.permute.xlu0 %2911
        %2913 = vrot.lane.b32.xlu0 %v2784, 118
        %v2914 = vpop.permute.xlu0 %2913
        %v2915 = vsel %vm991, %v2912, %v2914
        %v2916 = vsel %vm991, %v2914, %v2912
        %v2917 = vmul.f32 %v2915, %v998
        %v2918 = vmul.f32 %v2916, %v1002
        %2919 = vset.pattern.permute.xlu0 17
        %2920 = vperm.xlu0 %2919, %v554
        %v2921 = vpop.permute.xlu0 %2920
        %v2923 = vmul.f32 %v2917, %v2921
        %v2924 = vmul.f32 %v2918, %v2921
        %v2925 = vadd.f32 %v2909, %v2923
        %v2926 = vadd.f32 %v2910, %v2924
        %2927 = vset.pattern.permute.xlu0 6
        %2928 = vperm.xlu0 %2927, %v551
        %v2929 = vpop.permute.xlu0 %2928
        %v2932 = vsel %vm1024, %v2786, 0
        %v2935 = vsel %vm559, %v2925, 0
        %v2938 = vsel %vm559, %v2926, 0
        %2940 = vmatprep.subr.mxu0 0.0
        %2941 = vmatpush1.msra.mxu0 0.0
        %2942 = vmatprep.subr.mxu0 0.0
        %2943 = vmatpush1.msra.mxu0 0.0
        %2944 = vmatprep.subr.mxu0 0.0
        %2945 = vmatpush1.msra.mxu0 0.0
        %2946 = vmatprep.subr.mxu0 0.0
        %2947 = vmatpush1.msra.mxu0 0.0
        %2948 = vmatprep.subr.mxu0 0.0
        %2949 = vmatpush1.msra.mxu0 0.0
        %2950 = vmatprep.subr.mxu0 0.0
        %2951 = vmatpush1.msra.mxu0 0.0
        %2952 = vmatprep.subr.mxu0 0.0
        %2953 = vmatpush1.msra.mxu0 0.0
        %2954 = vmatprep.subr.mxu0 0.0
        %2955 = vmatpush1.msra.mxu0 0.0
        %2956 = vmatprep.subr.mxu0 0.0
        %2957 = vmatpush1.msra.mxu0 0.0
        %2958 = vmatprep.subr.mxu0 0.0
        %2959 = vmatpush1.msra.mxu0 0.0
        %2960 = vmatprep.subr.mxu0 0.0
        %2961 = vmatpush1.msra.mxu0 0.0
        %2962 = vmatprep.subr.mxu0 0.0
        %2963 = vmatpush1.msra.mxu0 0.0
        %2964 = vmatprep.subr.mxu0 0.0
        %2965 = vmatpush1.msra.mxu0 0.0
        %2966 = vmatprep.subr.mxu0 0.0
        %2967 = vmatpush1.msra.mxu0 0.0
        %2968 = vmatprep.subr.mxu0 0.0
        %2969 = vmatpush1.msra.mxu0 0.0
        %2970 = vmatprep.subr.mxu0 %v2938
        %2971 = vmatpush1.msra.mxu0 %v2935
        %2972 = vmatprep.subr.mxu0 0.0
        %2973 = vmatpush2.msra.mxu0 0.0
        %2974 = vmatprep.subr.mxu0 0.0
        %2975 = vmatpush2.msra.mxu0 0.0
        %2976 = vmatprep.subr.mxu0 0.0
        %2977 = vmatpush2.msra.mxu0 0.0
        %2978 = vmatprep.subr.mxu0 0.0
        %2979 = vmatpush2.msra.mxu0 0.0
        %2980 = vmatprep.subr.mxu0 0.0
        %2981 = vmatpush2.msra.mxu0 0.0
        %2982 = vmatprep.subr.mxu0 0.0
        %2983 = vmatpush2.msra.mxu0 0.0
        %2984 = vmatprep.subr.mxu0 0.0
        %2985 = vmatpush2.msra.mxu0 0.0
        %2986 = vmatprep.subr.mxu0 0.0
        %2987 = vmatpush2.msra.mxu0 0.0
        %2988 = vmatprep.subr.mxu0 0.0
        %2989 = vmatpush2.msra.mxu0 0.0
        %2990 = vmatprep.subr.mxu0 0.0
        %2991 = vmatpush2.msra.mxu0 0.0
        %2992 = vmatprep.subr.mxu0 0.0
        %2993 = vmatpush2.msra.mxu0 0.0
        %2994 = vmatprep.subr.mxu0 0.0
        %2995 = vmatpush2.msra.mxu0 0.0
        %2996 = vmatprep.subr.mxu0 0.0
        %2997 = vmatpush2.msra.mxu0 0.0
        %2998 = vmatprep.subr.mxu0 0.0
        %2999 = vmatpush2.msra.mxu0 0.0
        %3000 = vmatprep.subr.mxu0 0.0
        %3001 = vmatpush2.msra.mxu0 0.0
        %3002 = vmatprep.subr.mxu0 0.0
        %3003 = vmatpush2.msra.mxu0 0.0
        %3004 = vmatprep.mubr.f32.mxu0 0.0
        %3005 = vmatmul.mubr.f32.gmra.mxu0 %v2932
        %v3006 = vpop.f32.mrf.mxu0
        %v3007 = vadd.f32 %v2929, %v3006
        %v3008 = vpop.f32.mrf.mxu0
        %v3009 = vadd.f32 %v2929, %v3008
        %3010 = vdwg.mxu0
        %3011 = vset.pattern.permute.xlu0 7
        %3012 = vperm.xlu0 %3011, %v551
        %v3013 = vpop.permute.xlu0 %3012
        %v3015 = vmul.f32 %v3007, %v3013
        %v3016 = vmul.f32 %v3009, %v3013
        %v3017 = vadd.f32 %v2639, %v3015
        %v3018 = vadd.f32 %v2640, %v3016
        %v3021 = vcombine.low %v3017, %v3018
        %3023 = vst [vmem:[%s455] sm:$0xff] %v3021
        %3024 = vset.pattern.permute.xlu0 8
        %3025 = vperm.xlu0 %3024, %v551
        %v3026 = vpop.permute.xlu0 %3025
        %v3028 = vmul.f32 %v3007, %v3026
        %v3029 = vmul.f32 %v3009, %v3026
        %v3030 = vadd.f32 %v2727, %v3028
        %v3031 = vadd.f32 %v2728, %v3029
        %v3034 = vcombine.low %v3030, %v3031
        %3036 = vst [vmem:[%s460] sm:$0xff] %v3034
        %p3037 = scmp.lt.s32.totalorder %s25, 1
        %s3038 = scalar_select %p3037, %s25, 1
        %s3039 = smul.addr %s3038, 2
        %s3040 = smul.addr %s3039, 4
        %s3041 = scalar_lea.vmem %s11, %s3040
        %p3042 = scmp.lt.s32.totalorder %s25, 1
        %s3043 = scalar_select %p3042, %s25, 1
        %s3044 = smul.addr %s3043, 2
        %s3045 = smul.addr %s3044, 4
        %s3046 = scalar_lea.vmem %s12, %s3045
        // Predicated region
        $region69: #{frequency_domain_processing.1} parent=63 // pred_check
          %p3047 = pneg %p284
        $region70: #{frequency_domain_processing.1} parent=63 // pred_check_branch
          %3049 = sbr.rel (%p3047) target = $region72
        $region71: #{frequency_domain_processing.1} parent=63 // pred_region
          _
        $region72: #{frequency_domain_processing.1} parent=63 // pred_fallthru
          _
        // Predicated region
        $region73: #{frequency_domain_processing.1} parent=63 // pred_check
          %p3050 = pneg %p310
        $region74: #{frequency_domain_processing.1} parent=63 // pred_check_branch
          %3052 = sbr.rel (%p3050) target = $region76
        $region75: #{frequency_domain_processing.1} parent=63 // pred_region
          _
        $region76: #{frequency_domain_processing.1} parent=63 // pred_fallthru
          _
      $region64: #{frequency_domain_processing.1} parent=5 // pred_fallthru
        _
      %p3053 = scmp.le.s32.totalorder 2, %s20
      // Predicated region
      $region77: #{frequency_domain_processing.1} parent=5 // pred_check
        %p3054 = pneg %p3053
      $region78: #{frequency_domain_processing.1} parent=5 // pred_check_branch
        %3056 = sbr.rel (%p3054) target = $region80
      $region79: #{frequency_domain_processing.1} parent=5 // pred_region
        %s3057 = ssub.s32 %s20, 2
        // Predicated region
        $region81: #{frequency_domain_processing.1} parent=79 // pred_check
          %p3058 = pneg %p290
        $region82: #{frequency_domain_processing.1} parent=79 // pred_check_branch
          %3060 = sbr.rel (%p3058) target = $region84
        $region83: #{frequency_domain_processing.1} parent=79 // pred_region
          %p3061 = scmp.lt.s32.totalorder %s26, 1
          %s3062 = scalar_select %p3061, %s26, 1
          %s3063 = smul.addr %s3062, 2
          %s3064 = smul.addr %s3063, 4
          %s3065 = scalar_lea.vmem %s11, %s3064
        $region84: #{frequency_domain_processing.1} parent=79 // pred_fallthru
          _
        // Predicated region
        $region85: #{frequency_domain_processing.1} parent=79 // pred_check
          %p3066 = pneg %p316
        $region86: #{frequency_domain_processing.1} parent=79 // pred_check_branch
          %3068 = sbr.rel (%p3066) target = $region88
        $region87: #{frequency_domain_processing.1} parent=79 // pred_region
          %p3069 = scmp.lt.s32.totalorder %s26, 1
          %s3070 = scalar_select %p3069, %s26, 1
          %s3071 = smul.addr %s3070, 2
          %s3072 = smul.addr %s3071, 4
          %s3073 = scalar_lea.vmem %s12, %s3072
        $region88: #{frequency_domain_processing.1} parent=79 // pred_fallthru
          _
      $region80: #{frequency_domain_processing.1} parent=5 // pred_fallthru
        _
    $region6: #{frequency_domain_processing.1} parent=1 // loop_footer
      %s24 = sadd.s32 1, %s20
    $region7: #{frequency_domain_processing.1} parent=1 // loop_footer_branch
      %19 = sbr.rel target = $region3
    $region8: #{frequency_domain_processing.1} parent=1 // loop_exit
      _
    %3074 = vsyncpa [#allocation3], 1
    %s3075 = scalar_lea.sflag [#allocation3], 1
    %3076 = vsyncpa %s3075, 1

</llo_original>
